<compile_context>
chip_gen: v6e
topology: v6e:2x2x1
jax: 0.10.0
libtpu: 0.0.40
codegen_flags: <defaults>
</compile_context>

<pallas_src>
import functools

import numpy as np
import jax
import jax.numpy as jnp
from jax.experimental import pallas as pl
from jax.experimental.pallas import tpu as pltpu

# ---- static configuration (mirrors MainModel.__init__ args) ----------------
IMAGE_SIZE = 7            # PCT kernel spatial size K (odd -> symmetric 'same' pad)
REALMAG = 1               # 1 -> magnitude, else real part
KERNELTYPE = "learn_4"    # no 'fix' -> numberkernel = 4 -> 2 (n, l) pairs
INPUTDIM = 8
HID = 16                  # SubNet hidden width (nn.Linear(inputdim, 16))


def _pct_polar_grid(s):
    """R^2, Theta, R<=1 mask of the PCT polar grid (torch.meshgrid 'ij' semantics)."""
    xs = np.linspace(1.0, float(s), s)
    X, Y = np.meshgrid(xs, xs, indexing="ij")
    c = (1.0 + s) / 2.0
    Xn = (X - c) / (c - 1.0)
    Yn = (Y - c) / (c - 1.0)
    r2 = Xn ** 2 + Yn ** 2
    theta = np.arctan2(Yn, Xn)
    mask = (np.sqrt(r2) <= 1.0).astype(np.float32)
    return (r2.reshape(-1).astype(np.float32),
            theta.reshape(-1).astype(np.float32),
            mask.reshape(-1).astype(np.float32))


# ------------- fused SubNet + PCT-tap + depthwise-conv kernel ---------------
def fused_pct_kernel(pack_ref, img_ref, out_ref, *, pairs, k, h, w, d,
                     realmag, r2_np, th_np, mask_np):
    """Single-invocation kernel (no grid).

      pack_ref  [8, 128]        packed SubNet operands (see layout in wrapper)
      img_ref   [BC, H+2p, W+2p] zero-padded image (BC = B*C), f32
      out_ref   [pairs, BC, H, W] one convolved image per (n, l) pair
      r2_np/th_np/mask_np       trace-time numpy constants of the 7x7 polar grid
    """
    pack = pack_ref[...]                                      # (8, 128)

    # --- SubNet fc1 + ReLU (broadcast-multiply + sublane reduce; no MXU needed) ---
    w1 = pack[0:d, 0:HID]                                     # (D, 16)
    xc = pack[0:d, HID:HID + 1]                               # (D, 1)  input row as column
    b1 = pack[0:1, 32:32 + HID]                               # (1, 16)
    hid = jnp.maximum(jnp.sum(xc * w1, axis=0, keepdims=True) + b1, 0.0)   # (1, 16)

    pi = jnp.float32(np.pi)

    # coeffs[p][s]: (1,1) PCT kernel tap value, or None where mask == 0 (exact zero).
    coeffs = []
    for p in range(pairs):
        w2n = pack[2 + p:3 + p, 32:32 + HID]                  # (1, 16)
        b2n = pack[2 + p:3 + p, 48:49]                        # (1, 1)
        n = jax.nn.sigmoid(jnp.sum(w2n * hid, axis=1, keepdims=True) + b2n) * 3.0 + 1.0
        if realmag != 1:
            w2l = pack[2 + p:3 + p, 64:64 + HID]
            b2l = pack[2 + p:3 + p, 80:81]
            l = jax.nn.sigmoid(jnp.sum(w2l * hid, axis=1, keepdims=True) + b2l) * 3.0 + 1.0
        taps = []
        for s in range(k * k):
            if mask_np[s] == 0.0:       # structural zero tap -> skip its MAC entirely
                taps.append(None)
                continue
            c = jnp.cos(pi * float(r2_np[s]) * n)             # (1, 1)
            if realmag == 1:
                # |mask^2 cos(pi n R^2) e^{-i l Theta}| == mask |cos(pi n R^2)| (mask in {0,1})
                c = jnp.abs(c)
            else:
                # Re(mask^2 cos(pi n R^2) e^{-i l Theta}) == mask cos(pi n R^2) cos(l Theta)
                c = c * jnp.cos(float(th_np[s]) * l)
            taps.append(c)
        coeffs.append(taps)

    # --- depthwise 'same' conv: shifted multiply-accumulate over the unmasked taps ---
    accs = [None] * pairs
    for u in range(k):
        if all(mask_np[u * k + v] == 0.0 for v in range(k)):
            continue
        rows = img_ref[:, u:u + h, :]                         # (BC, H, Wp) shifted row slab
        for v in range(k):
            s = u * k + v
            if mask_np[s] == 0.0:
                continue
            win = rows[:, :, v:v + w]                         # (BC, H, W) shifted window
            for p in range(pairs):
                term = coeffs[p][s] * win
                accs[p] = term if accs[p] is None else accs[p] + term

    for p in range(pairs):
        if accs[p] is None:   # cannot happen for a 7x7 grid, kept for safety
            out_ref[p] = jnp.zeros(out_ref.shape[1:], out_ref.dtype)
        else:
            out_ref[p] = accs[p]


# ------------------------------ MainModel -----------------------------------
def main_model_forward(params, input_data, image):
    S = IMAGE_SIZE
    nk = params["w2"].shape[1]
    pairs = nk // 2
    d = params["w1"].shape[0]

    # PyTorch's mask * cos(pi*n*R^2) broadcast only works for input batch == 1.
    if input_data.shape[0] != 1:
        raise ValueError("PCTKernelLayer's n/l broadcast requires input_data batch == 1")
    assert d <= 8 and 2 + pairs <= 8, "packed SubNet slab assumes inputdim<=8, pairs<=6"

    # --- pack the tiny SubNet operands into ONE (8,128) f32 slab (single DMA) ---
    #   [0:D, 0:16]   w1        [0:D, 16:17]  x (as column)   [0:1, 32:48]  b1
    #   [2:2+P, 32:48] w2n      [2:2+P, 48:49] b2n
    #   [2:2+P, 64:80] w2l      [2:2+P, 80:81] b2l   (only when REALMAG != 1)
    x_col = input_data.astype(jnp.float32).T                  # (D, 1)
    w1 = params["w1"].astype(jnp.float32)                     # (D, 16)
    b1 = params["b1"].astype(jnp.float32).reshape(1, HID)     # (1, 16)
    w2 = params["w2"].astype(jnp.float32)                     # (16, nk)
    b2 = params["b2"].astype(jnp.float32)                     # (1, nk)
    pack = jnp.zeros((8, 128), jnp.float32)
    pack = pack.at[0:d, 0:HID].set(w1)
    pack = pack.at[0:d, HID:HID + 1].set(x_col)
    pack = pack.at[0:1, 32:32 + HID].set(b1)
    pack = pack.at[2:2 + pairs, 32:32 + HID].set(w2[:, 0::2].T)   # 'n' head rows
    pack = pack.at[2:2 + pairs, 48:49].set(b2[:, 0::2].T)
    if REALMAG != 1:  # the 'l' head is dead when REALMAG == 1 -> do not even pack it
        pack = pack.at[2:2 + pairs, 64:64 + HID].set(w2[:, 1::2].T)
        pack = pack.at[2:2 + pairs, 80:81].set(b2[:, 1::2].T)

    # --- zero-pad the image once ('same' padding) and flatten batch x channel ---
    B, C, H, W = image.shape
    pd = (S - 1) // 2
    padded = jnp.pad(image.astype(jnp.float32),
                     ((0, 0), (0, 0), (pd, pd), (pd, pd)))
    padded = padded.reshape(B * C, H + 2 * pd, W + 2 * pd)     # (BC, Hp, Wp), ~12 KB

    r2_np, th_np, mask_np = _pct_polar_grid(S)                 # trace-time constants

    kernel = functools.partial(
        fused_pct_kernel, pairs=pairs, k=S, h=H, w=W, d=d, realmag=REALMAG,
        r2_np=r2_np, th_np=th_np, mask_np=mask_np)
    vm = pl.BlockSpec(memory_space=pltpu.MemorySpace.VMEM)
    out = pl.pallas_call(
        kernel,
        out_shape=jax.ShapeDtypeStruct((pairs, B * C, H, W), jnp.float32),
        in_specs=[vm, vm],
        out_specs=vm,
    )(pack, padded)

    # Single leading-dim reshape -> [pairs, B, C, H, W] (the original module returns
    # this as a Python list of per-pair images; stacked keeps the jitted graph clean).
    return out.reshape(pairs, B, C, H, W)


# --------------------------------- main --------------------------------------
if __name__ == "__main__":
    numberkernel = int(KERNELTYPE.split("_")[-1])

    key = jax.random.PRNGKey(0)
    k1, k2, k3, k4, k5, k6 = jax.random.split(key, 6)

    # Deterministic SubNet parameters (fc1: inputdim->16, fc2: 16->numberkernel),
    # stored transposed relative to nn.Linear so y = x @ W + b.
    params = {
        "w1": jax.random.normal(k1, (INPUTDIM, 16), jnp.float32) * 0.1,
        "b1": jax.random.normal(k2, (1, 16), jnp.float32) * 0.1,
        "w2": jax.random.normal(k3, (16, numberkernel), jnp.float32) * 0.1,
        "b2": jax.random.normal(k4, (1, numberkernel), jnp.float32) * 0.1,
    }

    # input_data batch = 1 (required for the PyTorch n/l broadcast to be valid);
    # image NCHW with 3 channels (kernel.repeat(3,1,1,1) / groups=3 in the spec).
    input_data = jax.random.normal(k5, (1, INPUTDIM), jnp.float32)
    image = jax.random.normal(k6, (2, 3, 16, 16), jnp.float32)

    forward = jax.jit(main_model_forward)
    out = jax.block_until_ready(forward(params, input_data, image))

    pairs = numberkernel // 2
    assert out.shape == (pairs,) + image.shape
    response = [out[i] for i in range(pairs)]          # list form, as in the PyTorch module
    assert len(response) == pairs
    assert all(r.shape == image.shape for r in response)
    assert all(bool(jnp.all(jnp.isfinite(r))) for r in response)
    print("KERNEL_OK")
</pallas_src>

<mosaic_0001>
module attributes {stable_mosaic.version = 11 : i64} {
  func.func @fused_pct_kernel(%arg0: memref<8x128xf32, #tpu.memory_space<vmem>>, %arg1: memref<6x22x22xf32, #tpu.memory_space<vmem>>, %arg2: memref<2x6x16x16xf32, #tpu.memory_space<vmem>>) attributes {dimension_semantics = [], scalar_prefetch = 0 : i64, scratch_operands = 0 : i64, tpu.core_type = #tpu.core_type<tc>} {
    %c0 = arith.constant 0 : index
    %c0_0 = arith.constant 0 : index
    %0 = vector.load %arg0[%c0, %c0_0] : memref<8x128xf32, #tpu.memory_space<vmem>>, vector<8x128xf32>
    %1 = vector.extract_strided_slice %0 {offsets = [0, 0], sizes = [8, 16], strides = [1, 1]} : vector<8x128xf32> to vector<8x16xf32>
    %2 = vector.extract_strided_slice %0 {offsets = [0, 16], sizes = [8, 1], strides = [1, 1]} : vector<8x128xf32> to vector<8x1xf32>
    %3 = vector.extract_strided_slice %0 {offsets = [0, 32], sizes = [1, 16], strides = [1, 1]} : vector<8x128xf32> to vector<1x16xf32>
    %4 = vector.broadcast %2 : vector<8x1xf32> to vector<8x16xf32>
    %5 = arith.mulf %4, %1 : vector<8x16xf32>
    %cst = arith.constant dense<0.000000e+00> : vector<16xf32>
    %6 = vector.multi_reduction <add>, %5, %cst [0] : vector<8x16xf32> to vector<16xf32>
    %7 = vector.shape_cast %6 : vector<16xf32> to vector<1x16xf32>
    %8 = arith.addf %7, %3 : vector<1x16xf32>
    %cst_1 = arith.constant 0.000000e+00 : f32
    %9 = vector.broadcast %cst_1 : f32 to vector<1x16xf32>
    %10 = arith.maximumf %8, %9 : vector<1x16xf32>
    %11 = vector.extract_strided_slice %0 {offsets = [2, 32], sizes = [1, 16], strides = [1, 1]} : vector<8x128xf32> to vector<1x16xf32>
    %12 = vector.extract_strided_slice %0 {offsets = [2, 48], sizes = [1, 1], strides = [1, 1]} : vector<8x128xf32> to vector<1x1xf32>
    %13 = arith.mulf %11, %10 : vector<1x16xf32>
    %cst_2 = arith.constant dense<0.000000e+00> : vector<1xf32>
    %14 = vector.multi_reduction <add>, %13, %cst_2 [1] : vector<1x16xf32> to vector<1xf32>
    %15 = vector.shape_cast %14 : vector<1xf32> to vector<1x1xf32>
    %16 = arith.addf %15, %12 : vector<1x1xf32>
    %17 = arith.negf %16 : vector<1x1xf32>
    %18 = math.exp %17 : vector<1x1xf32>
    %cst_3 = arith.constant 1.000000e+00 : f32
    %19 = vector.broadcast %cst_3 : f32 to vector<1x1xf32>
    %20 = arith.addf %19, %18 : vector<1x1xf32>
    %21 = arith.divf %19, %20 : vector<1x1xf32>
    %cst_4 = arith.constant 3.000000e+00 : f32
    %22 = vector.broadcast %cst_4 : f32 to vector<1x1xf32>
    %23 = arith.mulf %21, %22 : vector<1x1xf32>
    %cst_5 = arith.constant 1.000000e+00 : f32
    %24 = vector.broadcast %cst_5 : f32 to vector<1x1xf32>
    %25 = arith.addf %23, %24 : vector<1x1xf32>
    %cst_6 = arith.constant 3.14159274 : f32
    %cst_7 = arith.constant 1.000000e+00 : f32
    %26 = arith.mulf %cst_6, %cst_7 : f32
    %27 = vector.broadcast %26 : f32 to vector<1x1xf32>
    %28 = arith.mulf %27, %25 : vector<1x1xf32>
    %29 = math.cos %28 : vector<1x1xf32>
    %30 = math.absf %29 : vector<1x1xf32>
    %cst_8 = arith.constant 3.14159274 : f32
    %cst_9 = arith.constant 0.888888895 : f32
    %31 = arith.mulf %cst_8, %cst_9 : f32
    %32 = vector.broadcast %31 : f32 to vector<1x1xf32>
    %33 = arith.mulf %32, %25 : vector<1x1xf32>
    %34 = math.cos %33 : vector<1x1xf32>
    %35 = math.absf %34 : vector<1x1xf32>
    %cst_10 = arith.constant 3.14159274 : f32
    %cst_11 = arith.constant 0.555555582 : f32
    %36 = arith.mulf %cst_10, %cst_11 : f32
    %37 = vector.broadcast %36 : f32 to vector<1x1xf32>
    %38 = arith.mulf %37, %25 : vector<1x1xf32>
    %39 = math.cos %38 : vector<1x1xf32>
    %40 = math.absf %39 : vector<1x1xf32>
    %cst_12 = arith.constant 3.14159274 : f32
    %cst_13 = arith.constant 0.444444448 : f32
    %41 = arith.mulf %cst_12, %cst_13 : f32
    %42 = vector.broadcast %41 : f32 to vector<1x1xf32>
    %43 = arith.mulf %42, %25 : vector<1x1xf32>
    %44 = math.cos %43 : vector<1x1xf32>
    %45 = math.absf %44 : vector<1x1xf32>
    %cst_14 = arith.constant 3.14159274 : f32
    %cst_15 = arith.constant 0.555555582 : f32
    %46 = arith.mulf %cst_14, %cst_15 : f32
    %47 = vector.broadcast %46 : f32 to vector<1x1xf32>
    %48 = arith.mulf %47, %25 : vector<1x1xf32>
    %49 = math.cos %48 : vector<1x1xf32>
    %50 = math.absf %49 : vector<1x1xf32>
    %cst_16 = arith.constant 3.14159274 : f32
    %cst_17 = arith.constant 0.888888895 : f32
    %51 = arith.mulf %cst_16, %cst_17 : f32
    %52 = vector.broadcast %51 : f32 to vector<1x1xf32>
    %53 = arith.mulf %52, %25 : vector<1x1xf32>
    %54 = math.cos %53 : vector<1x1xf32>
    %55 = math.absf %54 : vector<1x1xf32>
    %cst_18 = arith.constant 3.14159274 : f32
    %cst_19 = arith.constant 0.555555582 : f32
    %56 = arith.mulf %cst_18, %cst_19 : f32
    %57 = vector.broadcast %56 : f32 to vector<1x1xf32>
    %58 = arith.mulf %57, %25 : vector<1x1xf32>
    %59 = math.cos %58 : vector<1x1xf32>
    %60 = math.absf %59 : vector<1x1xf32>
    %cst_20 = arith.constant 3.14159274 : f32
    %cst_21 = arith.constant 0.222222224 : f32
    %61 = arith.mulf %cst_20, %cst_21 : f32
    %62 = vector.broadcast %61 : f32 to vector<1x1xf32>
    %63 = arith.mulf %62, %25 : vector<1x1xf32>
    %64 = math.cos %63 : vector<1x1xf32>
    %65 = math.absf %64 : vector<1x1xf32>
    %cst_22 = arith.constant 3.14159274 : f32
    %cst_23 = arith.constant 0.111111112 : f32
    %66 = arith.mulf %cst_22, %cst_23 : f32
    %67 = vector.broadcast %66 : f32 to vector<1x1xf32>
    %68 = arith.mulf %67, %25 : vector<1x1xf32>
    %69 = math.cos %68 : vector<1x1xf32>
    %70 = math.absf %69 : vector<1x1xf32>
    %cst_24 = arith.constant 3.14159274 : f32
    %cst_25 = arith.constant 0.222222224 : f32
    %71 = arith.mulf %cst_24, %cst_25 : f32
    %72 = vector.broadcast %71 : f32 to vector<1x1xf32>
    %73 = arith.mulf %72, %25 : vector<1x1xf32>
    %74 = math.cos %73 : vector<1x1xf32>
    %75 = math.absf %74 : vector<1x1xf32>
    %cst_26 = arith.constant 3.14159274 : f32
    %cst_27 = arith.constant 0.555555582 : f32
    %76 = arith.mulf %cst_26, %cst_27 : f32
    %77 = vector.broadcast %76 : f32 to vector<1x1xf32>
    %78 = arith.mulf %77, %25 : vector<1x1xf32>
    %79 = math.cos %78 : vector<1x1xf32>
    %80 = math.absf %79 : vector<1x1xf32>
    %cst_28 = arith.constant 3.14159274 : f32
    %cst_29 = arith.constant 1.000000e+00 : f32
    %81 = arith.mulf %cst_28, %cst_29 : f32
    %82 = vector.broadcast %81 : f32 to vector<1x1xf32>
    %83 = arith.mulf %82, %25 : vector<1x1xf32>
    %84 = math.cos %83 : vector<1x1xf32>
    %85 = math.absf %84 : vector<1x1xf32>
    %cst_30 = arith.constant 3.14159274 : f32
    %cst_31 = arith.constant 0.444444448 : f32
    %86 = arith.mulf %cst_30, %cst_31 : f32
    %87 = vector.broadcast %86 : f32 to vector<1x1xf32>
    %88 = arith.mulf %87, %25 : vector<1x1xf32>
    %89 = math.cos %88 : vector<1x1xf32>
    %90 = math.absf %89 : vector<1x1xf32>
    %cst_32 = arith.constant 3.14159274 : f32
    %cst_33 = arith.constant 0.111111112 : f32
    %91 = arith.mulf %cst_32, %cst_33 : f32
    %92 = vector.broadcast %91 : f32 to vector<1x1xf32>
    %93 = arith.mulf %92, %25 : vector<1x1xf32>
    %94 = math.cos %93 : vector<1x1xf32>
    %95 = math.absf %94 : vector<1x1xf32>
    %cst_34 = arith.constant 3.14159274 : f32
    %cst_35 = arith.constant 0.000000e+00 : f32
    %96 = arith.mulf %cst_34, %cst_35 : f32
    %97 = vector.broadcast %96 : f32 to vector<1x1xf32>
    %98 = arith.mulf %97, %25 : vector<1x1xf32>
    %99 = math.cos %98 : vector<1x1xf32>
    %100 = math.absf %99 : vector<1x1xf32>
    %cst_36 = arith.constant 3.14159274 : f32
    %cst_37 = arith.constant 0.111111112 : f32
    %101 = arith.mulf %cst_36, %cst_37 : f32
    %102 = vector.broadcast %101 : f32 to vector<1x1xf32>
    %103 = arith.mulf %102, %25 : vector<1x1xf32>
    %104 = math.cos %103 : vector<1x1xf32>
    %105 = math.absf %104 : vector<1x1xf32>
    %cst_38 = arith.constant 3.14159274 : f32
    %cst_39 = arith.constant 0.444444448 : f32
    %106 = arith.mulf %cst_38, %cst_39 : f32
    %107 = vector.broadcast %106 : f32 to vector<1x1xf32>
    %108 = arith.mulf %107, %25 : vector<1x1xf32>
    %109 = math.cos %108 : vector<1x1xf32>
    %110 = math.absf %109 : vector<1x1xf32>
    %cst_40 = arith.constant 3.14159274 : f32
    %cst_41 = arith.constant 1.000000e+00 : f32
    %111 = arith.mulf %cst_40, %cst_41 : f32
    %112 = vector.broadcast %111 : f32 to vector<1x1xf32>
    %113 = arith.mulf %112, %25 : vector<1x1xf32>
    %114 = math.cos %113 : vector<1x1xf32>
    %115 = math.absf %114 : vector<1x1xf32>
    %cst_42 = arith.constant 3.14159274 : f32
    %cst_43 = arith.constant 0.555555582 : f32
    %116 = arith.mulf %cst_42, %cst_43 : f32
    %117 = vector.broadcast %116 : f32 to vector<1x1xf32>
    %118 = arith.mulf %117, %25 : vector<1x1xf32>
    %119 = math.cos %118 : vector<1x1xf32>
    %120 = math.absf %119 : vector<1x1xf32>
    %cst_44 = arith.constant 3.14159274 : f32
    %cst_45 = arith.constant 0.222222224 : f32
    %121 = arith.mulf %cst_44, %cst_45 : f32
    %122 = vector.broadcast %121 : f32 to vector<1x1xf32>
    %123 = arith.mulf %122, %25 : vector<1x1xf32>
    %124 = math.cos %123 : vector<1x1xf32>
    %125 = math.absf %124 : vector<1x1xf32>
    %cst_46 = arith.constant 3.14159274 : f32
    %cst_47 = arith.constant 0.111111112 : f32
    %126 = arith.mulf %cst_46, %cst_47 : f32
    %127 = vector.broadcast %126 : f32 to vector<1x1xf32>
    %128 = arith.mulf %127, %25 : vector<1x1xf32>
    %129 = math.cos %128 : vector<1x1xf32>
    %130 = math.absf %129 : vector<1x1xf32>
    %cst_48 = arith.constant 3.14159274 : f32
    %cst_49 = arith.constant 0.222222224 : f32
    %131 = arith.mulf %cst_48, %cst_49 : f32
    %132 = vector.broadcast %131 : f32 to vector<1x1xf32>
    %133 = arith.mulf %132, %25 : vector<1x1xf32>
    %134 = math.cos %133 : vector<1x1xf32>
    %135 = math.absf %134 : vector<1x1xf32>
    %cst_50 = arith.constant 3.14159274 : f32
    %cst_51 = arith.constant 0.555555582 : f32
    %136 = arith.mulf %cst_50, %cst_51 : f32
    %137 = vector.broadcast %136 : f32 to vector<1x1xf32>
    %138 = arith.mulf %137, %25 : vector<1x1xf32>
    %139 = math.cos %138 : vector<1x1xf32>
    %140 = math.absf %139 : vector<1x1xf32>
    %cst_52 = arith.constant 3.14159274 : f32
    %cst_53 = arith.constant 0.888888895 : f32
    %141 = arith.mulf %cst_52, %cst_53 : f32
    %142 = vector.broadcast %141 : f32 to vector<1x1xf32>
    %143 = arith.mulf %142, %25 : vector<1x1xf32>
    %144 = math.cos %143 : vector<1x1xf32>
    %145 = math.absf %144 : vector<1x1xf32>
    %cst_54 = arith.constant 3.14159274 : f32
    %cst_55 = arith.constant 0.555555582 : f32
    %146 = arith.mulf %cst_54, %cst_55 : f32
    %147 = vector.broadcast %146 : f32 to vector<1x1xf32>
    %148 = arith.mulf %147, %25 : vector<1x1xf32>
    %149 = math.cos %148 : vector<1x1xf32>
    %150 = math.absf %149 : vector<1x1xf32>
    %cst_56 = arith.constant 3.14159274 : f32
    %cst_57 = arith.constant 0.444444448 : f32
    %151 = arith.mulf %cst_56, %cst_57 : f32
    %152 = vector.broadcast %151 : f32 to vector<1x1xf32>
    %153 = arith.mulf %152, %25 : vector<1x1xf32>
    %154 = math.cos %153 : vector<1x1xf32>
    %155 = math.absf %154 : vector<1x1xf32>
    %cst_58 = arith.constant 3.14159274 : f32
    %cst_59 = arith.constant 0.555555582 : f32
    %156 = arith.mulf %cst_58, %cst_59 : f32
    %157 = vector.broadcast %156 : f32 to vector<1x1xf32>
    %158 = arith.mulf %157, %25 : vector<1x1xf32>
    %159 = math.cos %158 : vector<1x1xf32>
    %160 = math.absf %159 : vector<1x1xf32>
    %cst_60 = arith.constant 3.14159274 : f32
    %cst_61 = arith.constant 0.888888895 : f32
    %161 = arith.mulf %cst_60, %cst_61 : f32
    %162 = vector.broadcast %161 : f32 to vector<1x1xf32>
    %163 = arith.mulf %162, %25 : vector<1x1xf32>
    %164 = math.cos %163 : vector<1x1xf32>
    %165 = math.absf %164 : vector<1x1xf32>
    %cst_62 = arith.constant 3.14159274 : f32
    %cst_63 = arith.constant 1.000000e+00 : f32
    %166 = arith.mulf %cst_62, %cst_63 : f32
    %167 = vector.broadcast %166 : f32 to vector<1x1xf32>
    %168 = arith.mulf %167, %25 : vector<1x1xf32>
    %169 = math.cos %168 : vector<1x1xf32>
    %170 = math.absf %169 : vector<1x1xf32>
    %171 = vector.extract_strided_slice %0 {offsets = [3, 32], sizes = [1, 16], strides = [1, 1]} : vector<8x128xf32> to vector<1x16xf32>
    %172 = vector.extract_strided_slice %0 {offsets = [3, 48], sizes = [1, 1], strides = [1, 1]} : vector<8x128xf32> to vector<1x1xf32>
    %173 = arith.mulf %171, %10 : vector<1x16xf32>
    %cst_64 = arith.constant dense<0.000000e+00> : vector<1xf32>
    %174 = vector.multi_reduction <add>, %173, %cst_64 [1] : vector<1x16xf32> to vector<1xf32>
    %175 = vector.shape_cast %174 : vector<1xf32> to vector<1x1xf32>
    %176 = arith.addf %175, %172 : vector<1x1xf32>
    %177 = arith.negf %176 : vector<1x1xf32>
    %178 = math.exp %177 : vector<1x1xf32>
    %cst_65 = arith.constant 1.000000e+00 : f32
    %179 = vector.broadcast %cst_65 : f32 to vector<1x1xf32>
    %180 = arith.addf %179, %178 : vector<1x1xf32>
    %181 = arith.divf %179, %180 : vector<1x1xf32>
    %cst_66 = arith.constant 3.000000e+00 : f32
    %182 = vector.broadcast %cst_66 : f32 to vector<1x1xf32>
    %183 = arith.mulf %181, %182 : vector<1x1xf32>
    %cst_67 = arith.constant 1.000000e+00 : f32
    %184 = vector.broadcast %cst_67 : f32 to vector<1x1xf32>
    %185 = arith.addf %183, %184 : vector<1x1xf32>
    %cst_68 = arith.constant 3.14159274 : f32
    %cst_69 = arith.constant 1.000000e+00 : f32
    %186 = arith.mulf %cst_68, %cst_69 : f32
    %187 = vector.broadcast %186 : f32 to vector<1x1xf32>
    %188 = arith.mulf %187, %185 : vector<1x1xf32>
    %189 = math.cos %188 : vector<1x1xf32>
    %190 = math.absf %189 : vector<1x1xf32>
    %cst_70 = arith.constant 3.14159274 : f32
    %cst_71 = arith.constant 0.888888895 : f32
    %191 = arith.mulf %cst_70, %cst_71 : f32
    %192 = vector.broadcast %191 : f32 to vector<1x1xf32>
    %193 = arith.mulf %192, %185 : vector<1x1xf32>
    %194 = math.cos %193 : vector<1x1xf32>
    %195 = math.absf %194 : vector<1x1xf32>
    %cst_72 = arith.constant 3.14159274 : f32
    %cst_73 = arith.constant 0.555555582 : f32
    %196 = arith.mulf %cst_72, %cst_73 : f32
    %197 = vector.broadcast %196 : f32 to vector<1x1xf32>
    %198 = arith.mulf %197, %185 : vector<1x1xf32>
    %199 = math.cos %198 : vector<1x1xf32>
    %200 = math.absf %199 : vector<1x1xf32>
    %cst_74 = arith.constant 3.14159274 : f32
    %cst_75 = arith.constant 0.444444448 : f32
    %201 = arith.mulf %cst_74, %cst_75 : f32
    %202 = vector.broadcast %201 : f32 to vector<1x1xf32>
    %203 = arith.mulf %202, %185 : vector<1x1xf32>
    %204 = math.cos %203 : vector<1x1xf32>
    %205 = math.absf %204 : vector<1x1xf32>
    %cst_76 = arith.constant 3.14159274 : f32
    %cst_77 = arith.constant 0.555555582 : f32
    %206 = arith.mulf %cst_76, %cst_77 : f32
    %207 = vector.broadcast %206 : f32 to vector<1x1xf32>
    %208 = arith.mulf %207, %185 : vector<1x1xf32>
    %209 = math.cos %208 : vector<1x1xf32>
    %210 = math.absf %209 : vector<1x1xf32>
    %cst_78 = arith.constant 3.14159274 : f32
    %cst_79 = arith.constant 0.888888895 : f32
    %211 = arith.mulf %cst_78, %cst_79 : f32
    %212 = vector.broadcast %211 : f32 to vector<1x1xf32>
    %213 = arith.mulf %212, %185 : vector<1x1xf32>
    %214 = math.cos %213 : vector<1x1xf32>
    %215 = math.absf %214 : vector<1x1xf32>
    %cst_80 = arith.constant 3.14159274 : f32
    %cst_81 = arith.constant 0.555555582 : f32
    %216 = arith.mulf %cst_80, %cst_81 : f32
    %217 = vector.broadcast %216 : f32 to vector<1x1xf32>
    %218 = arith.mulf %217, %185 : vector<1x1xf32>
    %219 = math.cos %218 : vector<1x1xf32>
    %220 = math.absf %219 : vector<1x1xf32>
    %cst_82 = arith.constant 3.14159274 : f32
    %cst_83 = arith.constant 0.222222224 : f32
    %221 = arith.mulf %cst_82, %cst_83 : f32
    %222 = vector.broadcast %221 : f32 to vector<1x1xf32>
    %223 = arith.mulf %222, %185 : vector<1x1xf32>
    %224 = math.cos %223 : vector<1x1xf32>
    %225 = math.absf %224 : vector<1x1xf32>
    %cst_84 = arith.constant 3.14159274 : f32
    %cst_85 = arith.constant 0.111111112 : f32
    %226 = arith.mulf %cst_84, %cst_85 : f32
    %227 = vector.broadcast %226 : f32 to vector<1x1xf32>
    %228 = arith.mulf %227, %185 : vector<1x1xf32>
    %229 = math.cos %228 : vector<1x1xf32>
    %230 = math.absf %229 : vector<1x1xf32>
    %cst_86 = arith.constant 3.14159274 : f32
    %cst_87 = arith.constant 0.222222224 : f32
    %231 = arith.mulf %cst_86, %cst_87 : f32
    %232 = vector.broadcast %231 : f32 to vector<1x1xf32>
    %233 = arith.mulf %232, %185 : vector<1x1xf32>
    %234 = math.cos %233 : vector<1x1xf32>
    %235 = math.absf %234 : vector<1x1xf32>
    %cst_88 = arith.constant 3.14159274 : f32
    %cst_89 = arith.constant 0.555555582 : f32
    %236 = arith.mulf %cst_88, %cst_89 : f32
    %237 = vector.broadcast %236 : f32 to vector<1x1xf32>
    %238 = arith.mulf %237, %185 : vector<1x1xf32>
    %239 = math.cos %238 : vector<1x1xf32>
    %240 = math.absf %239 : vector<1x1xf32>
    %cst_90 = arith.constant 3.14159274 : f32
    %cst_91 = arith.constant 1.000000e+00 : f32
    %241 = arith.mulf %cst_90, %cst_91 : f32
    %242 = vector.broadcast %241 : f32 to vector<1x1xf32>
    %243 = arith.mulf %242, %185 : vector<1x1xf32>
    %244 = math.cos %243 : vector<1x1xf32>
    %245 = math.absf %244 : vector<1x1xf32>
    %cst_92 = arith.constant 3.14159274 : f32
    %cst_93 = arith.constant 0.444444448 : f32
    %246 = arith.mulf %cst_92, %cst_93 : f32
    %247 = vector.broadcast %246 : f32 to vector<1x1xf32>
    %248 = arith.mulf %247, %185 : vector<1x1xf32>
    %249 = math.cos %248 : vector<1x1xf32>
    %250 = math.absf %249 : vector<1x1xf32>
    %cst_94 = arith.constant 3.14159274 : f32
    %cst_95 = arith.constant 0.111111112 : f32
    %251 = arith.mulf %cst_94, %cst_95 : f32
    %252 = vector.broadcast %251 : f32 to vector<1x1xf32>
    %253 = arith.mulf %252, %185 : vector<1x1xf32>
    %254 = math.cos %253 : vector<1x1xf32>
    %255 = math.absf %254 : vector<1x1xf32>
    %cst_96 = arith.constant 3.14159274 : f32
    %cst_97 = arith.constant 0.000000e+00 : f32
    %256 = arith.mulf %cst_96, %cst_97 : f32
    %257 = vector.broadcast %256 : f32 to vector<1x1xf32>
    %258 = arith.mulf %257, %185 : vector<1x1xf32>
    %259 = math.cos %258 : vector<1x1xf32>
    %260 = math.absf %259 : vector<1x1xf32>
    %cst_98 = arith.constant 3.14159274 : f32
    %cst_99 = arith.constant 0.111111112 : f32
    %261 = arith.mulf %cst_98, %cst_99 : f32
    %262 = vector.broadcast %261 : f32 to vector<1x1xf32>
    %263 = arith.mulf %262, %185 : vector<1x1xf32>
    %264 = math.cos %263 : vector<1x1xf32>
    %265 = math.absf %264 : vector<1x1xf32>
    %cst_100 = arith.constant 3.14159274 : f32
    %cst_101 = arith.constant 0.444444448 : f32
    %266 = arith.mulf %cst_100, %cst_101 : f32
    %267 = vector.broadcast %266 : f32 to vector<1x1xf32>
    %268 = arith.mulf %267, %185 : vector<1x1xf32>
    %269 = math.cos %268 : vector<1x1xf32>
    %270 = math.absf %269 : vector<1x1xf32>
    %cst_102 = arith.constant 3.14159274 : f32
    %cst_103 = arith.constant 1.000000e+00 : f32
    %271 = arith.mulf %cst_102, %cst_103 : f32
    %272 = vector.broadcast %271 : f32 to vector<1x1xf32>
    %273 = arith.mulf %272, %185 : vector<1x1xf32>
    %274 = math.cos %273 : vector<1x1xf32>
    %275 = math.absf %274 : vector<1x1xf32>
    %cst_104 = arith.constant 3.14159274 : f32
    %cst_105 = arith.constant 0.555555582 : f32
    %276 = arith.mulf %cst_104, %cst_105 : f32
    %277 = vector.broadcast %276 : f32 to vector<1x1xf32>
    %278 = arith.mulf %277, %185 : vector<1x1xf32>
    %279 = math.cos %278 : vector<1x1xf32>
    %280 = math.absf %279 : vector<1x1xf32>
    %cst_106 = arith.constant 3.14159274 : f32
    %cst_107 = arith.constant 0.222222224 : f32
    %281 = arith.mulf %cst_106, %cst_107 : f32
    %282 = vector.broadcast %281 : f32 to vector<1x1xf32>
    %283 = arith.mulf %282, %185 : vector<1x1xf32>
    %284 = math.cos %283 : vector<1x1xf32>
    %285 = math.absf %284 : vector<1x1xf32>
    %cst_108 = arith.constant 3.14159274 : f32
    %cst_109 = arith.constant 0.111111112 : f32
    %286 = arith.mulf %cst_108, %cst_109 : f32
    %287 = vector.broadcast %286 : f32 to vector<1x1xf32>
    %288 = arith.mulf %287, %185 : vector<1x1xf32>
    %289 = math.cos %288 : vector<1x1xf32>
    %290 = math.absf %289 : vector<1x1xf32>
    %cst_110 = arith.constant 3.14159274 : f32
    %cst_111 = arith.constant 0.222222224 : f32
    %291 = arith.mulf %cst_110, %cst_111 : f32
    %292 = vector.broadcast %291 : f32 to vector<1x1xf32>
    %293 = arith.mulf %292, %185 : vector<1x1xf32>
    %294 = math.cos %293 : vector<1x1xf32>
    %295 = math.absf %294 : vector<1x1xf32>
    %cst_112 = arith.constant 3.14159274 : f32
    %cst_113 = arith.constant 0.555555582 : f32
    %296 = arith.mulf %cst_112, %cst_113 : f32
    %297 = vector.broadcast %296 : f32 to vector<1x1xf32>
    %298 = arith.mulf %297, %185 : vector<1x1xf32>
    %299 = math.cos %298 : vector<1x1xf32>
    %300 = math.absf %299 : vector<1x1xf32>
    %cst_114 = arith.constant 3.14159274 : f32
    %cst_115 = arith.constant 0.888888895 : f32
    %301 = arith.mulf %cst_114, %cst_115 : f32
    %302 = vector.broadcast %301 : f32 to vector<1x1xf32>
    %303 = arith.mulf %302, %185 : vector<1x1xf32>
    %304 = math.cos %303 : vector<1x1xf32>
    %305 = math.absf %304 : vector<1x1xf32>
    %cst_116 = arith.constant 3.14159274 : f32
    %cst_117 = arith.constant 0.555555582 : f32
    %306 = arith.mulf %cst_116, %cst_117 : f32
    %307 = vector.broadcast %306 : f32 to vector<1x1xf32>
    %308 = arith.mulf %307, %185 : vector<1x1xf32>
    %309 = math.cos %308 : vector<1x1xf32>
    %310 = math.absf %309 : vector<1x1xf32>
    %cst_118 = arith.constant 3.14159274 : f32
    %cst_119 = arith.constant 0.444444448 : f32
    %311 = arith.mulf %cst_118, %cst_119 : f32
    %312 = vector.broadcast %311 : f32 to vector<1x1xf32>
    %313 = arith.mulf %312, %185 : vector<1x1xf32>
    %314 = math.cos %313 : vector<1x1xf32>
    %315 = math.absf %314 : vector<1x1xf32>
    %cst_120 = arith.constant 3.14159274 : f32
    %cst_121 = arith.constant 0.555555582 : f32
    %316 = arith.mulf %cst_120, %cst_121 : f32
    %317 = vector.broadcast %316 : f32 to vector<1x1xf32>
    %318 = arith.mulf %317, %185 : vector<1x1xf32>
    %319 = math.cos %318 : vector<1x1xf32>
    %320 = math.absf %319 : vector<1x1xf32>
    %cst_122 = arith.constant 3.14159274 : f32
    %cst_123 = arith.constant 0.888888895 : f32
    %321 = arith.mulf %cst_122, %cst_123 : f32
    %322 = vector.broadcast %321 : f32 to vector<1x1xf32>
    %323 = arith.mulf %322, %185 : vector<1x1xf32>
    %324 = math.cos %323 : vector<1x1xf32>
    %325 = math.absf %324 : vector<1x1xf32>
    %cst_124 = arith.constant 3.14159274 : f32
    %cst_125 = arith.constant 1.000000e+00 : f32
    %326 = arith.mulf %cst_124, %cst_125 : f32
    %327 = vector.broadcast %326 : f32 to vector<1x1xf32>
    %328 = arith.mulf %327, %185 : vector<1x1xf32>
    %329 = math.cos %328 : vector<1x1xf32>
    %330 = math.absf %329 : vector<1x1xf32>
    %c0_126 = arith.constant 0 : index
    %c0_127 = arith.constant 0 : index
    %c0_128 = arith.constant 0 : index
    %331 = vector.load %arg1[%c0_126, %c0_127, %c0_128] : memref<6x22x22xf32, #tpu.memory_space<vmem>>, vector<6x16x22xf32>
    %332 = vector.extract_strided_slice %331 {offsets = [0, 0, 3], sizes = [6, 16, 16], strides = [1, 1, 1]} : vector<6x16x22xf32> to vector<6x16x16xf32>
    %333 = vector.shape_cast %30 : vector<1x1xf32> to vector<1x1x1xf32>
    %334 = vector.broadcast %333 : vector<1x1x1xf32> to vector<6x16x16xf32>
    %335 = arith.mulf %334, %332 : vector<6x16x16xf32>
    %336 = vector.shape_cast %190 : vector<1x1xf32> to vector<1x1x1xf32>
    %337 = vector.broadcast %336 : vector<1x1x1xf32> to vector<6x16x16xf32>
    %338 = arith.mulf %337, %332 : vector<6x16x16xf32>
    %c0_129 = arith.constant 0 : index
    %c1 = arith.constant 1 : index
    %c0_130 = arith.constant 0 : index
    %339 = vector.load %arg1[%c0_129, %c1, %c0_130] : memref<6x22x22xf32, #tpu.memory_space<vmem>>, vector<6x16x22xf32>
    %340 = vector.extract_strided_slice %339 {offsets = [0, 0, 1], sizes = [6, 16, 16], strides = [1, 1, 1]} : vector<6x16x22xf32> to vector<6x16x16xf32>
    %341 = vector.shape_cast %35 : vector<1x1xf32> to vector<1x1x1xf32>
    %342 = vector.broadcast %341 : vector<1x1x1xf32> to vector<6x16x16xf32>
    %343 = arith.mulf %342, %340 : vector<6x16x16xf32>
    %344 = arith.addf %335, %343 : vector<6x16x16xf32>
    %345 = vector.shape_cast %195 : vector<1x1xf32> to vector<1x1x1xf32>
    %346 = vector.broadcast %345 : vector<1x1x1xf32> to vector<6x16x16xf32>
    %347 = arith.mulf %346, %340 : vector<6x16x16xf32>
    %348 = arith.addf %338, %347 : vector<6x16x16xf32>
    %349 = vector.extract_strided_slice %339 {offsets = [0, 0, 2], sizes = [6, 16, 16], strides = [1, 1, 1]} : vector<6x16x22xf32> to vector<6x16x16xf32>
    %350 = vector.shape_cast %40 : vector<1x1xf32> to vector<1x1x1xf32>
    %351 = vector.broadcast %350 : vector<1x1x1xf32> to vector<6x16x16xf32>
    %352 = arith.mulf %351, %349 : vector<6x16x16xf32>
    %353 = arith.addf %344, %352 : vector<6x16x16xf32>
    %354 = vector.shape_cast %200 : vector<1x1xf32> to vector<1x1x1xf32>
    %355 = vector.broadcast %354 : vector<1x1x1xf32> to vector<6x16x16xf32>
    %356 = arith.mulf %355, %349 : vector<6x16x16xf32>
    %357 = arith.addf %348, %356 : vector<6x16x16xf32>
    %358 = vector.extract_strided_slice %339 {offsets = [0, 0, 3], sizes = [6, 16, 16], strides = [1, 1, 1]} : vector<6x16x22xf32> to vector<6x16x16xf32>
    %359 = vector.shape_cast %45 : vector<1x1xf32> to vector<1x1x1xf32>
    %360 = vector.broadcast %359 : vector<1x1x1xf32> to vector<6x16x16xf32>
    %361 = arith.mulf %360, %358 : vector<6x16x16xf32>
    %362 = arith.addf %353, %361 : vector<6x16x16xf32>
    %363 = vector.shape_cast %205 : vector<1x1xf32> to vector<1x1x1xf32>
    %364 = vector.broadcast %363 : vector<1x1x1xf32> to vector<6x16x16xf32>
    %365 = arith.mulf %364, %358 : vector<6x16x16xf32>
    %366 = arith.addf %357, %365 : vector<6x16x16xf32>
    %367 = vector.extract_strided_slice %339 {offsets = [0, 0, 4], sizes = [6, 16, 16], strides = [1, 1, 1]} : vector<6x16x22xf32> to vector<6x16x16xf32>
    %368 = vector.shape_cast %50 : vector<1x1xf32> to vector<1x1x1xf32>
    %369 = vector.broadcast %368 : vector<1x1x1xf32> to vector<6x16x16xf32>
    %370 = arith.mulf %369, %367 : vector<6x16x16xf32>
    %371 = arith.addf %362, %370 : vector<6x16x16xf32>
    %372 = vector.shape_cast %210 : vector<1x1xf32> to vector<1x1x1xf32>
    %373 = vector.broadcast %372 : vector<1x1x1xf32> to vector<6x16x16xf32>
    %374 = arith.mulf %373, %367 : vector<6x16x16xf32>
    %375 = arith.addf %366, %374 : vector<6x16x16xf32>
    %376 = vector.extract_strided_slice %339 {offsets = [0, 0, 5], sizes = [6, 16, 16], strides = [1, 1, 1]} : vector<6x16x22xf32> to vector<6x16x16xf32>
    %377 = vector.shape_cast %55 : vector<1x1xf32> to vector<1x1x1xf32>
    %378 = vector.broadcast %377 : vector<1x1x1xf32> to vector<6x16x16xf32>
    %379 = arith.mulf %378, %376 : vector<6x16x16xf32>
    %380 = arith.addf %371, %379 : vector<6x16x16xf32>
    %381 = vector.shape_cast %215 : vector<1x1xf32> to vector<1x1x1xf32>
    %382 = vector.broadcast %381 : vector<1x1x1xf32> to vector<6x16x16xf32>
    %383 = arith.mulf %382, %376 : vector<6x16x16xf32>
    %384 = arith.addf %375, %383 : vector<6x16x16xf32>
    %c0_131 = arith.constant 0 : index
    %c2 = arith.constant 2 : index
    %c0_132 = arith.constant 0 : index
    %385 = vector.load %arg1[%c0_131, %c2, %c0_132] : memref<6x22x22xf32, #tpu.memory_space<vmem>>, vector<6x16x22xf32>
    %386 = vector.extract_strided_slice %385 {offsets = [0, 0, 1], sizes = [6, 16, 16], strides = [1, 1, 1]} : vector<6x16x22xf32> to vector<6x16x16xf32>
    %387 = vector.shape_cast %60 : vector<1x1xf32> to vector<1x1x1xf32>
    %388 = vector.broadcast %387 : vector<1x1x1xf32> to vector<6x16x16xf32>
    %389 = arith.mulf %388, %386 : vector<6x16x16xf32>
    %390 = arith.addf %380, %389 : vector<6x16x16xf32>
    %391 = vector.shape_cast %220 : vector<1x1xf32> to vector<1x1x1xf32>
    %392 = vector.broadcast %391 : vector<1x1x1xf32> to vector<6x16x16xf32>
    %393 = arith.mulf %392, %386 : vector<6x16x16xf32>
    %394 = arith.addf %384, %393 : vector<6x16x16xf32>
    %395 = vector.extract_strided_slice %385 {offsets = [0, 0, 2], sizes = [6, 16, 16], strides = [1, 1, 1]} : vector<6x16x22xf32> to vector<6x16x16xf32>
    %396 = vector.shape_cast %65 : vector<1x1xf32> to vector<1x1x1xf32>
    %397 = vector.broadcast %396 : vector<1x1x1xf32> to vector<6x16x16xf32>
    %398 = arith.mulf %397, %395 : vector<6x16x16xf32>
    %399 = arith.addf %390, %398 : vector<6x16x16xf32>
    %400 = vector.shape_cast %225 : vector<1x1xf32> to vector<1x1x1xf32>
    %401 = vector.broadcast %400 : vector<1x1x1xf32> to vector<6x16x16xf32>
    %402 = arith.mulf %401, %395 : vector<6x16x16xf32>
    %403 = arith.addf %394, %402 : vector<6x16x16xf32>
    %404 = vector.extract_strided_slice %385 {offsets = [0, 0, 3], sizes = [6, 16, 16], strides = [1, 1, 1]} : vector<6x16x22xf32> to vector<6x16x16xf32>
    %405 = vector.shape_cast %70 : vector<1x1xf32> to vector<1x1x1xf32>
    %406 = vector.broadcast %405 : vector<1x1x1xf32> to vector<6x16x16xf32>
    %407 = arith.mulf %406, %404 : vector<6x16x16xf32>
    %408 = arith.addf %399, %407 : vector<6x16x16xf32>
    %409 = vector.shape_cast %230 : vector<1x1xf32> to vector<1x1x1xf32>
    %410 = vector.broadcast %409 : vector<1x1x1xf32> to vector<6x16x16xf32>
    %411 = arith.mulf %410, %404 : vector<6x16x16xf32>
    %412 = arith.addf %403, %411 : vector<6x16x16xf32>
    %413 = vector.extract_strided_slice %385 {offsets = [0, 0, 4], sizes = [6, 16, 16], strides = [1, 1, 1]} : vector<6x16x22xf32> to vector<6x16x16xf32>
    %414 = vector.shape_cast %75 : vector<1x1xf32> to vector<1x1x1xf32>
    %415 = vector.broadcast %414 : vector<1x1x1xf32> to vector<6x16x16xf32>
    %416 = arith.mulf %415, %413 : vector<6x16x16xf32>
    %417 = arith.addf %408, %416 : vector<6x16x16xf32>
    %418 = vector.shape_cast %235 : vector<1x1xf32> to vector<1x1x1xf32>
    %419 = vector.broadcast %418 : vector<1x1x1xf32> to vector<6x16x16xf32>
    %420 = arith.mulf %419, %413 : vector<6x16x16xf32>
    %421 = arith.addf %412, %420 : vector<6x16x16xf32>
    %422 = vector.extract_strided_slice %385 {offsets = [0, 0, 5], sizes = [6, 16, 16], strides = [1, 1, 1]} : vector<6x16x22xf32> to vector<6x16x16xf32>
    %423 = vector.shape_cast %80 : vector<1x1xf32> to vector<1x1x1xf32>
    %424 = vector.broadcast %423 : vector<1x1x1xf32> to vector<6x16x16xf32>
    %425 = arith.mulf %424, %422 : vector<6x16x16xf32>
    %426 = arith.addf %417, %425 : vector<6x16x16xf32>
    %427 = vector.shape_cast %240 : vector<1x1xf32> to vector<1x1x1xf32>
    %428 = vector.broadcast %427 : vector<1x1x1xf32> to vector<6x16x16xf32>
    %429 = arith.mulf %428, %422 : vector<6x16x16xf32>
    %430 = arith.addf %421, %429 : vector<6x16x16xf32>
    %c0_133 = arith.constant 0 : index
    %c3 = arith.constant 3 : index
    %c0_134 = arith.constant 0 : index
    %431 = vector.load %arg1[%c0_133, %c3, %c0_134] : memref<6x22x22xf32, #tpu.memory_space<vmem>>, vector<6x16x22xf32>
    %432 = vector.extract_strided_slice %431 {offsets = [0, 0, 0], sizes = [6, 16, 16], strides = [1, 1, 1]} : vector<6x16x22xf32> to vector<6x16x16xf32>
    %433 = vector.shape_cast %85 : vector<1x1xf32> to vector<1x1x1xf32>
    %434 = vector.broadcast %433 : vector<1x1x1xf32> to vector<6x16x16xf32>
    %435 = arith.mulf %434, %432 : vector<6x16x16xf32>
    %436 = arith.addf %426, %435 : vector<6x16x16xf32>
    %437 = vector.shape_cast %245 : vector<1x1xf32> to vector<1x1x1xf32>
    %438 = vector.broadcast %437 : vector<1x1x1xf32> to vector<6x16x16xf32>
    %439 = arith.mulf %438, %432 : vector<6x16x16xf32>
    %440 = arith.addf %430, %439 : vector<6x16x16xf32>
    %441 = vector.extract_strided_slice %431 {offsets = [0, 0, 1], sizes = [6, 16, 16], strides = [1, 1, 1]} : vector<6x16x22xf32> to vector<6x16x16xf32>
    %442 = vector.shape_cast %90 : vector<1x1xf32> to vector<1x1x1xf32>
    %443 = vector.broadcast %442 : vector<1x1x1xf32> to vector<6x16x16xf32>
    %444 = arith.mulf %443, %441 : vector<6x16x16xf32>
    %445 = arith.addf %436, %444 : vector<6x16x16xf32>
    %446 = vector.shape_cast %250 : vector<1x1xf32> to vector<1x1x1xf32>
    %447 = vector.broadcast %446 : vector<1x1x1xf32> to vector<6x16x16xf32>
    %448 = arith.mulf %447, %441 : vector<6x16x16xf32>
    %449 = arith.addf %440, %448 : vector<6x16x16xf32>
    %450 = vector.extract_strided_slice %431 {offsets = [0, 0, 2], sizes = [6, 16, 16], strides = [1, 1, 1]} : vector<6x16x22xf32> to vector<6x16x16xf32>
    %451 = vector.shape_cast %95 : vector<1x1xf32> to vector<1x1x1xf32>
    %452 = vector.broadcast %451 : vector<1x1x1xf32> to vector<6x16x16xf32>
    %453 = arith.mulf %452, %450 : vector<6x16x16xf32>
    %454 = arith.addf %445, %453 : vector<6x16x16xf32>
    %455 = vector.shape_cast %255 : vector<1x1xf32> to vector<1x1x1xf32>
    %456 = vector.broadcast %455 : vector<1x1x1xf32> to vector<6x16x16xf32>
    %457 = arith.mulf %456, %450 : vector<6x16x16xf32>
    %458 = arith.addf %449, %457 : vector<6x16x16xf32>
    %459 = vector.extract_strided_slice %431 {offsets = [0, 0, 3], sizes = [6, 16, 16], strides = [1, 1, 1]} : vector<6x16x22xf32> to vector<6x16x16xf32>
    %460 = vector.shape_cast %100 : vector<1x1xf32> to vector<1x1x1xf32>
    %461 = vector.broadcast %460 : vector<1x1x1xf32> to vector<6x16x16xf32>
    %462 = arith.mulf %461, %459 : vector<6x16x16xf32>
    %463 = arith.addf %454, %462 : vector<6x16x16xf32>
    %464 = vector.shape_cast %260 : vector<1x1xf32> to vector<1x1x1xf32>
    %465 = vector.broadcast %464 : vector<1x1x1xf32> to vector<6x16x16xf32>
    %466 = arith.mulf %465, %459 : vector<6x16x16xf32>
    %467 = arith.addf %458, %466 : vector<6x16x16xf32>
    %468 = vector.extract_strided_slice %431 {offsets = [0, 0, 4], sizes = [6, 16, 16], strides = [1, 1, 1]} : vector<6x16x22xf32> to vector<6x16x16xf32>
    %469 = vector.shape_cast %105 : vector<1x1xf32> to vector<1x1x1xf32>
    %470 = vector.broadcast %469 : vector<1x1x1xf32> to vector<6x16x16xf32>
    %471 = arith.mulf %470, %468 : vector<6x16x16xf32>
    %472 = arith.addf %463, %471 : vector<6x16x16xf32>
    %473 = vector.shape_cast %265 : vector<1x1xf32> to vector<1x1x1xf32>
    %474 = vector.broadcast %473 : vector<1x1x1xf32> to vector<6x16x16xf32>
    %475 = arith.mulf %474, %468 : vector<6x16x16xf32>
    %476 = arith.addf %467, %475 : vector<6x16x16xf32>
    %477 = vector.extract_strided_slice %431 {offsets = [0, 0, 5], sizes = [6, 16, 16], strides = [1, 1, 1]} : vector<6x16x22xf32> to vector<6x16x16xf32>
    %478 = vector.shape_cast %110 : vector<1x1xf32> to vector<1x1x1xf32>
    %479 = vector.broadcast %478 : vector<1x1x1xf32> to vector<6x16x16xf32>
    %480 = arith.mulf %479, %477 : vector<6x16x16xf32>
    %481 = arith.addf %472, %480 : vector<6x16x16xf32>
    %482 = vector.shape_cast %270 : vector<1x1xf32> to vector<1x1x1xf32>
    %483 = vector.broadcast %482 : vector<1x1x1xf32> to vector<6x16x16xf32>
    %484 = arith.mulf %483, %477 : vector<6x16x16xf32>
    %485 = arith.addf %476, %484 : vector<6x16x16xf32>
    %486 = vector.extract_strided_slice %431 {offsets = [0, 0, 6], sizes = [6, 16, 16], strides = [1, 1, 1]} : vector<6x16x22xf32> to vector<6x16x16xf32>
    %487 = vector.shape_cast %115 : vector<1x1xf32> to vector<1x1x1xf32>
    %488 = vector.broadcast %487 : vector<1x1x1xf32> to vector<6x16x16xf32>
    %489 = arith.mulf %488, %486 : vector<6x16x16xf32>
    %490 = arith.addf %481, %489 : vector<6x16x16xf32>
    %491 = vector.shape_cast %275 : vector<1x1xf32> to vector<1x1x1xf32>
    %492 = vector.broadcast %491 : vector<1x1x1xf32> to vector<6x16x16xf32>
    %493 = arith.mulf %492, %486 : vector<6x16x16xf32>
    %494 = arith.addf %485, %493 : vector<6x16x16xf32>
    %c0_135 = arith.constant 0 : index
    %c4 = arith.constant 4 : index
    %c0_136 = arith.constant 0 : index
    %495 = vector.load %arg1[%c0_135, %c4, %c0_136] : memref<6x22x22xf32, #tpu.memory_space<vmem>>, vector<6x16x22xf32>
    %496 = vector.extract_strided_slice %495 {offsets = [0, 0, 1], sizes = [6, 16, 16], strides = [1, 1, 1]} : vector<6x16x22xf32> to vector<6x16x16xf32>
    %497 = vector.shape_cast %120 : vector<1x1xf32> to vector<1x1x1xf32>
    %498 = vector.broadcast %497 : vector<1x1x1xf32> to vector<6x16x16xf32>
    %499 = arith.mulf %498, %496 : vector<6x16x16xf32>
    %500 = arith.addf %490, %499 : vector<6x16x16xf32>
    %501 = vector.shape_cast %280 : vector<1x1xf32> to vector<1x1x1xf32>
    %502 = vector.broadcast %501 : vector<1x1x1xf32> to vector<6x16x16xf32>
    %503 = arith.mulf %502, %496 : vector<6x16x16xf32>
    %504 = arith.addf %494, %503 : vector<6x16x16xf32>
    %505 = vector.extract_strided_slice %495 {offsets = [0, 0, 2], sizes = [6, 16, 16], strides = [1, 1, 1]} : vector<6x16x22xf32> to vector<6x16x16xf32>
    %506 = vector.shape_cast %125 : vector<1x1xf32> to vector<1x1x1xf32>
    %507 = vector.broadcast %506 : vector<1x1x1xf32> to vector<6x16x16xf32>
    %508 = arith.mulf %507, %505 : vector<6x16x16xf32>
    %509 = arith.addf %500, %508 : vector<6x16x16xf32>
    %510 = vector.shape_cast %285 : vector<1x1xf32> to vector<1x1x1xf32>
    %511 = vector.broadcast %510 : vector<1x1x1xf32> to vector<6x16x16xf32>
    %512 = arith.mulf %511, %505 : vector<6x16x16xf32>
    %513 = arith.addf %504, %512 : vector<6x16x16xf32>
    %514 = vector.extract_strided_slice %495 {offsets = [0, 0, 3], sizes = [6, 16, 16], strides = [1, 1, 1]} : vector<6x16x22xf32> to vector<6x16x16xf32>
    %515 = vector.shape_cast %130 : vector<1x1xf32> to vector<1x1x1xf32>
    %516 = vector.broadcast %515 : vector<1x1x1xf32> to vector<6x16x16xf32>
    %517 = arith.mulf %516, %514 : vector<6x16x16xf32>
    %518 = arith.addf %509, %517 : vector<6x16x16xf32>
    %519 = vector.shape_cast %290 : vector<1x1xf32> to vector<1x1x1xf32>
    %520 = vector.broadcast %519 : vector<1x1x1xf32> to vector<6x16x16xf32>
    %521 = arith.mulf %520, %514 : vector<6x16x16xf32>
    %522 = arith.addf %513, %521 : vector<6x16x16xf32>
    %523 = vector.extract_strided_slice %495 {offsets = [0, 0, 4], sizes = [6, 16, 16], strides = [1, 1, 1]} : vector<6x16x22xf32> to vector<6x16x16xf32>
    %524 = vector.shape_cast %135 : vector<1x1xf32> to vector<1x1x1xf32>
    %525 = vector.broadcast %524 : vector<1x1x1xf32> to vector<6x16x16xf32>
    %526 = arith.mulf %525, %523 : vector<6x16x16xf32>
    %527 = arith.addf %518, %526 : vector<6x16x16xf32>
    %528 = vector.shape_cast %295 : vector<1x1xf32> to vector<1x1x1xf32>
    %529 = vector.broadcast %528 : vector<1x1x1xf32> to vector<6x16x16xf32>
    %530 = arith.mulf %529, %523 : vector<6x16x16xf32>
    %531 = arith.addf %522, %530 : vector<6x16x16xf32>
    %532 = vector.extract_strided_slice %495 {offsets = [0, 0, 5], sizes = [6, 16, 16], strides = [1, 1, 1]} : vector<6x16x22xf32> to vector<6x16x16xf32>
    %533 = vector.shape_cast %140 : vector<1x1xf32> to vector<1x1x1xf32>
    %534 = vector.broadcast %533 : vector<1x1x1xf32> to vector<6x16x16xf32>
    %535 = arith.mulf %534, %532 : vector<6x16x16xf32>
    %536 = arith.addf %527, %535 : vector<6x16x16xf32>
    %537 = vector.shape_cast %300 : vector<1x1xf32> to vector<1x1x1xf32>
    %538 = vector.broadcast %537 : vector<1x1x1xf32> to vector<6x16x16xf32>
    %539 = arith.mulf %538, %532 : vector<6x16x16xf32>
    %540 = arith.addf %531, %539 : vector<6x16x16xf32>
    %c0_137 = arith.constant 0 : index
    %c5 = arith.constant 5 : index
    %c0_138 = arith.constant 0 : index
    %541 = vector.load %arg1[%c0_137, %c5, %c0_138] : memref<6x22x22xf32, #tpu.memory_space<vmem>>, vector<6x16x22xf32>
    %542 = vector.extract_strided_slice %541 {offsets = [0, 0, 1], sizes = [6, 16, 16], strides = [1, 1, 1]} : vector<6x16x22xf32> to vector<6x16x16xf32>
    %543 = vector.shape_cast %145 : vector<1x1xf32> to vector<1x1x1xf32>
    %544 = vector.broadcast %543 : vector<1x1x1xf32> to vector<6x16x16xf32>
    %545 = arith.mulf %544, %542 : vector<6x16x16xf32>
    %546 = arith.addf %536, %545 : vector<6x16x16xf32>
    %547 = vector.shape_cast %305 : vector<1x1xf32> to vector<1x1x1xf32>
    %548 = vector.broadcast %547 : vector<1x1x1xf32> to vector<6x16x16xf32>
    %549 = arith.mulf %548, %542 : vector<6x16x16xf32>
    %550 = arith.addf %540, %549 : vector<6x16x16xf32>
    %551 = vector.extract_strided_slice %541 {offsets = [0, 0, 2], sizes = [6, 16, 16], strides = [1, 1, 1]} : vector<6x16x22xf32> to vector<6x16x16xf32>
    %552 = vector.shape_cast %150 : vector<1x1xf32> to vector<1x1x1xf32>
    %553 = vector.broadcast %552 : vector<1x1x1xf32> to vector<6x16x16xf32>
    %554 = arith.mulf %553, %551 : vector<6x16x16xf32>
    %555 = arith.addf %546, %554 : vector<6x16x16xf32>
    %556 = vector.shape_cast %310 : vector<1x1xf32> to vector<1x1x1xf32>
    %557 = vector.broadcast %556 : vector<1x1x1xf32> to vector<6x16x16xf32>
    %558 = arith.mulf %557, %551 : vector<6x16x16xf32>
    %559 = arith.addf %550, %558 : vector<6x16x16xf32>
    %560 = vector.extract_strided_slice %541 {offsets = [0, 0, 3], sizes = [6, 16, 16], strides = [1, 1, 1]} : vector<6x16x22xf32> to vector<6x16x16xf32>
    %561 = vector.shape_cast %155 : vector<1x1xf32> to vector<1x1x1xf32>
    %562 = vector.broadcast %561 : vector<1x1x1xf32> to vector<6x16x16xf32>
    %563 = arith.mulf %562, %560 : vector<6x16x16xf32>
    %564 = arith.addf %555, %563 : vector<6x16x16xf32>
    %565 = vector.shape_cast %315 : vector<1x1xf32> to vector<1x1x1xf32>
    %566 = vector.broadcast %565 : vector<1x1x1xf32> to vector<6x16x16xf32>
    %567 = arith.mulf %566, %560 : vector<6x16x16xf32>
    %568 = arith.addf %559, %567 : vector<6x16x16xf32>
    %569 = vector.extract_strided_slice %541 {offsets = [0, 0, 4], sizes = [6, 16, 16], strides = [1, 1, 1]} : vector<6x16x22xf32> to vector<6x16x16xf32>
    %570 = vector.shape_cast %160 : vector<1x1xf32> to vector<1x1x1xf32>
    %571 = vector.broadcast %570 : vector<1x1x1xf32> to vector<6x16x16xf32>
    %572 = arith.mulf %571, %569 : vector<6x16x16xf32>
    %573 = arith.addf %564, %572 : vector<6x16x16xf32>
    %574 = vector.shape_cast %320 : vector<1x1xf32> to vector<1x1x1xf32>
    %575 = vector.broadcast %574 : vector<1x1x1xf32> to vector<6x16x16xf32>
    %576 = arith.mulf %575, %569 : vector<6x16x16xf32>
    %577 = arith.addf %568, %576 : vector<6x16x16xf32>
    %578 = vector.extract_strided_slice %541 {offsets = [0, 0, 5], sizes = [6, 16, 16], strides = [1, 1, 1]} : vector<6x16x22xf32> to vector<6x16x16xf32>
    %579 = vector.shape_cast %165 : vector<1x1xf32> to vector<1x1x1xf32>
    %580 = vector.broadcast %579 : vector<1x1x1xf32> to vector<6x16x16xf32>
    %581 = arith.mulf %580, %578 : vector<6x16x16xf32>
    %582 = arith.addf %573, %581 : vector<6x16x16xf32>
    %583 = vector.shape_cast %325 : vector<1x1xf32> to vector<1x1x1xf32>
    %584 = vector.broadcast %583 : vector<1x1x1xf32> to vector<6x16x16xf32>
    %585 = arith.mulf %584, %578 : vector<6x16x16xf32>
    %586 = arith.addf %577, %585 : vector<6x16x16xf32>
    %c0_139 = arith.constant 0 : index
    %c6 = arith.constant 6 : index
    %c0_140 = arith.constant 0 : index
    %587 = vector.load %arg1[%c0_139, %c6, %c0_140] : memref<6x22x22xf32, #tpu.memory_space<vmem>>, vector<6x16x22xf32>
    %588 = vector.extract_strided_slice %587 {offsets = [0, 0, 3], sizes = [6, 16, 16], strides = [1, 1, 1]} : vector<6x16x22xf32> to vector<6x16x16xf32>
    %589 = vector.shape_cast %170 : vector<1x1xf32> to vector<1x1x1xf32>
    %590 = vector.broadcast %589 : vector<1x1x1xf32> to vector<6x16x16xf32>
    %591 = arith.mulf %590, %588 : vector<6x16x16xf32>
    %592 = arith.addf %582, %591 : vector<6x16x16xf32>
    %593 = vector.shape_cast %330 : vector<1x1xf32> to vector<1x1x1xf32>
    %594 = vector.broadcast %593 : vector<1x1x1xf32> to vector<6x16x16xf32>
    %595 = arith.mulf %594, %588 : vector<6x16x16xf32>
    %596 = arith.addf %586, %595 : vector<6x16x16xf32>
    %c0_141 = arith.constant 0 : index
    %c0_142 = arith.constant 0 : index
    %c0_143 = arith.constant 0 : index
    %c0_144 = arith.constant 0 : index
    %597 = vector.load %arg2[%c0_141, %c0_142, %c0_143, %c0_144] : memref<2x6x16x16xf32, #tpu.memory_space<vmem>>, vector<1x6x16x16xf32>
    %598 = vector.shape_cast %597 : vector<1x6x16x16xf32> to vector<6x16x16xf32>
    %599 = vector.shape_cast %592 : vector<6x16x16xf32> to vector<1x6x16x16xf32>
    tpu.vector_store %arg2[%c0_141, %c0_142, %c0_143, %c0_144], %599 {strides = array<i32>} : memref<2x6x16x16xf32, #tpu.memory_space<vmem>>, vector<1x6x16x16xf32>,
    %c1_145 = arith.constant 1 : index
    %c0_146 = arith.constant 0 : index
    %c0_147 = arith.constant 0 : index
    %c0_148 = arith.constant 0 : index
    %600 = vector.load %arg2[%c1_145, %c0_146, %c0_147, %c0_148] : memref<2x6x16x16xf32, #tpu.memory_space<vmem>>, vector<1x6x16x16xf32>
    %601 = vector.shape_cast %600 : vector<1x6x16x16xf32> to vector<6x16x16xf32>
    %602 = vector.shape_cast %596 : vector<6x16x16xf32> to vector<1x6x16x16xf32>
    tpu.vector_store %arg2[%c1_145, %c0_146, %c0_147, %c0_148], %602 {strides = array<i32>} : memref<2x6x16x16xf32, #tpu.memory_space<vmem>>, vector<1x6x16x16xf32>,
    return
  }
}

</mosaic_0001>

<llo_original>
// kernel: main_model_forward.1
$region0: #{main_model_forward.1}
  #allocation0 [shape = 'u32[]', space=smem, size = 0x4, offset = 0x4, fixed_abs, tag = 'smem constant byte address 0x4 - core index']
  #allocation1 [shape = 'u32[144,128]{1,0:T(1,128)}', space=vmem, size = 0x12000, scoped, tag = 'internal scratch']
  %s0 = inlined_call_operand.vmem [shape: f32[8,128], index: 0, kind: input, shape index: {}]
  %s1 = inlined_call_operand.vmem [shape: f32[6,22,22], index: 1, kind: input, shape index: {}]
  %s2 = inlined_call_operand.hbm [shape: f32[2,6,16,16], index: 2, kind: output, shape index: {}]
  %s3 = sld [smem:[#allocation0]]
  $region18: #{main_model_forward.1} parent=0
    _
  %s5 = ssub.s32 1, %s3
  %s6 = scalar_select 0, %s5, %s3
  $region1: #{main_model_forward.1} parent=0
    #allocation2 [shape = 'u8[98304]{0}', space=vmem, size = 0x18000, scoped, tag = 'output window, operand 0, single buffered']
    #allocation3 [shape = 's32[1]{0}', space=sflag, size = 0x4, scoped, tag = 'scoped memory for main_model_forward.1']
    %7 = vsyncpa [#allocation3], 0
    // Predicated region
    $region2: #{main_model_forward.1} parent=1 // pred_check
      _
    $region3: #{main_model_forward.1} parent=1 // pred_check_branch
      %9 = sbr.rel (0) target = $region5
    $region4: #{main_model_forward.1} parent=1 // pred_region
      _
    $region5: #{main_model_forward.1} parent=1 // pred_fallthru
      _
    // Predicated region
    $region6: #{main_model_forward.1} parent=1 // pred_check
      _
    $region7: #{main_model_forward.1} parent=1 // pred_check_branch
      %11 = sbr.rel (0) target = $region9
    $region8: #{main_model_forward.1} parent=1 // pred_region
      _
    $region9: #{main_model_forward.1} parent=1 // pred_fallthru
      _
    %v12 = vld [vmem:[%s0] sm:$0xff]
    %14 = vset.pattern.permute.xlu0 16
    %15 = vperm.xlu0 %14, %v12
    %v16 = vpop.permute.xlu0 %15
    %v18 = vmul.f32 %v16, %v12
    %vm19 = vcmask 130048
    %v20 = vsel %vm19, %v18, 0.0
    %v21 = vrot.slane %v20, 4
    %v22 = vadd.f32 %v20, %v21
    %v23 = vrot.slane %v22, 2
    %v24 = vadd.f32 %v22, %v23
    %v25 = vrot.slane %v24, 1
    %v26 = vadd.f32 %v24, %v25
    %27 = vrot.lane.b32.xlu0 %v12, 96
    %v28 = vpop.permute.xlu0 %27
    %v30 = vadd.f32 %v26, %v28
    %v31 = vmax.f32 %v30, 0.0
    %v33 = vrot.slane %v31, 6
    %34 = vrot.lane.b32.xlu0 %v33, 32
    %v35 = vpop.permute.xlu0 %34
    %v37 = vmul.f32 %v12, %v35
    %39 = vrot.lane.b32.xlu0 %v37, 96
    %v40 = vpop.permute.xlu0 %39
    %vm42 = vcmask 124930
    %v43 = vsel %vm42, %v40, 0.0
    %44 = vadd.xlane.f32.xlu0 %v43
    %v45 = vpop.xlane.xlu0 %44
    %v46 = vadd.f32 %v45, %v12
    %v47 = vxor.u32 %v46, 2147483648
    %v48 = vmul.f32 %v47, 1.442695
    %v49 = vpow.pop %v48
    %v50 = vadd.f32 %v49, 1.0
    %v51 = vrcp.pop %v50
    %v52 = vmul.f32 1.0, %v51
    %v53 = vmul.f32 %v52, 3.0
    %v54 = vadd.f32 %v53, 1.0
    %v55 = vmul.f32 %v54, 3.1415927
    %v56 = vand.u32 2147483647, %v55
    %vm57 = vcmp.le.f32.partialorder %v56, 0.7853982
    %vm58 = vcmp.lt.s32.totalorder %v55, 0
    %v59 = vand.u32 %v55, 2139095040
    %v60 = vshrl.u32 %v59, 23
    %v61 = vsub.s32 %v60, 127
    %v62 = vand.u32 2147483647, %v55
    %v63 = vand.u32 %v62, 8388607
    %v64 = vor.u32 %v63, 8388608
    %v65 = vsub.s32 0, %v64
    %v66 = vadd.s32 %v61, 1
    %vm67 = vcmp.gt.s32.totalorder %v66, 0
    %v68 = vsel %vm67, %v66, 0
    %v69 = vshrl.u32 %v68, 5
    %v70 = vand.u32 %v68, 31
    %v71 = vsub.s32 32, %v70
    %v72 = vshrl.u32 683565275, %v71
    %v73 = vshll.u32 683565275, %v70
    %v74 = vshrl.u32 2475754826, %v71
    %v75 = vor.u32 %v73, %v74
    %v76 = vshll.u32 2475754826, %v70
    %v77 = vshrl.u32 2131351028, %v71
    %v78 = vor.u32 %v76, %v77
    %v79 = vshll.u32 2131351028, %v70
    %v80 = vshrl.u32 2102212464, %v71
    %v81 = vor.u32 %v79, %v80
    %v82 = vshll.u32 2102212464, %v70
    %v83 = vshrl.u32 920167782, %v71
    %v84 = vor.u32 %v82, %v83
    %v85 = vshll.u32 920167782, %v70
    %v86 = vshrl.u32 1326507024, %v71
    %v87 = vor.u32 %v85, %v86
    %vm88 = vcmp.lt.s32.totalorder %v69, 1
    %vm89 = vcmp.lt.s32.totalorder %v69, 2
    %vm90 = vcmp.lt.s32.totalorder %v69, 3
    %vm91 = vcmp.lt.s32.totalorder %v69, 4
    %v92 = vsel %vm88, %v72, %v75
    %v93 = vsel %vm91, %v81, 2102212464
    %v94 = vsel %vm90, %v78, %v93
    %v95 = vsel %vm89, %v92, %v94
    %v96 = vsel %vm88, %v75, %v78
    %v97 = vsel %vm91, %v84, 920167782
    %v98 = vsel %vm90, %v81, %v97
    %v99 = vsel %vm89, %v96, %v98
    %v100 = vsel %vm88, %v78, %v81
    %v101 = vsel %vm91, %v87, 1326507024
    %v102 = vsel %vm90, %v84, %v101
    %v103 = vsel %vm89, %v100, %v102
    %v104 = vshll.u32 %v64, 8
    %v105 = vmul.u32.u64.compose %v104, %v103
    %v106 = vextract.low.u32 %v105
    %v107 = vextract.high.u32 %v105
    %v108 = vmul.u32.u64.compose %v104, %v99
    %v109 = vextract.low.u32 %v108
    %v110 = vextract.high.u32 %v108
    %v111 = vmul.u32 %v104, %v95
    %v112 = vadd.s32 %v107, %v109
    %vm113 = vc.u32 %v107, %v109
    %v114 = vadd.s32 %v110, 1
    %v115 = vsel %vm113, %v114, %v110
    %v116 = vadd.s32 %v111, %v115
    %v117 = vadd.s32 %v116, 536870912
    %v118 = vshrl.u32 %v117, 30
    %v119 = vshll.u32 %v118, 30
    %v120 = vsub.s32 %v116, %v119
    %vm121 = vcmp.lt.s32.totalorder %v120, 0
    %v122 = vsub.s32 0, %v120
    %v123 = vsel %vm121, %v122, %v120
    %v124 = vclz %v123
    %v125 = vsub.s32 %v124, 2
    %vm126 = vcmp.gt.s32.totalorder 0, %v125
    %v127 = vsel %vm126, 0, %v125
    %v128 = vsub.s32 32, %v127
    %v129 = vshll.u32 %v120, %v127
    %v130 = vshrl.u32 %v112, %v128
    %v131 = vor.u32 %v129, %v130
    %v132 = vsub.s32 4294967266, %v127
    %v133 = vadd.s32 %v132, 127
    %v134 = vshll.u32 %v133, 23
    %v135 = vor.u32 4788187, %v134
    %v136 = vand.u32 2147483647, %v135
    %v138 = vcvt.s32.f32 %v131
    %v139 = vmul.f32 %v138, %v136
    %v140 = vxor.u32 %v139, 2147483648
    %v141 = vsel %vm58, %v140, %v139
    %v142 = vsub.s32 4, %v118
    %v143 = vsel %vm58, %v142, %v118
    %v144 = vsel %vm57, %v55, %v141
    %v145 = vsel %vm57, 0, %v143
    %v146 = vcosq.f32.pop %v144
    %v147 = vsinq.f32.pop %v144
    %vm148 = vweird.f32 %v55
    %v149 = vand.u32 %v145, 3
    %vm150 = vcmp.lt.s32.totalorder %v149, 2
    %vm151 = vcmp.eq.s32.totalorder %v149, 0
    %v152 = vxor.u32 %v147, 2147483648
    %v153 = vsel %vm151, %v146, %v152
    %vm154 = vcmp.eq.s32.totalorder %v149, 2
    %v155 = vxor.u32 %v146, 2147483648
    %v156 = vsel %vm154, %v155, %v147
    %v157 = vsel %vm150, %v153, %v156
    %v158 = vsel %vm148, nan, %v157
    %v159 = vand.u32 2147483647, %v158
    %v160 = vmul.f32 %v54, 2.792527
    %v161 = vand.u32 2147483647, %v160
    %vm162 = vcmp.le.f32.partialorder %v161, 0.7853982
    %vm163 = vcmp.lt.s32.totalorder %v160, 0
    %v164 = vand.u32 %v160, 2139095040
    %v165 = vshrl.u32 %v164, 23
    %v166 = vsub.s32 %v165, 127
    %v167 = vand.u32 2147483647, %v160
    %v168 = vand.u32 %v167, 8388607
    %v169 = vor.u32 %v168, 8388608
    %v170 = vsub.s32 0, %v169
    %v171 = vadd.s32 %v166, 1
    %vm172 = vcmp.gt.s32.totalorder %v171, 0
    %v173 = vsel %vm172, %v171, 0
    %v174 = vshrl.u32 %v173, 5
    %v175 = vand.u32 %v173, 31
    %v176 = vsub.s32 32, %v175
    %v177 = vshrl.u32 683565275, %v176
    %v178 = vshll.u32 683565275, %v175
    %v179 = vshrl.u32 2475754826, %v176
    %v180 = vor.u32 %v178, %v179
    %v181 = vshll.u32 2475754826, %v175
    %v182 = vshrl.u32 2131351028, %v176
    %v183 = vor.u32 %v181, %v182
    %v184 = vshll.u32 2131351028, %v175
    %v185 = vshrl.u32 2102212464, %v176
    %v186 = vor.u32 %v184, %v185
    %v187 = vshll.u32 2102212464, %v175
    %v188 = vshrl.u32 920167782, %v176
    %v189 = vor.u32 %v187, %v188
    %v190 = vshll.u32 920167782, %v175
    %v191 = vshrl.u32 1326507024, %v176
    %v192 = vor.u32 %v190, %v191
    %vm193 = vcmp.lt.s32.totalorder %v174, 1
    %vm194 = vcmp.lt.s32.totalorder %v174, 2
    %vm195 = vcmp.lt.s32.totalorder %v174, 3
    %vm196 = vcmp.lt.s32.totalorder %v174, 4
    %v197 = vsel %vm193, %v177, %v180
    %v198 = vsel %vm196, %v186, 2102212464
    %v199 = vsel %vm195, %v183, %v198
    %v200 = vsel %vm194, %v197, %v199
    %v201 = vsel %vm193, %v180, %v183
    %v202 = vsel %vm196, %v189, 920167782
    %v203 = vsel %vm195, %v186, %v202
    %v204 = vsel %vm194, %v201, %v203
    %v205 = vsel %vm193, %v183, %v186
    %v206 = vsel %vm196, %v192, 1326507024
    %v207 = vsel %vm195, %v189, %v206
    %v208 = vsel %vm194, %v205, %v207
    %v209 = vshll.u32 %v169, 8
    %v210 = vmul.u32.u64.compose %v209, %v208
    %v211 = vextract.low.u32 %v210
    %v212 = vextract.high.u32 %v210
    %v213 = vmul.u32.u64.compose %v209, %v204
    %v214 = vextract.low.u32 %v213
    %v215 = vextract.high.u32 %v213
    %v216 = vmul.u32 %v209, %v200
    %v217 = vadd.s32 %v212, %v214
    %vm218 = vc.u32 %v212, %v214
    %v219 = vadd.s32 %v215, 1
    %v220 = vsel %vm218, %v219, %v215
    %v221 = vadd.s32 %v216, %v220
    %v222 = vadd.s32 %v221, 536870912
    %v223 = vshrl.u32 %v222, 30
    %v224 = vshll.u32 %v223, 30
    %v225 = vsub.s32 %v221, %v224
    %vm226 = vcmp.lt.s32.totalorder %v225, 0
    %v227 = vsub.s32 0, %v225
    %v228 = vsel %vm226, %v227, %v225
    %v229 = vclz %v228
    %v230 = vsub.s32 %v229, 2
    %vm231 = vcmp.gt.s32.totalorder 0, %v230
    %v232 = vsel %vm231, 0, %v230
    %v233 = vsub.s32 32, %v232
    %v234 = vshll.u32 %v225, %v232
    %v235 = vshrl.u32 %v217, %v233
    %v236 = vor.u32 %v234, %v235
    %v237 = vsub.s32 4294967266, %v232
    %v238 = vadd.s32 %v237, 127
    %v239 = vshll.u32 %v238, 23
    %v240 = vor.u32 4788187, %v239
    %v241 = vand.u32 2147483647, %v240
    %v243 = vcvt.s32.f32 %v236
    %v244 = vmul.f32 %v243, %v241
    %v245 = vxor.u32 %v244, 2147483648
    %v246 = vsel %vm163, %v245, %v244
    %v247 = vsub.s32 4, %v223
    %v248 = vsel %vm163, %v247, %v223
    %v249 = vsel %vm162, %v160, %v246
    %v250 = vsel %vm162, 0, %v248
    %v251 = vcosq.f32.pop %v249
    %v252 = vsinq.f32.pop %v249
    %vm253 = vweird.f32 %v160
    %v254 = vand.u32 %v250, 3
    %vm255 = vcmp.lt.s32.totalorder %v254, 2
    %vm256 = vcmp.eq.s32.totalorder %v254, 0
    %v257 = vxor.u32 %v252, 2147483648
    %v258 = vsel %vm256, %v251, %v257
    %vm259 = vcmp.eq.s32.totalorder %v254, 2
    %v260 = vxor.u32 %v251, 2147483648
    %v261 = vsel %vm259, %v260, %v252
    %v262 = vsel %vm255, %v258, %v261
    %v263 = vsel %vm253, nan, %v262
    %v264 = vand.u32 2147483647, %v263
    %v265 = vmul.f32 %v54, 1.7453294
    %v266 = vand.u32 2147483647, %v265
    %vm267 = vcmp.le.f32.partialorder %v266, 0.7853982
    %vm268 = vcmp.lt.s32.totalorder %v265, 0
    %v269 = vand.u32 %v265, 2139095040
    %v270 = vshrl.u32 %v269, 23
    %v271 = vsub.s32 %v270, 127
    %v272 = vand.u32 2147483647, %v265
    %v273 = vand.u32 %v272, 8388607
    %v274 = vor.u32 %v273, 8388608
    %v275 = vsub.s32 0, %v274
    %v276 = vadd.s32 %v271, 1
    %vm277 = vcmp.gt.s32.totalorder %v276, 0
    %v278 = vsel %vm277, %v276, 0
    %v279 = vshrl.u32 %v278, 5
    %v280 = vand.u32 %v278, 31
    %v281 = vsub.s32 32, %v280
    %v282 = vshrl.u32 683565275, %v281
    %v283 = vshll.u32 683565275, %v280
    %v284 = vshrl.u32 2475754826, %v281
    %v285 = vor.u32 %v283, %v284
    %v286 = vshll.u32 2475754826, %v280
    %v287 = vshrl.u32 2131351028, %v281
    %v288 = vor.u32 %v286, %v287
    %v289 = vshll.u32 2131351028, %v280
    %v290 = vshrl.u32 2102212464, %v281
    %v291 = vor.u32 %v289, %v290
    %v292 = vshll.u32 2102212464, %v280
    %v293 = vshrl.u32 920167782, %v281
    %v294 = vor.u32 %v292, %v293
    %v295 = vshll.u32 920167782, %v280
    %v296 = vshrl.u32 1326507024, %v281
    %v297 = vor.u32 %v295, %v296
    %vm298 = vcmp.lt.s32.totalorder %v279, 1
    %vm299 = vcmp.lt.s32.totalorder %v279, 2
    %vm300 = vcmp.lt.s32.totalorder %v279, 3
    %vm301 = vcmp.lt.s32.totalorder %v279, 4
    %v302 = vsel %vm298, %v282, %v285
    %v303 = vsel %vm301, %v291, 2102212464
    %v304 = vsel %vm300, %v288, %v303
    %v305 = vsel %vm299, %v302, %v304
    %v306 = vsel %vm298, %v285, %v288
    %v307 = vsel %vm301, %v294, 920167782
    %v308 = vsel %vm300, %v291, %v307
    %v309 = vsel %vm299, %v306, %v308
    %v310 = vsel %vm298, %v288, %v291
    %v311 = vsel %vm301, %v297, 1326507024
    %v312 = vsel %vm300, %v294, %v311
    %v313 = vsel %vm299, %v310, %v312
    %v314 = vshll.u32 %v274, 8
    %v315 = vmul.u32.u64.compose %v314, %v313
    %v316 = vextract.low.u32 %v315
    %v317 = vextract.high.u32 %v315
    %v318 = vmul.u32.u64.compose %v314, %v309
    %v319 = vextract.low.u32 %v318
    %v320 = vextract.high.u32 %v318
    %v321 = vmul.u32 %v314, %v305
    %v322 = vadd.s32 %v317, %v319
    %vm323 = vc.u32 %v317, %v319
    %v324 = vadd.s32 %v320, 1
    %v325 = vsel %vm323, %v324, %v320
    %v326 = vadd.s32 %v321, %v325
    %v327 = vadd.s32 %v326, 536870912
    %v328 = vshrl.u32 %v327, 30
    %v329 = vshll.u32 %v328, 30
    %v330 = vsub.s32 %v326, %v329
    %vm331 = vcmp.lt.s32.totalorder %v330, 0
    %v332 = vsub.s32 0, %v330
    %v333 = vsel %vm331, %v332, %v330
    %v334 = vclz %v333
    %v335 = vsub.s32 %v334, 2
    %vm336 = vcmp.gt.s32.totalorder 0, %v335
    %v337 = vsel %vm336, 0, %v335
    %v338 = vsub.s32 32, %v337
    %v339 = vshll.u32 %v330, %v337
    %v340 = vshrl.u32 %v322, %v338
    %v341 = vor.u32 %v339, %v340
    %v342 = vsub.s32 4294967266, %v337
    %v343 = vadd.s32 %v342, 127
    %v344 = vshll.u32 %v343, 23
    %v345 = vor.u32 4788187, %v344
    %v346 = vand.u32 2147483647, %v345
    %v348 = vcvt.s32.f32 %v341
    %v349 = vmul.f32 %v348, %v346
    %v350 = vxor.u32 %v349, 2147483648
    %v351 = vsel %vm268, %v350, %v349
    %v352 = vsub.s32 4, %v328
    %v353 = vsel %vm268, %v352, %v328
    %v354 = vsel %vm267, %v265, %v351
    %v355 = vsel %vm267, 0, %v353
    %v356 = vcosq.f32.pop %v354
    %v357 = vsinq.f32.pop %v354
    %vm358 = vweird.f32 %v265
    %v359 = vand.u32 %v355, 3
    %vm360 = vcmp.lt.s32.totalorder %v359, 2
    %vm361 = vcmp.eq.s32.totalorder %v359, 0
    %v362 = vxor.u32 %v357, 2147483648
    %v363 = vsel %vm361, %v356, %v362
    %vm364 = vcmp.eq.s32.totalorder %v359, 2
    %v365 = vxor.u32 %v356, 2147483648
    %v366 = vsel %vm364, %v365, %v357
    %v367 = vsel %vm360, %v363, %v366
    %v368 = vsel %vm358, nan, %v367
    %v369 = vand.u32 2147483647, %v368
    %v370 = vmul.f32 %v54, 1.3962635
    %v371 = vand.u32 2147483647, %v370
    %vm372 = vcmp.le.f32.partialorder %v371, 0.7853982
    %vm373 = vcmp.lt.s32.totalorder %v370, 0
    %v374 = vand.u32 %v370, 2139095040
    %v375 = vshrl.u32 %v374, 23
    %v376 = vsub.s32 %v375, 127
    %v377 = vand.u32 2147483647, %v370
    %v378 = vand.u32 %v377, 8388607
    %v379 = vor.u32 %v378, 8388608
    %v380 = vsub.s32 0, %v379
    %v381 = vadd.s32 %v376, 1
    %vm382 = vcmp.gt.s32.totalorder %v381, 0
    %v383 = vsel %vm382, %v381, 0
    %v384 = vshrl.u32 %v383, 5
    %v385 = vand.u32 %v383, 31
    %v386 = vsub.s32 32, %v385
    %v387 = vshrl.u32 683565275, %v386
    %v388 = vshll.u32 683565275, %v385
    %v389 = vshrl.u32 2475754826, %v386
    %v390 = vor.u32 %v388, %v389
    %v391 = vshll.u32 2475754826, %v385
    %v392 = vshrl.u32 2131351028, %v386
    %v393 = vor.u32 %v391, %v392
    %v394 = vshll.u32 2131351028, %v385
    %v395 = vshrl.u32 2102212464, %v386
    %v396 = vor.u32 %v394, %v395
    %v397 = vshll.u32 2102212464, %v385
    %v398 = vshrl.u32 920167782, %v386
    %v399 = vor.u32 %v397, %v398
    %v400 = vshll.u32 920167782, %v385
    %v401 = vshrl.u32 1326507024, %v386
    %v402 = vor.u32 %v400, %v401
    %vm403 = vcmp.lt.s32.totalorder %v384, 1
    %vm404 = vcmp.lt.s32.totalorder %v384, 2
    %vm405 = vcmp.lt.s32.totalorder %v384, 3
    %vm406 = vcmp.lt.s32.totalorder %v384, 4
    %v407 = vsel %vm403, %v387, %v390
    %v408 = vsel %vm406, %v396, 2102212464
    %v409 = vsel %vm405, %v393, %v408
    %v410 = vsel %vm404, %v407, %v409
    %v411 = vsel %vm403, %v390, %v393
    %v412 = vsel %vm406, %v399, 920167782
    %v413 = vsel %vm405, %v396, %v412
    %v414 = vsel %vm404, %v411, %v413
    %v415 = vsel %vm403, %v393, %v396
    %v416 = vsel %vm406, %v402, 1326507024
    %v417 = vsel %vm405, %v399, %v416
    %v418 = vsel %vm404, %v415, %v417
    %v419 = vshll.u32 %v379, 8
    %v420 = vmul.u32.u64.compose %v419, %v418
    %v421 = vextract.low.u32 %v420
    %v422 = vextract.high.u32 %v420
    %v423 = vmul.u32.u64.compose %v419, %v414
    %v424 = vextract.low.u32 %v423
    %v425 = vextract.high.u32 %v423
    %v426 = vmul.u32 %v419, %v410
    %v427 = vadd.s32 %v422, %v424
    %vm428 = vc.u32 %v422, %v424
    %v429 = vadd.s32 %v425, 1
    %v430 = vsel %vm428, %v429, %v425
    %v431 = vadd.s32 %v426, %v430
    %v432 = vadd.s32 %v431, 536870912
    %v433 = vshrl.u32 %v432, 30
    %v434 = vshll.u32 %v433, 30
    %v435 = vsub.s32 %v431, %v434
    %vm436 = vcmp.lt.s32.totalorder %v435, 0
    %v437 = vsub.s32 0, %v435
    %v438 = vsel %vm436, %v437, %v435
    %v439 = vclz %v438
    %v440 = vsub.s32 %v439, 2
    %vm441 = vcmp.gt.s32.totalorder 0, %v440
    %v442 = vsel %vm441, 0, %v440
    %v443 = vsub.s32 32, %v442
    %v444 = vshll.u32 %v435, %v442
    %v445 = vshrl.u32 %v427, %v443
    %v446 = vor.u32 %v444, %v445
    %v447 = vsub.s32 4294967266, %v442
    %v448 = vadd.s32 %v447, 127
    %v449 = vshll.u32 %v448, 23
    %v450 = vor.u32 4788187, %v449
    %v451 = vand.u32 2147483647, %v450
    %v453 = vcvt.s32.f32 %v446
    %v454 = vmul.f32 %v453, %v451
    %v455 = vxor.u32 %v454, 2147483648
    %v456 = vsel %vm373, %v455, %v454
    %v457 = vsub.s32 4, %v433
    %v458 = vsel %vm373, %v457, %v433
    %v459 = vsel %vm372, %v370, %v456
    %v460 = vsel %vm372, 0, %v458
    %v461 = vcosq.f32.pop %v459
    %v462 = vsinq.f32.pop %v459
    %vm463 = vweird.f32 %v370
    %v464 = vand.u32 %v460, 3
    %vm465 = vcmp.lt.s32.totalorder %v464, 2
    %vm466 = vcmp.eq.s32.totalorder %v464, 0
    %v467 = vxor.u32 %v462, 2147483648
    %v468 = vsel %vm466, %v461, %v467
    %vm469 = vcmp.eq.s32.totalorder %v464, 2
    %v470 = vxor.u32 %v461, 2147483648
    %v471 = vsel %vm469, %v470, %v462
    %v472 = vsel %vm465, %v468, %v471
    %v473 = vsel %vm463, nan, %v472
    %v474 = vand.u32 2147483647, %v473
    %v475 = vmul.f32 %v54, 0.69813174
    %v476 = vand.u32 2147483647, %v475
    %vm477 = vcmp.le.f32.partialorder %v476, 0.7853982
    %vm478 = vcmp.lt.s32.totalorder %v475, 0
    %v479 = vand.u32 %v475, 2139095040
    %v480 = vshrl.u32 %v479, 23
    %v481 = vsub.s32 %v480, 127
    %v482 = vand.u32 2147483647, %v475
    %v483 = vand.u32 %v482, 8388607
    %v484 = vor.u32 %v483, 8388608
    %v485 = vsub.s32 0, %v484
    %v486 = vadd.s32 %v481, 1
    %vm487 = vcmp.gt.s32.totalorder %v486, 0
    %v488 = vsel %vm487, %v486, 0
    %v489 = vshrl.u32 %v488, 5
    %v490 = vand.u32 %v488, 31
    %v491 = vsub.s32 32, %v490
    %v492 = vshrl.u32 683565275, %v491
    %v493 = vshll.u32 683565275, %v490
    %v494 = vshrl.u32 2475754826, %v491
    %v495 = vor.u32 %v493, %v494
    %v496 = vshll.u32 2475754826, %v490
    %v497 = vshrl.u32 2131351028, %v491
    %v498 = vor.u32 %v496, %v497
    %v499 = vshll.u32 2131351028, %v490
    %v500 = vshrl.u32 2102212464, %v491
    %v501 = vor.u32 %v499, %v500
    %v502 = vshll.u32 2102212464, %v490
    %v503 = vshrl.u32 920167782, %v491
    %v504 = vor.u32 %v502, %v503
    %v505 = vshll.u32 920167782, %v490
    %v506 = vshrl.u32 1326507024, %v491
    %v507 = vor.u32 %v505, %v506
    %vm508 = vcmp.lt.s32.totalorder %v489, 1
    %vm509 = vcmp.lt.s32.totalorder %v489, 2
    %vm510 = vcmp.lt.s32.totalorder %v489, 3
    %vm511 = vcmp.lt.s32.totalorder %v489, 4
    %v512 = vsel %vm508, %v492, %v495
    %v513 = vsel %vm511, %v501, 2102212464
    %v514 = vsel %vm510, %v498, %v513
    %v515 = vsel %vm509, %v512, %v514
    %v516 = vsel %vm508, %v495, %v498
    %v517 = vsel %vm511, %v504, 920167782
    %v518 = vsel %vm510, %v501, %v517
    %v519 = vsel %vm509, %v516, %v518
    %v520 = vsel %vm508, %v498, %v501
    %v521 = vsel %vm511, %v507, 1326507024
    %v522 = vsel %vm510, %v504, %v521
    %v523 = vsel %vm509, %v520, %v522
    %v524 = vshll.u32 %v484, 8
    %v525 = vmul.u32.u64.compose %v524, %v523
    %v526 = vextract.low.u32 %v525
    %v527 = vextract.high.u32 %v525
    %v528 = vmul.u32.u64.compose %v524, %v519
    %v529 = vextract.low.u32 %v528
    %v530 = vextract.high.u32 %v528
    %v531 = vmul.u32 %v524, %v515
    %v532 = vadd.s32 %v527, %v529
    %vm533 = vc.u32 %v527, %v529
    %v534 = vadd.s32 %v530, 1
    %v535 = vsel %vm533, %v534, %v530
    %v536 = vadd.s32 %v531, %v535
    %v537 = vadd.s32 %v536, 536870912
    %v538 = vshrl.u32 %v537, 30
    %v539 = vshll.u32 %v538, 30
    %v540 = vsub.s32 %v536, %v539
    %vm541 = vcmp.lt.s32.totalorder %v540, 0
    %v542 = vsub.s32 0, %v540
    %v543 = vsel %vm541, %v542, %v540
    %v544 = vclz %v543
    %v545 = vsub.s32 %v544, 2
    %vm546 = vcmp.gt.s32.totalorder 0, %v545
    %v547 = vsel %vm546, 0, %v545
    %v548 = vsub.s32 32, %v547
    %v549 = vshll.u32 %v540, %v547
    %v550 = vshrl.u32 %v532, %v548
    %v551 = vor.u32 %v549, %v550
    %v552 = vsub.s32 4294967266, %v547
    %v553 = vadd.s32 %v552, 127
    %v554 = vshll.u32 %v553, 23
    %v555 = vor.u32 4788187, %v554
    %v556 = vand.u32 2147483647, %v555
    %v558 = vcvt.s32.f32 %v551
    %v559 = vmul.f32 %v558, %v556
    %v560 = vxor.u32 %v559, 2147483648
    %v561 = vsel %vm478, %v560, %v559
    %v562 = vsub.s32 4, %v538
    %v563 = vsel %vm478, %v562, %v538
    %v564 = vsel %vm477, %v475, %v561
    %v565 = vsel %vm477, 0, %v563
    %v566 = vcosq.f32.pop %v564
    %v567 = vsinq.f32.pop %v564
    %vm568 = vweird.f32 %v475
    %v569 = vand.u32 %v565, 3
    %vm570 = vcmp.lt.s32.totalorder %v569, 2
    %vm571 = vcmp.eq.s32.totalorder %v569, 0
    %v572 = vxor.u32 %v567, 2147483648
    %v573 = vsel %vm571, %v566, %v572
    %vm574 = vcmp.eq.s32.totalorder %v569, 2
    %v575 = vxor.u32 %v566, 2147483648
    %v576 = vsel %vm574, %v575, %v567
    %v577 = vsel %vm570, %v573, %v576
    %v578 = vsel %vm568, nan, %v577
    %v579 = vand.u32 2147483647, %v578
    %v580 = vmul.f32 %v54, 0.34906587
    %v581 = vand.u32 2147483647, %v580
    %vm582 = vcmp.le.f32.partialorder %v581, 0.7853982
    %vm583 = vcmp.lt.s32.totalorder %v580, 0
    %v584 = vand.u32 %v580, 2139095040
    %v585 = vshrl.u32 %v584, 23
    %v586 = vsub.s32 %v585, 127
    %v587 = vand.u32 2147483647, %v580
    %v588 = vand.u32 %v587, 8388607
    %v589 = vor.u32 %v588, 8388608
    %v590 = vsub.s32 0, %v589
    %v591 = vadd.s32 %v586, 1
    %vm592 = vcmp.gt.s32.totalorder %v591, 0
    %v593 = vsel %vm592, %v591, 0
    %v594 = vshrl.u32 %v593, 5
    %v595 = vand.u32 %v593, 31
    %v596 = vsub.s32 32, %v595
    %v597 = vshrl.u32 683565275, %v596
    %v598 = vshll.u32 683565275, %v595
    %v599 = vshrl.u32 2475754826, %v596
    %v600 = vor.u32 %v598, %v599
    %v601 = vshll.u32 2475754826, %v595
    %v602 = vshrl.u32 2131351028, %v596
    %v603 = vor.u32 %v601, %v602
    %v604 = vshll.u32 2131351028, %v595
    %v605 = vshrl.u32 2102212464, %v596
    %v606 = vor.u32 %v604, %v605
    %v607 = vshll.u32 2102212464, %v595
    %v608 = vshrl.u32 920167782, %v596
    %v609 = vor.u32 %v607, %v608
    %v610 = vshll.u32 920167782, %v595
    %v611 = vshrl.u32 1326507024, %v596
    %v612 = vor.u32 %v610, %v611
    %vm613 = vcmp.lt.s32.totalorder %v594, 1
    %vm614 = vcmp.lt.s32.totalorder %v594, 2
    %vm615 = vcmp.lt.s32.totalorder %v594, 3
    %vm616 = vcmp.lt.s32.totalorder %v594, 4
    %v617 = vsel %vm613, %v597, %v600
    %v618 = vsel %vm616, %v606, 2102212464
    %v619 = vsel %vm615, %v603, %v618
    %v620 = vsel %vm614, %v617, %v619
    %v621 = vsel %vm613, %v600, %v603
    %v622 = vsel %vm616, %v609, 920167782
    %v623 = vsel %vm615, %v606, %v622
    %v624 = vsel %vm614, %v621, %v623
    %v625 = vsel %vm613, %v603, %v606
    %v626 = vsel %vm616, %v612, 1326507024
    %v627 = vsel %vm615, %v609, %v626
    %v628 = vsel %vm614, %v625, %v627
    %v629 = vshll.u32 %v589, 8
    %v630 = vmul.u32.u64.compose %v629, %v628
    %v631 = vextract.low.u32 %v630
    %v632 = vextract.high.u32 %v630
    %v633 = vmul.u32.u64.compose %v629, %v624
    %v634 = vextract.low.u32 %v633
    %v635 = vextract.high.u32 %v633
    %v636 = vmul.u32 %v629, %v620
    %v637 = vadd.s32 %v632, %v634
    %vm638 = vc.u32 %v632, %v634
    %v639 = vadd.s32 %v635, 1
    %v640 = vsel %vm638, %v639, %v635
    %v641 = vadd.s32 %v636, %v640
    %v642 = vadd.s32 %v641, 536870912
    %v643 = vshrl.u32 %v642, 30
    %v644 = vshll.u32 %v643, 30
    %v645 = vsub.s32 %v641, %v644
    %vm646 = vcmp.lt.s32.totalorder %v645, 0
    %v647 = vsub.s32 0, %v645
    %v648 = vsel %vm646, %v647, %v645
    %v649 = vclz %v648
    %v650 = vsub.s32 %v649, 2
    %vm651 = vcmp.gt.s32.totalorder 0, %v650
    %v652 = vsel %vm651, 0, %v650
    %v653 = vsub.s32 32, %v652
    %v654 = vshll.u32 %v645, %v652
    %v655 = vshrl.u32 %v637, %v653
    %v656 = vor.u32 %v654, %v655
    %v657 = vsub.s32 4294967266, %v652
    %v658 = vadd.s32 %v657, 127
    %v659 = vshll.u32 %v658, 23
    %v660 = vor.u32 4788187, %v659
    %v661 = vand.u32 2147483647, %v660
    %v663 = vcvt.s32.f32 %v656
    %v664 = vmul.f32 %v663, %v661
    %v665 = vxor.u32 %v664, 2147483648
    %v666 = vsel %vm583, %v665, %v664
    %v667 = vsub.s32 4, %v643
    %v668 = vsel %vm583, %v667, %v643
    %v669 = vsel %vm582, %v580, %v666
    %v670 = vsel %vm582, 0, %v668
    %v671 = vcosq.f32.pop %v669
    %v672 = vsinq.f32.pop %v669
    %vm673 = vweird.f32 %v580
    %v674 = vand.u32 %v670, 3
    %vm675 = vcmp.lt.s32.totalorder %v674, 2
    %vm676 = vcmp.eq.s32.totalorder %v674, 0
    %v677 = vxor.u32 %v672, 2147483648
    %v678 = vsel %vm676, %v671, %v677
    %vm679 = vcmp.eq.s32.totalorder %v674, 2
    %v680 = vxor.u32 %v671, 2147483648
    %v681 = vsel %vm679, %v680, %v672
    %v682 = vsel %vm675, %v678, %v681
    %v683 = vsel %vm673, nan, %v682
    %v684 = vand.u32 2147483647, %v683
    %v685 = vmul.f32 %v54, 0.0
    %v686 = vand.u32 2147483647, %v685
    %vm687 = vcmp.le.f32.partialorder %v686, 0.7853982
    %vm688 = vcmp.lt.s32.totalorder %v685, 0
    %v689 = vand.u32 %v685, 2139095040
    %v690 = vshrl.u32 %v689, 23
    %v691 = vsub.s32 %v690, 127
    %v692 = vand.u32 2147483647, %v685
    %v693 = vand.u32 %v692, 8388607
    %v694 = vor.u32 %v693, 8388608
    %v695 = vsub.s32 0, %v694
    %v696 = vadd.s32 %v691, 1
    %vm697 = vcmp.gt.s32.totalorder %v696, 0
    %v698 = vsel %vm697, %v696, 0
    %v699 = vshrl.u32 %v698, 5
    %v700 = vand.u32 %v698, 31
    %v701 = vsub.s32 32, %v700
    %v702 = vshrl.u32 683565275, %v701
    %v703 = vshll.u32 683565275, %v700
    %v704 = vshrl.u32 2475754826, %v701
    %v705 = vor.u32 %v703, %v704
    %v706 = vshll.u32 2475754826, %v700
    %v707 = vshrl.u32 2131351028, %v701
    %v708 = vor.u32 %v706, %v707
    %v709 = vshll.u32 2131351028, %v700
    %v710 = vshrl.u32 2102212464, %v701
    %v711 = vor.u32 %v709, %v710
    %v712 = vshll.u32 2102212464, %v700
    %v713 = vshrl.u32 920167782, %v701
    %v714 = vor.u32 %v712, %v713
    %v715 = vshll.u32 920167782, %v700
    %v716 = vshrl.u32 1326507024, %v701
    %v717 = vor.u32 %v715, %v716
    %vm718 = vcmp.lt.s32.totalorder %v699, 1
    %vm719 = vcmp.lt.s32.totalorder %v699, 2
    %vm720 = vcmp.lt.s32.totalorder %v699, 3
    %vm721 = vcmp.lt.s32.totalorder %v699, 4
    %v722 = vsel %vm718, %v702, %v705
    %v723 = vsel %vm721, %v711, 2102212464
    %v724 = vsel %vm720, %v708, %v723
    %v725 = vsel %vm719, %v722, %v724
    %v726 = vsel %vm718, %v705, %v708
    %v727 = vsel %vm721, %v714, 920167782
    %v728 = vsel %vm720, %v711, %v727
    %v729 = vsel %vm719, %v726, %v728
    %v730 = vsel %vm718, %v708, %v711
    %v731 = vsel %vm721, %v717, 1326507024
    %v732 = vsel %vm720, %v714, %v731
    %v733 = vsel %vm719, %v730, %v732
    %v734 = vshll.u32 %v694, 8
    %v735 = vmul.u32.u64.compose %v734, %v733
    %v736 = vextract.low.u32 %v735
    %v737 = vextract.high.u32 %v735
    %v738 = vmul.u32.u64.compose %v734, %v729
    %v739 = vextract.low.u32 %v738
    %v740 = vextract.high.u32 %v738
    %v741 = vmul.u32 %v734, %v725
    %v742 = vadd.s32 %v737, %v739
    %vm743 = vc.u32 %v737, %v739
    %v744 = vadd.s32 %v740, 1
    %v745 = vsel %vm743, %v744, %v740
    %v746 = vadd.s32 %v741, %v745
    %v747 = vadd.s32 %v746, 536870912
    %v748 = vshrl.u32 %v747, 30
    %v749 = vshll.u32 %v748, 30
    %v750 = vsub.s32 %v746, %v749
    %vm751 = vcmp.lt.s32.totalorder %v750, 0
    %v752 = vsub.s32 0, %v750
    %v753 = vsel %vm751, %v752, %v750
    %v754 = vclz %v753
    %v755 = vsub.s32 %v754, 2
    %vm756 = vcmp.gt.s32.totalorder 0, %v755
    %v757 = vsel %vm756, 0, %v755
    %v758 = vsub.s32 32, %v757
    %v759 = vshll.u32 %v750, %v757
    %v760 = vshrl.u32 %v742, %v758
    %v761 = vor.u32 %v759, %v760
    %v762 = vsub.s32 4294967266, %v757
    %v763 = vadd.s32 %v762, 127
    %v764 = vshll.u32 %v763, 23
    %v765 = vor.u32 4788187, %v764
    %v766 = vand.u32 2147483647, %v765
    %v768 = vcvt.s32.f32 %v761
    %v769 = vmul.f32 %v768, %v766
    %v770 = vxor.u32 %v769, 2147483648
    %v771 = vsel %vm688, %v770, %v769
    %v772 = vsub.s32 4, %v748
    %v773 = vsel %vm688, %v772, %v748
    %v774 = vsel %vm687, %v685, %v771
    %v775 = vsel %vm687, 0, %v773
    %v776 = vcosq.f32.pop %v774
    %v777 = vsinq.f32.pop %v774
    %vm778 = vweird.f32 %v685
    %v779 = vand.u32 %v775, 3
    %vm780 = vcmp.lt.s32.totalorder %v779, 2
    %vm781 = vcmp.eq.s32.totalorder %v779, 0
    %v782 = vxor.u32 %v777, 2147483648
    %v783 = vsel %vm781, %v776, %v782
    %vm784 = vcmp.eq.s32.totalorder %v779, 2
    %v785 = vxor.u32 %v776, 2147483648
    %v786 = vsel %vm784, %v785, %v777
    %v787 = vsel %vm780, %v783, %v786
    %v788 = vsel %vm778, nan, %v787
    %v789 = vand.u32 2147483647, %v788
    %v790 = vrot.slane %v31, 5
    %791 = vrot.lane.b32.xlu0 %v790, 32
    %v792 = vpop.permute.xlu0 %791
    %v794 = vmul.f32 %v12, %v792
    %796 = vrot.lane.b32.xlu0 %v794, 96
    %v797 = vpop.permute.xlu0 %796
    %vm799 = vcmask 125955
    %v800 = vsel %vm799, %v797, 0.0
    %801 = vadd.xlane.f32.xlu0 %v800
    %v802 = vpop.xlane.xlu0 %801
    %v803 = vadd.f32 %v802, %v12
    %v804 = vxor.u32 %v803, 2147483648
    %v805 = vmul.f32 %v804, 1.442695
    %v806 = vpow.pop %v805
    %v807 = vadd.f32 %v806, 1.0
    %v808 = vrcp.pop %v807
    %v809 = vmul.f32 1.0, %v808
    %v810 = vmul.f32 %v809, 3.0
    %v811 = vadd.f32 %v810, 1.0
    %v812 = vmul.f32 %v811, 3.1415927
    %v813 = vand.u32 2147483647, %v812
    %vm814 = vcmp.le.f32.partialorder %v813, 0.7853982
    %vm815 = vcmp.lt.s32.totalorder %v812, 0
    %v816 = vand.u32 %v812, 2139095040
    %v817 = vshrl.u32 %v816, 23
    %v818 = vsub.s32 %v817, 127
    %v819 = vand.u32 2147483647, %v812
    %v820 = vand.u32 %v819, 8388607
    %v821 = vor.u32 %v820, 8388608
    %v822 = vsub.s32 0, %v821
    %v823 = vadd.s32 %v818, 1
    %vm824 = vcmp.gt.s32.totalorder %v823, 0
    %v825 = vsel %vm824, %v823, 0
    %v826 = vshrl.u32 %v825, 5
    %v827 = vand.u32 %v825, 31
    %v828 = vsub.s32 32, %v827
    %v829 = vshrl.u32 683565275, %v828
    %v830 = vshll.u32 683565275, %v827
    %v831 = vshrl.u32 2475754826, %v828
    %v832 = vor.u32 %v830, %v831
    %v833 = vshll.u32 2475754826, %v827
    %v834 = vshrl.u32 2131351028, %v828
    %v835 = vor.u32 %v833, %v834
    %v836 = vshll.u32 2131351028, %v827
    %v837 = vshrl.u32 2102212464, %v828
    %v838 = vor.u32 %v836, %v837
    %v839 = vshll.u32 2102212464, %v827
    %v840 = vshrl.u32 920167782, %v828
    %v841 = vor.u32 %v839, %v840
    %v842 = vshll.u32 920167782, %v827
    %v843 = vshrl.u32 1326507024, %v828
    %v844 = vor.u32 %v842, %v843
    %vm845 = vcmp.lt.s32.totalorder %v826, 1
    %vm846 = vcmp.lt.s32.totalorder %v826, 2
    %vm847 = vcmp.lt.s32.totalorder %v826, 3
    %vm848 = vcmp.lt.s32.totalorder %v826, 4
    %v849 = vsel %vm845, %v829, %v832
    %v850 = vsel %vm848, %v838, 2102212464
    %v851 = vsel %vm847, %v835, %v850
    %v852 = vsel %vm846, %v849, %v851
    %v853 = vsel %vm845, %v832, %v835
    %v854 = vsel %vm848, %v841, 920167782
    %v855 = vsel %vm847, %v838, %v854
    %v856 = vsel %vm846, %v853, %v855
    %v857 = vsel %vm845, %v835, %v838
    %v858 = vsel %vm848, %v844, 1326507024
    %v859 = vsel %vm847, %v841, %v858
    %v860 = vsel %vm846, %v857, %v859
    %v861 = vshll.u32 %v821, 8
    %v862 = vmul.u32.u64.compose %v861, %v860
    %v863 = vextract.low.u32 %v862
    %v864 = vextract.high.u32 %v862
    %v865 = vmul.u32.u64.compose %v861, %v856
    %v866 = vextract.low.u32 %v865
    %v867 = vextract.high.u32 %v865
    %v868 = vmul.u32 %v861, %v852
    %v869 = vadd.s32 %v864, %v866
    %vm870 = vc.u32 %v864, %v866
    %v871 = vadd.s32 %v867, 1
    %v872 = vsel %vm870, %v871, %v867
    %v873 = vadd.s32 %v868, %v872
    %v874 = vadd.s32 %v873, 536870912
    %v875 = vshrl.u32 %v874, 30
    %v876 = vshll.u32 %v875, 30
    %v877 = vsub.s32 %v873, %v876
    %vm878 = vcmp.lt.s32.totalorder %v877, 0
    %v879 = vsub.s32 0, %v877
    %v880 = vsel %vm878, %v879, %v877
    %v881 = vclz %v880
    %v882 = vsub.s32 %v881, 2
    %vm883 = vcmp.gt.s32.totalorder 0, %v882
    %v884 = vsel %vm883, 0, %v882
    %v885 = vsub.s32 32, %v884
    %v886 = vshll.u32 %v877, %v884
    %v887 = vshrl.u32 %v869, %v885
    %v888 = vor.u32 %v886, %v887
    %v889 = vsub.s32 4294967266, %v884
    %v890 = vadd.s32 %v889, 127
    %v891 = vshll.u32 %v890, 23
    %v892 = vor.u32 4788187, %v891
    %v893 = vand.u32 2147483647, %v892
    %v895 = vcvt.s32.f32 %v888
    %v896 = vmul.f32 %v895, %v893
    %v897 = vxor.u32 %v896, 2147483648
    %v898 = vsel %vm815, %v897, %v896
    %v899 = vsub.s32 4, %v875
    %v900 = vsel %vm815, %v899, %v875
    %v901 = vsel %vm814, %v812, %v898
    %v902 = vsel %vm814, 0, %v900
    %v903 = vcosq.f32.pop %v901
    %v904 = vsinq.f32.pop %v901
    %vm905 = vweird.f32 %v812
    %v906 = vand.u32 %v902, 3
    %vm907 = vcmp.lt.s32.totalorder %v906, 2
    %vm908 = vcmp.eq.s32.totalorder %v906, 0
    %v909 = vxor.u32 %v904, 2147483648
    %v910 = vsel %vm908, %v903, %v909
    %vm911 = vcmp.eq.s32.totalorder %v906, 2
    %v912 = vxor.u32 %v903, 2147483648
    %v913 = vsel %vm911, %v912, %v904
    %v914 = vsel %vm907, %v910, %v913
    %v915 = vsel %vm905, nan, %v914
    %v916 = vand.u32 2147483647, %v915
    %v917 = vmul.f32 %v811, 2.792527
    %v918 = vand.u32 2147483647, %v917
    %vm919 = vcmp.le.f32.partialorder %v918, 0.7853982
    %vm920 = vcmp.lt.s32.totalorder %v917, 0
    %v921 = vand.u32 %v917, 2139095040
    %v922 = vshrl.u32 %v921, 23
    %v923 = vsub.s32 %v922, 127
    %v924 = vand.u32 2147483647, %v917
    %v925 = vand.u32 %v924, 8388607
    %v926 = vor.u32 %v925, 8388608
    %v927 = vsub.s32 0, %v926
    %v928 = vadd.s32 %v923, 1
    %vm929 = vcmp.gt.s32.totalorder %v928, 0
    %v930 = vsel %vm929, %v928, 0
    %v931 = vshrl.u32 %v930, 5
    %v932 = vand.u32 %v930, 31
    %v933 = vsub.s32 32, %v932
    %v934 = vshrl.u32 683565275, %v933
    %v935 = vshll.u32 683565275, %v932
    %v936 = vshrl.u32 2475754826, %v933
    %v937 = vor.u32 %v935, %v936
    %v938 = vshll.u32 2475754826, %v932
    %v939 = vshrl.u32 2131351028, %v933
    %v940 = vor.u32 %v938, %v939
    %v941 = vshll.u32 2131351028, %v932
    %v942 = vshrl.u32 2102212464, %v933
    %v943 = vor.u32 %v941, %v942
    %v944 = vshll.u32 2102212464, %v932
    %v945 = vshrl.u32 920167782, %v933
    %v946 = vor.u32 %v944, %v945
    %v947 = vshll.u32 920167782, %v932
    %v948 = vshrl.u32 1326507024, %v933
    %v949 = vor.u32 %v947, %v948
    %vm950 = vcmp.lt.s32.totalorder %v931, 1
    %vm951 = vcmp.lt.s32.totalorder %v931, 2
    %vm952 = vcmp.lt.s32.totalorder %v931, 3
    %vm953 = vcmp.lt.s32.totalorder %v931, 4
    %v954 = vsel %vm950, %v934, %v937
    %v955 = vsel %vm953, %v943, 2102212464
    %v956 = vsel %vm952, %v940, %v955
    %v957 = vsel %vm951, %v954, %v956
    %v958 = vsel %vm950, %v937, %v940
    %v959 = vsel %vm953, %v946, 920167782
    %v960 = vsel %vm952, %v943, %v959
    %v961 = vsel %vm951, %v958, %v960
    %v962 = vsel %vm950, %v940, %v943
    %v963 = vsel %vm953, %v949, 1326507024
    %v964 = vsel %vm952, %v946, %v963
    %v965 = vsel %vm951, %v962, %v964
    %v966 = vshll.u32 %v926, 8
    %v967 = vmul.u32.u64.compose %v966, %v965
    %v968 = vextract.low.u32 %v967
    %v969 = vextract.high.u32 %v967
    %v970 = vmul.u32.u64.compose %v966, %v961
    %v971 = vextract.low.u32 %v970
    %v972 = vextract.high.u32 %v970
    %v973 = vmul.u32 %v966, %v957
    %v974 = vadd.s32 %v969, %v971
    %vm975 = vc.u32 %v969, %v971
    %v976 = vadd.s32 %v972, 1
    %v977 = vsel %vm975, %v976, %v972
    %v978 = vadd.s32 %v973, %v977
    %v979 = vadd.s32 %v978, 536870912
    %v980 = vshrl.u32 %v979, 30
    %v981 = vshll.u32 %v980, 30
    %v982 = vsub.s32 %v978, %v981
    %vm983 = vcmp.lt.s32.totalorder %v982, 0
    %v984 = vsub.s32 0, %v982
    %v985 = vsel %vm983, %v984, %v982
    %v986 = vclz %v985
    %v987 = vsub.s32 %v986, 2
    %vm988 = vcmp.gt.s32.totalorder 0, %v987
    %v989 = vsel %vm988, 0, %v987
    %v990 = vsub.s32 32, %v989
    %v991 = vshll.u32 %v982, %v989
    %v992 = vshrl.u32 %v974, %v990
    %v993 = vor.u32 %v991, %v992
    %v994 = vsub.s32 4294967266, %v989
    %v995 = vadd.s32 %v994, 127
    %v996 = vshll.u32 %v995, 23
    %v997 = vor.u32 4788187, %v996
    %v998 = vand.u32 2147483647, %v997
    %v1000 = vcvt.s32.f32 %v993
    %v1001 = vmul.f32 %v1000, %v998
    %v1002 = vxor.u32 %v1001, 2147483648
    %v1003 = vsel %vm920, %v1002, %v1001
    %v1004 = vsub.s32 4, %v980
    %v1005 = vsel %vm920, %v1004, %v980
    %v1006 = vsel %vm919, %v917, %v1003
    %v1007 = vsel %vm919, 0, %v1005
    %v1008 = vcosq.f32.pop %v1006
    %v1009 = vsinq.f32.pop %v1006
    %vm1010 = vweird.f32 %v917
    %v1011 = vand.u32 %v1007, 3
    %vm1012 = vcmp.lt.s32.totalorder %v1011, 2
    %vm1013 = vcmp.eq.s32.totalorder %v1011, 0
    %v1014 = vxor.u32 %v1009, 2147483648
    %v1015 = vsel %vm1013, %v1008, %v1014
    %vm1016 = vcmp.eq.s32.totalorder %v1011, 2
    %v1017 = vxor.u32 %v1008, 2147483648
    %v1018 = vsel %vm1016, %v1017, %v1009
    %v1019 = vsel %vm1012, %v1015, %v1018
    %v1020 = vsel %vm1010, nan, %v1019
    %v1021 = vand.u32 2147483647, %v1020
    %v1022 = vmul.f32 %v811, 1.7453294
    %v1023 = vand.u32 2147483647, %v1022
    %vm1024 = vcmp.le.f32.partialorder %v1023, 0.7853982
    %vm1025 = vcmp.lt.s32.totalorder %v1022, 0
    %v1026 = vand.u32 %v1022, 2139095040
    %v1027 = vshrl.u32 %v1026, 23
    %v1028 = vsub.s32 %v1027, 127
    %v1029 = vand.u32 2147483647, %v1022
    %v1030 = vand.u32 %v1029, 8388607
    %v1031 = vor.u32 %v1030, 8388608
    %v1032 = vsub.s32 0, %v1031
    %v1033 = vadd.s32 %v1028, 1
    %vm1034 = vcmp.gt.s32.totalorder %v1033, 0
    %v1035 = vsel %vm1034, %v1033, 0
    %v1036 = vshrl.u32 %v1035, 5
    %v1037 = vand.u32 %v1035, 31
    %v1038 = vsub.s32 32, %v1037
    %v1039 = vshrl.u32 683565275, %v1038
    %v1040 = vshll.u32 683565275, %v1037
    %v1041 = vshrl.u32 2475754826, %v1038
    %v1042 = vor.u32 %v1040, %v1041
    %v1043 = vshll.u32 2475754826, %v1037
    %v1044 = vshrl.u32 2131351028, %v1038
    %v1045 = vor.u32 %v1043, %v1044
    %v1046 = vshll.u32 2131351028, %v1037
    %v1047 = vshrl.u32 2102212464, %v1038
    %v1048 = vor.u32 %v1046, %v1047
    %v1049 = vshll.u32 2102212464, %v1037
    %v1050 = vshrl.u32 920167782, %v1038
    %v1051 = vor.u32 %v1049, %v1050
    %v1052 = vshll.u32 920167782, %v1037
    %v1053 = vshrl.u32 1326507024, %v1038
    %v1054 = vor.u32 %v1052, %v1053
    %vm1055 = vcmp.lt.s32.totalorder %v1036, 1
    %vm1056 = vcmp.lt.s32.totalorder %v1036, 2
    %vm1057 = vcmp.lt.s32.totalorder %v1036, 3
    %vm1058 = vcmp.lt.s32.totalorder %v1036, 4
    %v1059 = vsel %vm1055, %v1039, %v1042
    %v1060 = vsel %vm1058, %v1048, 2102212464
    %v1061 = vsel %vm1057, %v1045, %v1060
    %v1062 = vsel %vm1056, %v1059, %v1061
    %v1063 = vsel %vm1055, %v1042, %v1045
    %v1064 = vsel %vm1058, %v1051, 920167782
    %v1065 = vsel %vm1057, %v1048, %v1064
    %v1066 = vsel %vm1056, %v1063, %v1065
    %v1067 = vsel %vm1055, %v1045, %v1048
    %v1068 = vsel %vm1058, %v1054, 1326507024
    %v1069 = vsel %vm1057, %v1051, %v1068
    %v1070 = vsel %vm1056, %v1067, %v1069
    %v1071 = vshll.u32 %v1031, 8
    %v1072 = vmul.u32.u64.compose %v1071, %v1070
    %v1073 = vextract.low.u32 %v1072
    %v1074 = vextract.high.u32 %v1072
    %v1075 = vmul.u32.u64.compose %v1071, %v1066
    %v1076 = vextract.low.u32 %v1075
    %v1077 = vextract.high.u32 %v1075
    %v1078 = vmul.u32 %v1071, %v1062
    %v1079 = vadd.s32 %v1074, %v1076
    %vm1080 = vc.u32 %v1074, %v1076
    %v1081 = vadd.s32 %v1077, 1
    %v1082 = vsel %vm1080, %v1081, %v1077
    %v1083 = vadd.s32 %v1078, %v1082
    %v1084 = vadd.s32 %v1083, 536870912
    %v1085 = vshrl.u32 %v1084, 30
    %v1086 = vshll.u32 %v1085, 30
    %v1087 = vsub.s32 %v1083, %v1086
    %vm1088 = vcmp.lt.s32.totalorder %v1087, 0
    %v1089 = vsub.s32 0, %v1087
    %v1090 = vsel %vm1088, %v1089, %v1087
    %v1091 = vclz %v1090
    %v1092 = vsub.s32 %v1091, 2
    %vm1093 = vcmp.gt.s32.totalorder 0, %v1092
    %v1094 = vsel %vm1093, 0, %v1092
    %v1095 = vsub.s32 32, %v1094
    %v1096 = vshll.u32 %v1087, %v1094
    %v1097 = vshrl.u32 %v1079, %v1095
    %v1098 = vor.u32 %v1096, %v1097
    %v1099 = vsub.s32 4294967266, %v1094
    %v1100 = vadd.s32 %v1099, 127
    %v1101 = vshll.u32 %v1100, 23
    %v1102 = vor.u32 4788187, %v1101
    %v1103 = vand.u32 2147483647, %v1102
    %v1105 = vcvt.s32.f32 %v1098
    %v1106 = vmul.f32 %v1105, %v1103
    %v1107 = vxor.u32 %v1106, 2147483648
    %v1108 = vsel %vm1025, %v1107, %v1106
    %v1109 = vsub.s32 4, %v1085
    %v1110 = vsel %vm1025, %v1109, %v1085
    %v1111 = vsel %vm1024, %v1022, %v1108
    %v1112 = vsel %vm1024, 0, %v1110
    %v1113 = vcosq.f32.pop %v1111
    %v1114 = vsinq.f32.pop %v1111
    %vm1115 = vweird.f32 %v1022
    %v1116 = vand.u32 %v1112, 3
    %vm1117 = vcmp.lt.s32.totalorder %v1116, 2
    %vm1118 = vcmp.eq.s32.totalorder %v1116, 0
    %v1119 = vxor.u32 %v1114, 2147483648
    %v1120 = vsel %vm1118, %v1113, %v1119
    %vm1121 = vcmp.eq.s32.totalorder %v1116, 2
    %v1122 = vxor.u32 %v1113, 2147483648
    %v1123 = vsel %vm1121, %v1122, %v1114
    %v1124 = vsel %vm1117, %v1120, %v1123
    %v1125 = vsel %vm1115, nan, %v1124
    %v1126 = vand.u32 2147483647, %v1125
    %v1127 = vmul.f32 %v811, 1.3962635
    %v1128 = vand.u32 2147483647, %v1127
    %vm1129 = vcmp.le.f32.partialorder %v1128, 0.7853982
    %vm1130 = vcmp.lt.s32.totalorder %v1127, 0
    %v1131 = vand.u32 %v1127, 2139095040
    %v1132 = vshrl.u32 %v1131, 23
    %v1133 = vsub.s32 %v1132, 127
    %v1134 = vand.u32 2147483647, %v1127
    %v1135 = vand.u32 %v1134, 8388607
    %v1136 = vor.u32 %v1135, 8388608
    %v1137 = vsub.s32 0, %v1136
    %v1138 = vadd.s32 %v1133, 1
    %vm1139 = vcmp.gt.s32.totalorder %v1138, 0
    %v1140 = vsel %vm1139, %v1138, 0
    %v1141 = vshrl.u32 %v1140, 5
    %v1142 = vand.u32 %v1140, 31
    %v1143 = vsub.s32 32, %v1142
    %v1144 = vshrl.u32 683565275, %v1143
    %v1145 = vshll.u32 683565275, %v1142
    %v1146 = vshrl.u32 2475754826, %v1143
    %v1147 = vor.u32 %v1145, %v1146
    %v1148 = vshll.u32 2475754826, %v1142
    %v1149 = vshrl.u32 2131351028, %v1143
    %v1150 = vor.u32 %v1148, %v1149
    %v1151 = vshll.u32 2131351028, %v1142
    %v1152 = vshrl.u32 2102212464, %v1143
    %v1153 = vor.u32 %v1151, %v1152
    %v1154 = vshll.u32 2102212464, %v1142
    %v1155 = vshrl.u32 920167782, %v1143
    %v1156 = vor.u32 %v1154, %v1155
    %v1157 = vshll.u32 920167782, %v1142
    %v1158 = vshrl.u32 1326507024, %v1143
    %v1159 = vor.u32 %v1157, %v1158
    %vm1160 = vcmp.lt.s32.totalorder %v1141, 1
    %vm1161 = vcmp.lt.s32.totalorder %v1141, 2
    %vm1162 = vcmp.lt.s32.totalorder %v1141, 3
    %vm1163 = vcmp.lt.s32.totalorder %v1141, 4
    %v1164 = vsel %vm1160, %v1144, %v1147
    %v1165 = vsel %vm1163, %v1153, 2102212464
    %v1166 = vsel %vm1162, %v1150, %v1165
    %v1167 = vsel %vm1161, %v1164, %v1166
    %v1168 = vsel %vm1160, %v1147, %v1150
    %v1169 = vsel %vm1163, %v1156, 920167782
    %v1170 = vsel %vm1162, %v1153, %v1169
    %v1171 = vsel %vm1161, %v1168, %v1170
    %v1172 = vsel %vm1160, %v1150, %v1153
    %v1173 = vsel %vm1163, %v1159, 1326507024
    %v1174 = vsel %vm1162, %v1156, %v1173
    %v1175 = vsel %vm1161, %v1172, %v1174
    %v1176 = vshll.u32 %v1136, 8
    %v1177 = vmul.u32.u64.compose %v1176, %v1175
    %v1178 = vextract.low.u32 %v1177
    %v1179 = vextract.high.u32 %v1177
    %v1180 = vmul.u32.u64.compose %v1176, %v1171
    %v1181 = vextract.low.u32 %v1180
    %v1182 = vextract.high.u32 %v1180
    %v1183 = vmul.u32 %v1176, %v1167
    %v1184 = vadd.s32 %v1179, %v1181
    %vm1185 = vc.u32 %v1179, %v1181
    %v1186 = vadd.s32 %v1182, 1
    %v1187 = vsel %vm1185, %v1186, %v1182
    %v1188 = vadd.s32 %v1183, %v1187
    %v1189 = vadd.s32 %v1188, 536870912
    %v1190 = vshrl.u32 %v1189, 30
    %v1191 = vshll.u32 %v1190, 30
    %v1192 = vsub.s32 %v1188, %v1191
    %vm1193 = vcmp.lt.s32.totalorder %v1192, 0
    %v1194 = vsub.s32 0, %v1192
    %v1195 = vsel %vm1193, %v1194, %v1192
    %v1196 = vclz %v1195
    %v1197 = vsub.s32 %v1196, 2
    %vm1198 = vcmp.gt.s32.totalorder 0, %v1197
    %v1199 = vsel %vm1198, 0, %v1197
    %v1200 = vsub.s32 32, %v1199
    %v1201 = vshll.u32 %v1192, %v1199
    %v1202 = vshrl.u32 %v1184, %v1200
    %v1203 = vor.u32 %v1201, %v1202
    %v1204 = vsub.s32 4294967266, %v1199
    %v1205 = vadd.s32 %v1204, 127
    %v1206 = vshll.u32 %v1205, 23
    %v1207 = vor.u32 4788187, %v1206
    %v1208 = vand.u32 2147483647, %v1207
    %v1210 = vcvt.s32.f32 %v1203
    %v1211 = vmul.f32 %v1210, %v1208
    %v1212 = vxor.u32 %v1211, 2147483648
    %v1213 = vsel %vm1130, %v1212, %v1211
    %v1214 = vsub.s32 4, %v1190
    %v1215 = vsel %vm1130, %v1214, %v1190
    %v1216 = vsel %vm1129, %v1127, %v1213
    %v1217 = vsel %vm1129, 0, %v1215
    %v1218 = vcosq.f32.pop %v1216
    %v1219 = vsinq.f32.pop %v1216
    %vm1220 = vweird.f32 %v1127
    %v1221 = vand.u32 %v1217, 3
    %vm1222 = vcmp.lt.s32.totalorder %v1221, 2
    %vm1223 = vcmp.eq.s32.totalorder %v1221, 0
    %v1224 = vxor.u32 %v1219, 2147483648
    %v1225 = vsel %vm1223, %v1218, %v1224
    %vm1226 = vcmp.eq.s32.totalorder %v1221, 2
    %v1227 = vxor.u32 %v1218, 2147483648
    %v1228 = vsel %vm1226, %v1227, %v1219
    %v1229 = vsel %vm1222, %v1225, %v1228
    %v1230 = vsel %vm1220, nan, %v1229
    %v1231 = vand.u32 2147483647, %v1230
    %v1232 = vmul.f32 %v811, 0.69813174
    %v1233 = vand.u32 2147483647, %v1232
    %vm1234 = vcmp.le.f32.partialorder %v1233, 0.7853982
    %vm1235 = vcmp.lt.s32.totalorder %v1232, 0
    %v1236 = vand.u32 %v1232, 2139095040
    %v1237 = vshrl.u32 %v1236, 23
    %v1238 = vsub.s32 %v1237, 127
    %v1239 = vand.u32 2147483647, %v1232
    %v1240 = vand.u32 %v1239, 8388607
    %v1241 = vor.u32 %v1240, 8388608
    %v1242 = vsub.s32 0, %v1241
    %v1243 = vadd.s32 %v1238, 1
    %vm1244 = vcmp.gt.s32.totalorder %v1243, 0
    %v1245 = vsel %vm1244, %v1243, 0
    %v1246 = vshrl.u32 %v1245, 5
    %v1247 = vand.u32 %v1245, 31
    %v1248 = vsub.s32 32, %v1247
    %v1249 = vshrl.u32 683565275, %v1248
    %v1250 = vshll.u32 683565275, %v1247
    %v1251 = vshrl.u32 2475754826, %v1248
    %v1252 = vor.u32 %v1250, %v1251
    %v1253 = vshll.u32 2475754826, %v1247
    %v1254 = vshrl.u32 2131351028, %v1248
    %v1255 = vor.u32 %v1253, %v1254
    %v1256 = vshll.u32 2131351028, %v1247
    %v1257 = vshrl.u32 2102212464, %v1248
    %v1258 = vor.u32 %v1256, %v1257
    %v1259 = vshll.u32 2102212464, %v1247
    %v1260 = vshrl.u32 920167782, %v1248
    %v1261 = vor.u32 %v1259, %v1260
    %v1262 = vshll.u32 920167782, %v1247
    %v1263 = vshrl.u32 1326507024, %v1248
    %v1264 = vor.u32 %v1262, %v1263
    %vm1265 = vcmp.lt.s32.totalorder %v1246, 1
    %vm1266 = vcmp.lt.s32.totalorder %v1246, 2
    %vm1267 = vcmp.lt.s32.totalorder %v1246, 3
    %vm1268 = vcmp.lt.s32.totalorder %v1246, 4
    %v1269 = vsel %vm1265, %v1249, %v1252
    %v1270 = vsel %vm1268, %v1258, 2102212464
    %v1271 = vsel %vm1267, %v1255, %v1270
    %v1272 = vsel %vm1266, %v1269, %v1271
    %v1273 = vsel %vm1265, %v1252, %v1255
    %v1274 = vsel %vm1268, %v1261, 920167782
    %v1275 = vsel %vm1267, %v1258, %v1274
    %v1276 = vsel %vm1266, %v1273, %v1275
    %v1277 = vsel %vm1265, %v1255, %v1258
    %v1278 = vsel %vm1268, %v1264, 1326507024
    %v1279 = vsel %vm1267, %v1261, %v1278
    %v1280 = vsel %vm1266, %v1277, %v1279
    %v1281 = vshll.u32 %v1241, 8
    %v1282 = vmul.u32.u64.compose %v1281, %v1280
    %v1283 = vextract.low.u32 %v1282
    %v1284 = vextract.high.u32 %v1282
    %v1285 = vmul.u32.u64.compose %v1281, %v1276
    %v1286 = vextract.low.u32 %v1285
    %v1287 = vextract.high.u32 %v1285
    %v1288 = vmul.u32 %v1281, %v1272
    %v1289 = vadd.s32 %v1284, %v1286
    %vm1290 = vc.u32 %v1284, %v1286
    %v1291 = vadd.s32 %v1287, 1
    %v1292 = vsel %vm1290, %v1291, %v1287
    %v1293 = vadd.s32 %v1288, %v1292
    %v1294 = vadd.s32 %v1293, 536870912
    %v1295 = vshrl.u32 %v1294, 30
    %v1296 = vshll.u32 %v1295, 30
    %v1297 = vsub.s32 %v1293, %v1296
    %vm1298 = vcmp.lt.s32.totalorder %v1297, 0
    %v1299 = vsub.s32 0, %v1297
    %v1300 = vsel %vm1298, %v1299, %v1297
    %v1301 = vclz %v1300
    %v1302 = vsub.s32 %v1301, 2
    %vm1303 = vcmp.gt.s32.totalorder 0, %v1302
    %v1304 = vsel %vm1303, 0, %v1302
    %v1305 = vsub.s32 32, %v1304
    %v1306 = vshll.u32 %v1297, %v1304
    %v1307 = vshrl.u32 %v1289, %v1305
    %v1308 = vor.u32 %v1306, %v1307
    %v1309 = vsub.s32 4294967266, %v1304
    %v1310 = vadd.s32 %v1309, 127
    %v1311 = vshll.u32 %v1310, 23
    %v1312 = vor.u32 4788187, %v1311
    %v1313 = vand.u32 2147483647, %v1312
    %v1315 = vcvt.s32.f32 %v1308
    %v1316 = vmul.f32 %v1315, %v1313
    %v1317 = vxor.u32 %v1316, 2147483648
    %v1318 = vsel %vm1235, %v1317, %v1316
    %v1319 = vsub.s32 4, %v1295
    %v1320 = vsel %vm1235, %v1319, %v1295
    %v1321 = vsel %vm1234, %v1232, %v1318
    %v1322 = vsel %vm1234, 0, %v1320
    %v1323 = vcosq.f32.pop %v1321
    %v1324 = vsinq.f32.pop %v1321
    %vm1325 = vweird.f32 %v1232
    %v1326 = vand.u32 %v1322, 3
    %vm1327 = vcmp.lt.s32.totalorder %v1326, 2
    %vm1328 = vcmp.eq.s32.totalorder %v1326, 0
    %v1329 = vxor.u32 %v1324, 2147483648
    %v1330 = vsel %vm1328, %v1323, %v1329
    %vm1331 = vcmp.eq.s32.totalorder %v1326, 2
    %v1332 = vxor.u32 %v1323, 2147483648
    %v1333 = vsel %vm1331, %v1332, %v1324
    %v1334 = vsel %vm1327, %v1330, %v1333
    %v1335 = vsel %vm1325, nan, %v1334
    %v1336 = vand.u32 2147483647, %v1335
    %v1337 = vmul.f32 %v811, 0.34906587
    %v1338 = vand.u32 2147483647, %v1337
    %vm1339 = vcmp.le.f32.partialorder %v1338, 0.7853982
    %vm1340 = vcmp.lt.s32.totalorder %v1337, 0
    %v1341 = vand.u32 %v1337, 2139095040
    %v1342 = vshrl.u32 %v1341, 23
    %v1343 = vsub.s32 %v1342, 127
    %v1344 = vand.u32 2147483647, %v1337
    %v1345 = vand.u32 %v1344, 8388607
    %v1346 = vor.u32 %v1345, 8388608
    %v1347 = vsub.s32 0, %v1346
    %v1348 = vadd.s32 %v1343, 1
    %vm1349 = vcmp.gt.s32.totalorder %v1348, 0
    %v1350 = vsel %vm1349, %v1348, 0
    %v1351 = vshrl.u32 %v1350, 5
    %v1352 = vand.u32 %v1350, 31
    %v1353 = vsub.s32 32, %v1352
    %v1354 = vshrl.u32 683565275, %v1353
    %v1355 = vshll.u32 683565275, %v1352
    %v1356 = vshrl.u32 2475754826, %v1353
    %v1357 = vor.u32 %v1355, %v1356
    %v1358 = vshll.u32 2475754826, %v1352
    %v1359 = vshrl.u32 2131351028, %v1353
    %v1360 = vor.u32 %v1358, %v1359
    %v1361 = vshll.u32 2131351028, %v1352
    %v1362 = vshrl.u32 2102212464, %v1353
    %v1363 = vor.u32 %v1361, %v1362
    %v1364 = vshll.u32 2102212464, %v1352
    %v1365 = vshrl.u32 920167782, %v1353
    %v1366 = vor.u32 %v1364, %v1365
    %v1367 = vshll.u32 920167782, %v1352
    %v1368 = vshrl.u32 1326507024, %v1353
    %v1369 = vor.u32 %v1367, %v1368
    %vm1370 = vcmp.lt.s32.totalorder %v1351, 1
    %vm1371 = vcmp.lt.s32.totalorder %v1351, 2
    %vm1372 = vcmp.lt.s32.totalorder %v1351, 3
    %vm1373 = vcmp.lt.s32.totalorder %v1351, 4
    %v1374 = vsel %vm1370, %v1354, %v1357
    %v1375 = vsel %vm1373, %v1363, 2102212464
    %v1376 = vsel %vm1372, %v1360, %v1375
    %v1377 = vsel %vm1371, %v1374, %v1376
    %v1378 = vsel %vm1370, %v1357, %v1360
    %v1379 = vsel %vm1373, %v1366, 920167782
    %v1380 = vsel %vm1372, %v1363, %v1379
    %v1381 = vsel %vm1371, %v1378, %v1380
    %v1382 = vsel %vm1370, %v1360, %v1363
    %v1383 = vsel %vm1373, %v1369, 1326507024
    %v1384 = vsel %vm1372, %v1366, %v1383
    %v1385 = vsel %vm1371, %v1382, %v1384
    %v1386 = vshll.u32 %v1346, 8
    %v1387 = vmul.u32.u64.compose %v1386, %v1385
    %v1388 = vextract.low.u32 %v1387
    %v1389 = vextract.high.u32 %v1387
    %v1390 = vmul.u32.u64.compose %v1386, %v1381
    %v1391 = vextract.low.u32 %v1390
    %v1392 = vextract.high.u32 %v1390
    %v1393 = vmul.u32 %v1386, %v1377
    %v1394 = vadd.s32 %v1389, %v1391
    %vm1395 = vc.u32 %v1389, %v1391
    %v1396 = vadd.s32 %v1392, 1
    %v1397 = vsel %vm1395, %v1396, %v1392
    %v1398 = vadd.s32 %v1393, %v1397
    %v1399 = vadd.s32 %v1398, 536870912
    %v1400 = vshrl.u32 %v1399, 30
    %v1401 = vshll.u32 %v1400, 30
    %v1402 = vsub.s32 %v1398, %v1401
    %vm1403 = vcmp.lt.s32.totalorder %v1402, 0
    %v1404 = vsub.s32 0, %v1402
    %v1405 = vsel %vm1403, %v1404, %v1402
    %v1406 = vclz %v1405
    %v1407 = vsub.s32 %v1406, 2
    %vm1408 = vcmp.gt.s32.totalorder 0, %v1407
    %v1409 = vsel %vm1408, 0, %v1407
    %v1410 = vsub.s32 32, %v1409
    %v1411 = vshll.u32 %v1402, %v1409
    %v1412 = vshrl.u32 %v1394, %v1410
    %v1413 = vor.u32 %v1411, %v1412
    %v1414 = vsub.s32 4294967266, %v1409
    %v1415 = vadd.s32 %v1414, 127
    %v1416 = vshll.u32 %v1415, 23
    %v1417 = vor.u32 4788187, %v1416
    %v1418 = vand.u32 2147483647, %v1417
    %v1420 = vcvt.s32.f32 %v1413
    %v1421 = vmul.f32 %v1420, %v1418
    %v1422 = vxor.u32 %v1421, 2147483648
    %v1423 = vsel %vm1340, %v1422, %v1421
    %v1424 = vsub.s32 4, %v1400
    %v1425 = vsel %vm1340, %v1424, %v1400
    %v1426 = vsel %vm1339, %v1337, %v1423
    %v1427 = vsel %vm1339, 0, %v1425
    %v1428 = vcosq.f32.pop %v1426
    %v1429 = vsinq.f32.pop %v1426
    %vm1430 = vweird.f32 %v1337
    %v1431 = vand.u32 %v1427, 3
    %vm1432 = vcmp.lt.s32.totalorder %v1431, 2
    %vm1433 = vcmp.eq.s32.totalorder %v1431, 0
    %v1434 = vxor.u32 %v1429, 2147483648
    %v1435 = vsel %vm1433, %v1428, %v1434
    %vm1436 = vcmp.eq.s32.totalorder %v1431, 2
    %v1437 = vxor.u32 %v1428, 2147483648
    %v1438 = vsel %vm1436, %v1437, %v1429
    %v1439 = vsel %vm1432, %v1435, %v1438
    %v1440 = vsel %vm1430, nan, %v1439
    %v1441 = vand.u32 2147483647, %v1440
    %v1442 = vmul.f32 %v811, 0.0
    %v1443 = vand.u32 2147483647, %v1442
    %vm1444 = vcmp.le.f32.partialorder %v1443, 0.7853982
    %vm1445 = vcmp.lt.s32.totalorder %v1442, 0
    %v1446 = vand.u32 %v1442, 2139095040
    %v1447 = vshrl.u32 %v1446, 23
    %v1448 = vsub.s32 %v1447, 127
    %v1449 = vand.u32 2147483647, %v1442
    %v1450 = vand.u32 %v1449, 8388607
    %v1451 = vor.u32 %v1450, 8388608
    %v1452 = vsub.s32 0, %v1451
    %v1453 = vadd.s32 %v1448, 1
    %vm1454 = vcmp.gt.s32.totalorder %v1453, 0
    %v1455 = vsel %vm1454, %v1453, 0
    %v1456 = vshrl.u32 %v1455, 5
    %v1457 = vand.u32 %v1455, 31
    %v1458 = vsub.s32 32, %v1457
    %v1459 = vshrl.u32 683565275, %v1458
    %v1460 = vshll.u32 683565275, %v1457
    %v1461 = vshrl.u32 2475754826, %v1458
    %v1462 = vor.u32 %v1460, %v1461
    %v1463 = vshll.u32 2475754826, %v1457
    %v1464 = vshrl.u32 2131351028, %v1458
    %v1465 = vor.u32 %v1463, %v1464
    %v1466 = vshll.u32 2131351028, %v1457
    %v1467 = vshrl.u32 2102212464, %v1458
    %v1468 = vor.u32 %v1466, %v1467
    %v1469 = vshll.u32 2102212464, %v1457
    %v1470 = vshrl.u32 920167782, %v1458
    %v1471 = vor.u32 %v1469, %v1470
    %v1472 = vshll.u32 920167782, %v1457
    %v1473 = vshrl.u32 1326507024, %v1458
    %v1474 = vor.u32 %v1472, %v1473
    %vm1475 = vcmp.lt.s32.totalorder %v1456, 1
    %vm1476 = vcmp.lt.s32.totalorder %v1456, 2
    %vm1477 = vcmp.lt.s32.totalorder %v1456, 3
    %vm1478 = vcmp.lt.s32.totalorder %v1456, 4
    %v1479 = vsel %vm1475, %v1459, %v1462
    %v1480 = vsel %vm1478, %v1468, 2102212464
    %v1481 = vsel %vm1477, %v1465, %v1480
    %v1482 = vsel %vm1476, %v1479, %v1481
    %v1483 = vsel %vm1475, %v1462, %v1465
    %v1484 = vsel %vm1478, %v1471, 920167782
    %v1485 = vsel %vm1477, %v1468, %v1484
    %v1486 = vsel %vm1476, %v1483, %v1485
    %v1487 = vsel %vm1475, %v1465, %v1468
    %v1488 = vsel %vm1478, %v1474, 1326507024
    %v1489 = vsel %vm1477, %v1471, %v1488
    %v1490 = vsel %vm1476, %v1487, %v1489
    %v1491 = vshll.u32 %v1451, 8
    %v1492 = vmul.u32.u64.compose %v1491, %v1490
    %v1493 = vextract.low.u32 %v1492
    %v1494 = vextract.high.u32 %v1492
    %v1495 = vmul.u32.u64.compose %v1491, %v1486
    %v1496 = vextract.low.u32 %v1495
    %v1497 = vextract.high.u32 %v1495
    %v1498 = vmul.u32 %v1491, %v1482
    %v1499 = vadd.s32 %v1494, %v1496
    %vm1500 = vc.u32 %v1494, %v1496
    %v1501 = vadd.s32 %v1497, 1
    %v1502 = vsel %vm1500, %v1501, %v1497
    %v1503 = vadd.s32 %v1498, %v1502
    %v1504 = vadd.s32 %v1503, 536870912
    %v1505 = vshrl.u32 %v1504, 30
    %v1506 = vshll.u32 %v1505, 30
    %v1507 = vsub.s32 %v1503, %v1506
    %vm1508 = vcmp.lt.s32.totalorder %v1507, 0
    %v1509 = vsub.s32 0, %v1507
    %v1510 = vsel %vm1508, %v1509, %v1507
    %v1511 = vclz %v1510
    %v1512 = vsub.s32 %v1511, 2
    %vm1513 = vcmp.gt.s32.totalorder 0, %v1512
    %v1514 = vsel %vm1513, 0, %v1512
    %v1515 = vsub.s32 32, %v1514
    %v1516 = vshll.u32 %v1507, %v1514
    %v1517 = vshrl.u32 %v1499, %v1515
    %v1518 = vor.u32 %v1516, %v1517
    %v1519 = vsub.s32 4294967266, %v1514
    %v1520 = vadd.s32 %v1519, 127
    %v1521 = vshll.u32 %v1520, 23
    %v1522 = vor.u32 4788187, %v1521
    %v1523 = vand.u32 2147483647, %v1522
    %v1525 = vcvt.s32.f32 %v1518
    %v1526 = vmul.f32 %v1525, %v1523
    %v1527 = vxor.u32 %v1526, 2147483648
    %v1528 = vsel %vm1445, %v1527, %v1526
    %v1529 = vsub.s32 4, %v1505
    %v1530 = vsel %vm1445, %v1529, %v1505
    %v1531 = vsel %vm1444, %v1442, %v1528
    %v1532 = vsel %vm1444, 0, %v1530
    %v1533 = vcosq.f32.pop %v1531
    %v1534 = vsinq.f32.pop %v1531
    %vm1535 = vweird.f32 %v1442
    %v1536 = vand.u32 %v1532, 3
    %vm1537 = vcmp.lt.s32.totalorder %v1536, 2
    %vm1538 = vcmp.eq.s32.totalorder %v1536, 0
    %v1539 = vxor.u32 %v1534, 2147483648
    %v1540 = vsel %vm1538, %v1533, %v1539
    %vm1541 = vcmp.eq.s32.totalorder %v1536, 2
    %v1542 = vxor.u32 %v1533, 2147483648
    %v1543 = vsel %vm1541, %v1542, %v1534
    %v1544 = vsel %vm1537, %v1540, %v1543
    %v1545 = vsel %vm1535, nan, %v1544
    %v1546 = vand.u32 2147483647, %v1545
    %v1547 = vld [vmem:[%s1] sm:$0xff]
    %v1548 = vld [vmem:[%s1 + $0x8] sm:$0xff]
    %v1549 = vld [vmem:[%s1 + $0x18] sm:$0xff]
    %v1550 = vld [vmem:[%s1 + $0x20] sm:$0xff]
    %v1551 = vld [vmem:[%s1 + $0x30] sm:$0xff]
    %v1552 = vld [vmem:[%s1 + $0x38] sm:$0xff]
    %v1553 = vld [vmem:[%s1 + $0x48] sm:$0xff]
    %v1554 = vld [vmem:[%s1 + $0x50] sm:$0xff]
    %v1555 = vld [vmem:[%s1 + $0x60] sm:$0xff]
    %v1556 = vld [vmem:[%s1 + $0x68] sm:$0xff]
    %v1557 = vld [vmem:[%s1 + $0x78] sm:$0xff]
    %v1558 = vld [vmem:[%s1 + $0x80] sm:$0xff]
    %v1560 = vrot.slane %v159, 2
    %1561 = vrot.lane.b32.xlu0 %v1560, 80
    %v1562 = vpop.permute.xlu0 %1561
    %s1563 = vtos %v1562
    %v1564 = vstv %s1563
    %v1566 = vmul.f32 %v1564, %v1547
    %v1567 = vmul.f32 %v1564, %v1548
    %v1568 = vmul.f32 %v1564, %v1549
    %v1569 = vmul.f32 %v1564, %v1550
    %v1570 = vmul.f32 %v1564, %v1551
    %v1571 = vmul.f32 %v1564, %v1552
    %v1572 = vmul.f32 %v1564, %v1553
    %v1573 = vmul.f32 %v1564, %v1554
    %v1574 = vmul.f32 %v1564, %v1555
    %v1575 = vmul.f32 %v1564, %v1556
    %v1576 = vmul.f32 %v1564, %v1557
    %v1577 = vmul.f32 %v1564, %v1558
    %v1579 = vrot.slane %v916, 3
    %1580 = vrot.lane.b32.xlu0 %v1579, 80
    %v1581 = vpop.permute.xlu0 %1580
    %s1582 = vtos %v1581
    %v1583 = vstv %s1582
    %v1585 = vmul.f32 %v1583, %v1547
    %v1586 = vmul.f32 %v1583, %v1548
    %v1587 = vmul.f32 %v1583, %v1549
    %v1588 = vmul.f32 %v1583, %v1550
    %v1589 = vmul.f32 %v1583, %v1551
    %v1590 = vmul.f32 %v1583, %v1552
    %v1591 = vmul.f32 %v1583, %v1553
    %v1592 = vmul.f32 %v1583, %v1554
    %v1593 = vmul.f32 %v1583, %v1555
    %v1594 = vmul.f32 %v1583, %v1556
    %v1595 = vmul.f32 %v1583, %v1557
    %v1596 = vmul.f32 %v1583, %v1558
    %v1597 = vld [vmem:[%s1 + $0x1] sm:$0xff]
    %v1598 = vld [vmem:[%s1 + $0x9] sm:$0xff]
    %v1599 = vld [vmem:[%s1 + $0x19] sm:$0xff]
    %v1600 = vld [vmem:[%s1 + $0x21] sm:$0xff]
    %v1601 = vld [vmem:[%s1 + $0x31] sm:$0xff]
    %v1602 = vld [vmem:[%s1 + $0x39] sm:$0xff]
    %v1603 = vld [vmem:[%s1 + $0x49] sm:$0xff]
    %v1604 = vld [vmem:[%s1 + $0x51] sm:$0xff]
    %v1605 = vld [vmem:[%s1 + $0x61] sm:$0xff]
    %v1606 = vld [vmem:[%s1 + $0x69] sm:$0xff]
    %v1607 = vld [vmem:[%s1 + $0x79] sm:$0xff]
    %v1608 = vld [vmem:[%s1 + $0x81] sm:$0xff]
    %v1610 = vrot.slane %v264, 2
    %1611 = vrot.lane.b32.xlu0 %v1610, 80
    %v1612 = vpop.permute.xlu0 %1611
    %s1613 = vtos %v1612
    %v1614 = vstv %s1613
    %v1616 = vmul.f32 %v1614, %v1597
    %v1617 = vmul.f32 %v1614, %v1598
    %v1618 = vmul.f32 %v1614, %v1599
    %v1619 = vmul.f32 %v1614, %v1600
    %v1620 = vmul.f32 %v1614, %v1601
    %v1621 = vmul.f32 %v1614, %v1602
    %v1622 = vmul.f32 %v1614, %v1603
    %v1623 = vmul.f32 %v1614, %v1604
    %v1624 = vmul.f32 %v1614, %v1605
    %v1625 = vmul.f32 %v1614, %v1606
    %v1626 = vmul.f32 %v1614, %v1607
    %v1627 = vmul.f32 %v1614, %v1608
    %1640 = vrot.lane.b32.xlu0 %v1616, 2
    %v1641 = vpop.permute.xlu0 %1640
    %1642 = vrot.lane.b32.xlu0 %v1617, 2
    %v1643 = vpop.permute.xlu0 %1642
    %1644 = vrot.lane.b32.xlu0 %v1618, 2
    %v1645 = vpop.permute.xlu0 %1644
    %1646 = vrot.lane.b32.xlu0 %v1619, 2
    %v1647 = vpop.permute.xlu0 %1646
    %1648 = vrot.lane.b32.xlu0 %v1620, 2
    %v1649 = vpop.permute.xlu0 %1648
    %1650 = vrot.lane.b32.xlu0 %v1621, 2
    %v1651 = vpop.permute.xlu0 %1650
    %1652 = vrot.lane.b32.xlu0 %v1622, 2
    %v1653 = vpop.permute.xlu0 %1652
    %1654 = vrot.lane.b32.xlu0 %v1623, 2
    %v1655 = vpop.permute.xlu0 %1654
    %1656 = vrot.lane.b32.xlu0 %v1624, 2
    %v1657 = vpop.permute.xlu0 %1656
    %1658 = vrot.lane.b32.xlu0 %v1625, 2
    %v1659 = vpop.permute.xlu0 %1658
    %1660 = vrot.lane.b32.xlu0 %v1626, 2
    %v1661 = vpop.permute.xlu0 %1660
    %1662 = vrot.lane.b32.xlu0 %v1627, 2
    %v1663 = vpop.permute.xlu0 %1662
    %v1676 = vadd.f32 %v1566, %v1641
    %v1677 = vadd.f32 %v1567, %v1643
    %v1678 = vadd.f32 %v1568, %v1645
    %v1679 = vadd.f32 %v1569, %v1647
    %v1680 = vadd.f32 %v1570, %v1649
    %v1681 = vadd.f32 %v1571, %v1651
    %v1682 = vadd.f32 %v1572, %v1653
    %v1683 = vadd.f32 %v1573, %v1655
    %v1684 = vadd.f32 %v1574, %v1657
    %v1685 = vadd.f32 %v1575, %v1659
    %v1686 = vadd.f32 %v1576, %v1661
    %v1687 = vadd.f32 %v1577, %v1663
    %v1689 = vrot.slane %v1021, 3
    %1690 = vrot.lane.b32.xlu0 %v1689, 80
    %v1691 = vpop.permute.xlu0 %1690
    %s1692 = vtos %v1691
    %v1693 = vstv %s1692
    %v1695 = vmul.f32 %v1693, %v1597
    %v1696 = vmul.f32 %v1693, %v1598
    %v1697 = vmul.f32 %v1693, %v1599
    %v1698 = vmul.f32 %v1693, %v1600
    %v1699 = vmul.f32 %v1693, %v1601
    %v1700 = vmul.f32 %v1693, %v1602
    %v1701 = vmul.f32 %v1693, %v1603
    %v1702 = vmul.f32 %v1693, %v1604
    %v1703 = vmul.f32 %v1693, %v1605
    %v1704 = vmul.f32 %v1693, %v1606
    %v1705 = vmul.f32 %v1693, %v1607
    %v1706 = vmul.f32 %v1693, %v1608
    %1719 = vrot.lane.b32.xlu0 %v1695, 2
    %v1720 = vpop.permute.xlu0 %1719
    %1721 = vrot.lane.b32.xlu0 %v1696, 2
    %v1722 = vpop.permute.xlu0 %1721
    %1723 = vrot.lane.b32.xlu0 %v1697, 2
    %v1724 = vpop.permute.xlu0 %1723
    %1725 = vrot.lane.b32.xlu0 %v1698, 2
    %v1726 = vpop.permute.xlu0 %1725
    %1727 = vrot.lane.b32.xlu0 %v1699, 2
    %v1728 = vpop.permute.xlu0 %1727
    %1729 = vrot.lane.b32.xlu0 %v1700, 2
    %v1730 = vpop.permute.xlu0 %1729
    %1731 = vrot.lane.b32.xlu0 %v1701, 2
    %v1732 = vpop.permute.xlu0 %1731
    %1733 = vrot.lane.b32.xlu0 %v1702, 2
    %v1734 = vpop.permute.xlu0 %1733
    %1735 = vrot.lane.b32.xlu0 %v1703, 2
    %v1736 = vpop.permute.xlu0 %1735
    %1737 = vrot.lane.b32.xlu0 %v1704, 2
    %v1738 = vpop.permute.xlu0 %1737
    %1739 = vrot.lane.b32.xlu0 %v1705, 2
    %v1740 = vpop.permute.xlu0 %1739
    %1741 = vrot.lane.b32.xlu0 %v1706, 2
    %v1742 = vpop.permute.xlu0 %1741
    %v1755 = vadd.f32 %v1585, %v1720
    %v1756 = vadd.f32 %v1586, %v1722
    %v1757 = vadd.f32 %v1587, %v1724
    %v1758 = vadd.f32 %v1588, %v1726
    %v1759 = vadd.f32 %v1589, %v1728
    %v1760 = vadd.f32 %v1590, %v1730
    %v1761 = vadd.f32 %v1591, %v1732
    %v1762 = vadd.f32 %v1592, %v1734
    %v1763 = vadd.f32 %v1593, %v1736
    %v1764 = vadd.f32 %v1594, %v1738
    %v1765 = vadd.f32 %v1595, %v1740
    %v1766 = vadd.f32 %v1596, %v1742
    %v1768 = vrot.slane %v369, 2
    %1769 = vrot.lane.b32.xlu0 %v1768, 80
    %v1770 = vpop.permute.xlu0 %1769
    %s1771 = vtos %v1770
    %v1772 = vstv %s1771
    %v1774 = vmul.f32 %v1772, %v1597
    %v1775 = vmul.f32 %v1772, %v1598
    %v1776 = vmul.f32 %v1772, %v1599
    %v1777 = vmul.f32 %v1772, %v1600
    %v1778 = vmul.f32 %v1772, %v1601
    %v1779 = vmul.f32 %v1772, %v1602
    %v1780 = vmul.f32 %v1772, %v1603
    %v1781 = vmul.f32 %v1772, %v1604
    %v1782 = vmul.f32 %v1772, %v1605
    %v1783 = vmul.f32 %v1772, %v1606
    %v1784 = vmul.f32 %v1772, %v1607
    %v1785 = vmul.f32 %v1772, %v1608
    %1798 = vrot.lane.b32.xlu0 %v1774, 1
    %v1799 = vpop.permute.xlu0 %1798
    %1800 = vrot.lane.b32.xlu0 %v1775, 1
    %v1801 = vpop.permute.xlu0 %1800
    %1802 = vrot.lane.b32.xlu0 %v1776, 1
    %v1803 = vpop.permute.xlu0 %1802
    %1804 = vrot.lane.b32.xlu0 %v1777, 1
    %v1805 = vpop.permute.xlu0 %1804
    %1806 = vrot.lane.b32.xlu0 %v1778, 1
    %v1807 = vpop.permute.xlu0 %1806
    %1808 = vrot.lane.b32.xlu0 %v1779, 1
    %v1809 = vpop.permute.xlu0 %1808
    %1810 = vrot.lane.b32.xlu0 %v1780, 1
    %v1811 = vpop.permute.xlu0 %1810
    %1812 = vrot.lane.b32.xlu0 %v1781, 1
    %v1813 = vpop.permute.xlu0 %1812
    %1814 = vrot.lane.b32.xlu0 %v1782, 1
    %v1815 = vpop.permute.xlu0 %1814
    %1816 = vrot.lane.b32.xlu0 %v1783, 1
    %v1817 = vpop.permute.xlu0 %1816
    %1818 = vrot.lane.b32.xlu0 %v1784, 1
    %v1819 = vpop.permute.xlu0 %1818
    %1820 = vrot.lane.b32.xlu0 %v1785, 1
    %v1821 = vpop.permute.xlu0 %1820
    %v1834 = vadd.f32 %v1676, %v1799
    %v1835 = vadd.f32 %v1677, %v1801
    %v1836 = vadd.f32 %v1678, %v1803
    %v1837 = vadd.f32 %v1679, %v1805
    %v1838 = vadd.f32 %v1680, %v1807
    %v1839 = vadd.f32 %v1681, %v1809
    %v1840 = vadd.f32 %v1682, %v1811
    %v1841 = vadd.f32 %v1683, %v1813
    %v1842 = vadd.f32 %v1684, %v1815
    %v1843 = vadd.f32 %v1685, %v1817
    %v1844 = vadd.f32 %v1686, %v1819
    %v1845 = vadd.f32 %v1687, %v1821
    %v1847 = vrot.slane %v1126, 3
    %1848 = vrot.lane.b32.xlu0 %v1847, 80
    %v1849 = vpop.permute.xlu0 %1848
    %s1850 = vtos %v1849
    %v1851 = vstv %s1850
    %v1853 = vmul.f32 %v1851, %v1597
    %v1854 = vmul.f32 %v1851, %v1598
    %v1855 = vmul.f32 %v1851, %v1599
    %v1856 = vmul.f32 %v1851, %v1600
    %v1857 = vmul.f32 %v1851, %v1601
    %v1858 = vmul.f32 %v1851, %v1602
    %v1859 = vmul.f32 %v1851, %v1603
    %v1860 = vmul.f32 %v1851, %v1604
    %v1861 = vmul.f32 %v1851, %v1605
    %v1862 = vmul.f32 %v1851, %v1606
    %v1863 = vmul.f32 %v1851, %v1607
    %v1864 = vmul.f32 %v1851, %v1608
    %1877 = vrot.lane.b32.xlu0 %v1853, 1
    %v1878 = vpop.permute.xlu0 %1877
    %1879 = vrot.lane.b32.xlu0 %v1854, 1
    %v1880 = vpop.permute.xlu0 %1879
    %1881 = vrot.lane.b32.xlu0 %v1855, 1
    %v1882 = vpop.permute.xlu0 %1881
    %1883 = vrot.lane.b32.xlu0 %v1856, 1
    %v1884 = vpop.permute.xlu0 %1883
    %1885 = vrot.lane.b32.xlu0 %v1857, 1
    %v1886 = vpop.permute.xlu0 %1885
    %1887 = vrot.lane.b32.xlu0 %v1858, 1
    %v1888 = vpop.permute.xlu0 %1887
    %1889 = vrot.lane.b32.xlu0 %v1859, 1
    %v1890 = vpop.permute.xlu0 %1889
    %1891 = vrot.lane.b32.xlu0 %v1860, 1
    %v1892 = vpop.permute.xlu0 %1891
    %1893 = vrot.lane.b32.xlu0 %v1861, 1
    %v1894 = vpop.permute.xlu0 %1893
    %1895 = vrot.lane.b32.xlu0 %v1862, 1
    %v1896 = vpop.permute.xlu0 %1895
    %1897 = vrot.lane.b32.xlu0 %v1863, 1
    %v1898 = vpop.permute.xlu0 %1897
    %1899 = vrot.lane.b32.xlu0 %v1864, 1
    %v1900 = vpop.permute.xlu0 %1899
    %v1913 = vadd.f32 %v1755, %v1878
    %v1914 = vadd.f32 %v1756, %v1880
    %v1915 = vadd.f32 %v1757, %v1882
    %v1916 = vadd.f32 %v1758, %v1884
    %v1917 = vadd.f32 %v1759, %v1886
    %v1918 = vadd.f32 %v1760, %v1888
    %v1919 = vadd.f32 %v1761, %v1890
    %v1920 = vadd.f32 %v1762, %v1892
    %v1921 = vadd.f32 %v1763, %v1894
    %v1922 = vadd.f32 %v1764, %v1896
    %v1923 = vadd.f32 %v1765, %v1898
    %v1924 = vadd.f32 %v1766, %v1900
    %v1926 = vrot.slane %v474, 2
    %1927 = vrot.lane.b32.xlu0 %v1926, 80
    %v1928 = vpop.permute.xlu0 %1927
    %s1929 = vtos %v1928
    %v1930 = vstv %s1929
    %v1932 = vmul.f32 %v1930, %v1597
    %v1933 = vmul.f32 %v1930, %v1598
    %v1934 = vmul.f32 %v1930, %v1599
    %v1935 = vmul.f32 %v1930, %v1600
    %v1936 = vmul.f32 %v1930, %v1601
    %v1937 = vmul.f32 %v1930, %v1602
    %v1938 = vmul.f32 %v1930, %v1603
    %v1939 = vmul.f32 %v1930, %v1604
    %v1940 = vmul.f32 %v1930, %v1605
    %v1941 = vmul.f32 %v1930, %v1606
    %v1942 = vmul.f32 %v1930, %v1607
    %v1943 = vmul.f32 %v1930, %v1608
    %v1944 = vadd.f32 %v1834, %v1932
    %v1945 = vadd.f32 %v1835, %v1933
    %v1946 = vadd.f32 %v1836, %v1934
    %v1947 = vadd.f32 %v1837, %v1935
    %v1948 = vadd.f32 %v1838, %v1936
    %v1949 = vadd.f32 %v1839, %v1937
    %v1950 = vadd.f32 %v1840, %v1938
    %v1951 = vadd.f32 %v1841, %v1939
    %v1952 = vadd.f32 %v1842, %v1940
    %v1953 = vadd.f32 %v1843, %v1941
    %v1954 = vadd.f32 %v1844, %v1942
    %v1955 = vadd.f32 %v1845, %v1943
    %v1957 = vrot.slane %v1231, 3
    %1958 = vrot.lane.b32.xlu0 %v1957, 80
    %v1959 = vpop.permute.xlu0 %1958
    %s1960 = vtos %v1959
    %v1961 = vstv %s1960
    %v1963 = vmul.f32 %v1961, %v1597
    %v1964 = vmul.f32 %v1961, %v1598
    %v1965 = vmul.f32 %v1961, %v1599
    %v1966 = vmul.f32 %v1961, %v1600
    %v1967 = vmul.f32 %v1961, %v1601
    %v1968 = vmul.f32 %v1961, %v1602
    %v1969 = vmul.f32 %v1961, %v1603
    %v1970 = vmul.f32 %v1961, %v1604
    %v1971 = vmul.f32 %v1961, %v1605
    %v1972 = vmul.f32 %v1961, %v1606
    %v1973 = vmul.f32 %v1961, %v1607
    %v1974 = vmul.f32 %v1961, %v1608
    %v1975 = vadd.f32 %v1913, %v1963
    %v1976 = vadd.f32 %v1914, %v1964
    %v1977 = vadd.f32 %v1915, %v1965
    %v1978 = vadd.f32 %v1916, %v1966
    %v1979 = vadd.f32 %v1917, %v1967
    %v1980 = vadd.f32 %v1918, %v1968
    %v1981 = vadd.f32 %v1919, %v1969
    %v1982 = vadd.f32 %v1920, %v1970
    %v1983 = vadd.f32 %v1921, %v1971
    %v1984 = vadd.f32 %v1922, %v1972
    %v1985 = vadd.f32 %v1923, %v1973
    %v1986 = vadd.f32 %v1924, %v1974
    %1987 = vrot.lane.b32.xlu0 %v1774, 127
    %v1988 = vpop.permute.xlu0 %1987
    %1989 = vrot.lane.b32.xlu0 %v1775, 127
    %v1990 = vpop.permute.xlu0 %1989
    %1991 = vrot.lane.b32.xlu0 %v1776, 127
    %v1992 = vpop.permute.xlu0 %1991
    %1993 = vrot.lane.b32.xlu0 %v1777, 127
    %v1994 = vpop.permute.xlu0 %1993
    %1995 = vrot.lane.b32.xlu0 %v1778, 127
    %v1996 = vpop.permute.xlu0 %1995
    %1997 = vrot.lane.b32.xlu0 %v1779, 127
    %v1998 = vpop.permute.xlu0 %1997
    %1999 = vrot.lane.b32.xlu0 %v1780, 127
    %v2000 = vpop.permute.xlu0 %1999
    %2001 = vrot.lane.b32.xlu0 %v1781, 127
    %v2002 = vpop.permute.xlu0 %2001
    %2003 = vrot.lane.b32.xlu0 %v1782, 127
    %v2004 = vpop.permute.xlu0 %2003
    %2005 = vrot.lane.b32.xlu0 %v1783, 127
    %v2006 = vpop.permute.xlu0 %2005
    %2007 = vrot.lane.b32.xlu0 %v1784, 127
    %v2008 = vpop.permute.xlu0 %2007
    %2009 = vrot.lane.b32.xlu0 %v1785, 127
    %v2010 = vpop.permute.xlu0 %2009
    %v2023 = vadd.f32 %v1944, %v1988
    %v2024 = vadd.f32 %v1945, %v1990
    %v2025 = vadd.f32 %v1946, %v1992
    %v2026 = vadd.f32 %v1947, %v1994
    %v2027 = vadd.f32 %v1948, %v1996
    %v2028 = vadd.f32 %v1949, %v1998
    %v2029 = vadd.f32 %v1950, %v2000
    %v2030 = vadd.f32 %v1951, %v2002
    %v2031 = vadd.f32 %v1952, %v2004
    %v2032 = vadd.f32 %v1953, %v2006
    %v2033 = vadd.f32 %v1954, %v2008
    %v2034 = vadd.f32 %v1955, %v2010
    %2035 = vrot.lane.b32.xlu0 %v1853, 127
    %v2036 = vpop.permute.xlu0 %2035
    %2037 = vrot.lane.b32.xlu0 %v1854, 127
    %v2038 = vpop.permute.xlu0 %2037
    %2039 = vrot.lane.b32.xlu0 %v1855, 127
    %v2040 = vpop.permute.xlu0 %2039
    %2041 = vrot.lane.b32.xlu0 %v1856, 127
    %v2042 = vpop.permute.xlu0 %2041
    %2043 = vrot.lane.b32.xlu0 %v1857, 127
    %v2044 = vpop.permute.xlu0 %2043
    %2045 = vrot.lane.b32.xlu0 %v1858, 127
    %v2046 = vpop.permute.xlu0 %2045
    %2047 = vrot.lane.b32.xlu0 %v1859, 127
    %v2048 = vpop.permute.xlu0 %2047
    %2049 = vrot.lane.b32.xlu0 %v1860, 127
    %v2050 = vpop.permute.xlu0 %2049
    %2051 = vrot.lane.b32.xlu0 %v1861, 127
    %v2052 = vpop.permute.xlu0 %2051
    %2053 = vrot.lane.b32.xlu0 %v1862, 127
    %v2054 = vpop.permute.xlu0 %2053
    %2055 = vrot.lane.b32.xlu0 %v1863, 127
    %v2056 = vpop.permute.xlu0 %2055
    %2057 = vrot.lane.b32.xlu0 %v1864, 127
    %v2058 = vpop.permute.xlu0 %2057
    %v2071 = vadd.f32 %v1975, %v2036
    %v2072 = vadd.f32 %v1976, %v2038
    %v2073 = vadd.f32 %v1977, %v2040
    %v2074 = vadd.f32 %v1978, %v2042
    %v2075 = vadd.f32 %v1979, %v2044
    %v2076 = vadd.f32 %v1980, %v2046
    %v2077 = vadd.f32 %v1981, %v2048
    %v2078 = vadd.f32 %v1982, %v2050
    %v2079 = vadd.f32 %v1983, %v2052
    %v2080 = vadd.f32 %v1984, %v2054
    %v2081 = vadd.f32 %v1985, %v2056
    %v2082 = vadd.f32 %v1986, %v2058
    %2083 = vrot.lane.b32.xlu0 %v1616, 126
    %v2084 = vpop.permute.xlu0 %2083
    %2085 = vrot.lane.b32.xlu0 %v1617, 126
    %v2086 = vpop.permute.xlu0 %2085
    %2087 = vrot.lane.b32.xlu0 %v1618, 126
    %v2088 = vpop.permute.xlu0 %2087
    %2089 = vrot.lane.b32.xlu0 %v1619, 126
    %v2090 = vpop.permute.xlu0 %2089
    %2091 = vrot.lane.b32.xlu0 %v1620, 126
    %v2092 = vpop.permute.xlu0 %2091
    %2093 = vrot.lane.b32.xlu0 %v1621, 126
    %v2094 = vpop.permute.xlu0 %2093
    %2095 = vrot.lane.b32.xlu0 %v1622, 126
    %v2096 = vpop.permute.xlu0 %2095
    %2097 = vrot.lane.b32.xlu0 %v1623, 126
    %v2098 = vpop.permute.xlu0 %2097
    %2099 = vrot.lane.b32.xlu0 %v1624, 126
    %v2100 = vpop.permute.xlu0 %2099
    %2101 = vrot.lane.b32.xlu0 %v1625, 126
    %v2102 = vpop.permute.xlu0 %2101
    %2103 = vrot.lane.b32.xlu0 %v1626, 126
    %v2104 = vpop.permute.xlu0 %2103
    %2105 = vrot.lane.b32.xlu0 %v1627, 126
    %v2106 = vpop.permute.xlu0 %2105
    %v2119 = vadd.f32 %v2023, %v2084
    %v2120 = vadd.f32 %v2024, %v2086
    %v2121 = vadd.f32 %v2025, %v2088
    %v2122 = vadd.f32 %v2026, %v2090
    %v2123 = vadd.f32 %v2027, %v2092
    %v2124 = vadd.f32 %v2028, %v2094
    %v2125 = vadd.f32 %v2029, %v2096
    %v2126 = vadd.f32 %v2030, %v2098
    %v2127 = vadd.f32 %v2031, %v2100
    %v2128 = vadd.f32 %v2032, %v2102
    %v2129 = vadd.f32 %v2033, %v2104
    %v2130 = vadd.f32 %v2034, %v2106
    %2131 = vrot.lane.b32.xlu0 %v1695, 126
    %v2132 = vpop.permute.xlu0 %2131
    %2133 = vrot.lane.b32.xlu0 %v1696, 126
    %v2134 = vpop.permute.xlu0 %2133
    %2135 = vrot.lane.b32.xlu0 %v1697, 126
    %v2136 = vpop.permute.xlu0 %2135
    %2137 = vrot.lane.b32.xlu0 %v1698, 126
    %v2138 = vpop.permute.xlu0 %2137
    %2139 = vrot.lane.b32.xlu0 %v1699, 126
    %v2140 = vpop.permute.xlu0 %2139
    %2141 = vrot.lane.b32.xlu0 %v1700, 126
    %v2142 = vpop.permute.xlu0 %2141
    %2143 = vrot.lane.b32.xlu0 %v1701, 126
    %v2144 = vpop.permute.xlu0 %2143
    %2145 = vrot.lane.b32.xlu0 %v1702, 126
    %v2146 = vpop.permute.xlu0 %2145
    %2147 = vrot.lane.b32.xlu0 %v1703, 126
    %v2148 = vpop.permute.xlu0 %2147
    %2149 = vrot.lane.b32.xlu0 %v1704, 126
    %v2150 = vpop.permute.xlu0 %2149
    %2151 = vrot.lane.b32.xlu0 %v1705, 126
    %v2152 = vpop.permute.xlu0 %2151
    %2153 = vrot.lane.b32.xlu0 %v1706, 126
    %v2154 = vpop.permute.xlu0 %2153
    %v2167 = vadd.f32 %v2071, %v2132
    %v2168 = vadd.f32 %v2072, %v2134
    %v2169 = vadd.f32 %v2073, %v2136
    %v2170 = vadd.f32 %v2074, %v2138
    %v2171 = vadd.f32 %v2075, %v2140
    %v2172 = vadd.f32 %v2076, %v2142
    %v2173 = vadd.f32 %v2077, %v2144
    %v2174 = vadd.f32 %v2078, %v2146
    %v2175 = vadd.f32 %v2079, %v2148
    %v2176 = vadd.f32 %v2080, %v2150
    %v2177 = vadd.f32 %v2081, %v2152
    %v2178 = vadd.f32 %v2082, %v2154
    %v2179 = vld [vmem:[%s1 + $0x2] sm:$0xff]
    %v2180 = vld [vmem:[%s1 + $0xa] sm:$0xff]
    %v2181 = vld [vmem:[%s1 + $0x1a] sm:$0xff]
    %v2182 = vld [vmem:[%s1 + $0x22] sm:$0xff]
    %v2183 = vld [vmem:[%s1 + $0x32] sm:$0xff]
    %v2184 = vld [vmem:[%s1 + $0x3a] sm:$0xff]
    %v2185 = vld [vmem:[%s1 + $0x4a] sm:$0xff]
    %v2186 = vld [vmem:[%s1 + $0x52] sm:$0xff]
    %v2187 = vld [vmem:[%s1 + $0x62] sm:$0xff]
    %v2188 = vld [vmem:[%s1 + $0x6a] sm:$0xff]
    %v2189 = vld [vmem:[%s1 + $0x7a] sm:$0xff]
    %v2190 = vld [vmem:[%s1 + $0x82] sm:$0xff]
    %v2191 = vmul.f32 %v1772, %v2179
    %v2192 = vmul.f32 %v1772, %v2180
    %v2193 = vmul.f32 %v1772, %v2181
    %v2194 = vmul.f32 %v1772, %v2182
    %v2195 = vmul.f32 %v1772, %v2183
    %v2196 = vmul.f32 %v1772, %v2184
    %v2197 = vmul.f32 %v1772, %v2185
    %v2198 = vmul.f32 %v1772, %v2186
    %v2199 = vmul.f32 %v1772, %v2187
    %v2200 = vmul.f32 %v1772, %v2188
    %v2201 = vmul.f32 %v1772, %v2189
    %v2202 = vmul.f32 %v1772, %v2190
    %2215 = vrot.lane.b32.xlu0 %v2191, 2
    %v2216 = vpop.permute.xlu0 %2215
    %2217 = vrot.lane.b32.xlu0 %v2192, 2
    %v2218 = vpop.permute.xlu0 %2217
    %2219 = vrot.lane.b32.xlu0 %v2193, 2
    %v2220 = vpop.permute.xlu0 %2219
    %2221 = vrot.lane.b32.xlu0 %v2194, 2
    %v2222 = vpop.permute.xlu0 %2221
    %2223 = vrot.lane.b32.xlu0 %v2195, 2
    %v2224 = vpop.permute.xlu0 %2223
    %2225 = vrot.lane.b32.xlu0 %v2196, 2
    %v2226 = vpop.permute.xlu0 %2225
    %2227 = vrot.lane.b32.xlu0 %v2197, 2
    %v2228 = vpop.permute.xlu0 %2227
    %2229 = vrot.lane.b32.xlu0 %v2198, 2
    %v2230 = vpop.permute.xlu0 %2229
    %2231 = vrot.lane.b32.xlu0 %v2199, 2
    %v2232 = vpop.permute.xlu0 %2231
    %2233 = vrot.lane.b32.xlu0 %v2200, 2
    %v2234 = vpop.permute.xlu0 %2233
    %2235 = vrot.lane.b32.xlu0 %v2201, 2
    %v2236 = vpop.permute.xlu0 %2235
    %2237 = vrot.lane.b32.xlu0 %v2202, 2
    %v2238 = vpop.permute.xlu0 %2237
    %v2251 = vadd.f32 %v2119, %v2216
    %v2252 = vadd.f32 %v2120, %v2218
    %v2253 = vadd.f32 %v2121, %v2220
    %v2254 = vadd.f32 %v2122, %v2222
    %v2255 = vadd.f32 %v2123, %v2224
    %v2256 = vadd.f32 %v2124, %v2226
    %v2257 = vadd.f32 %v2125, %v2228
    %v2258 = vadd.f32 %v2126, %v2230
    %v2259 = vadd.f32 %v2127, %v2232
    %v2260 = vadd.f32 %v2128, %v2234
    %v2261 = vadd.f32 %v2129, %v2236
    %v2262 = vadd.f32 %v2130, %v2238
    %v2263 = vmul.f32 %v1851, %v2179
    %v2264 = vmul.f32 %v1851, %v2180
    %v2265 = vmul.f32 %v1851, %v2181
    %v2266 = vmul.f32 %v1851, %v2182
    %v2267 = vmul.f32 %v1851, %v2183
    %v2268 = vmul.f32 %v1851, %v2184
    %v2269 = vmul.f32 %v1851, %v2185
    %v2270 = vmul.f32 %v1851, %v2186
    %v2271 = vmul.f32 %v1851, %v2187
    %v2272 = vmul.f32 %v1851, %v2188
    %v2273 = vmul.f32 %v1851, %v2189
    %v2274 = vmul.f32 %v1851, %v2190
    %2287 = vrot.lane.b32.xlu0 %v2263, 2
    %v2288 = vpop.permute.xlu0 %2287
    %2289 = vrot.lane.b32.xlu0 %v2264, 2
    %v2290 = vpop.permute.xlu0 %2289
    %2291 = vrot.lane.b32.xlu0 %v2265, 2
    %v2292 = vpop.permute.xlu0 %2291
    %2293 = vrot.lane.b32.xlu0 %v2266, 2
    %v2294 = vpop.permute.xlu0 %2293
    %2295 = vrot.lane.b32.xlu0 %v2267, 2
    %v2296 = vpop.permute.xlu0 %2295
    %2297 = vrot.lane.b32.xlu0 %v2268, 2
    %v2298 = vpop.permute.xlu0 %2297
    %2299 = vrot.lane.b32.xlu0 %v2269, 2
    %v2300 = vpop.permute.xlu0 %2299
    %2301 = vrot.lane.b32.xlu0 %v2270, 2
    %v2302 = vpop.permute.xlu0 %2301
    %2303 = vrot.lane.b32.xlu0 %v2271, 2
    %v2304 = vpop.permute.xlu0 %2303
    %2305 = vrot.lane.b32.xlu0 %v2272, 2
    %v2306 = vpop.permute.xlu0 %2305
    %2307 = vrot.lane.b32.xlu0 %v2273, 2
    %v2308 = vpop.permute.xlu0 %2307
    %2309 = vrot.lane.b32.xlu0 %v2274, 2
    %v2310 = vpop.permute.xlu0 %2309
    %v2323 = vadd.f32 %v2167, %v2288
    %v2324 = vadd.f32 %v2168, %v2290
    %v2325 = vadd.f32 %v2169, %v2292
    %v2326 = vadd.f32 %v2170, %v2294
    %v2327 = vadd.f32 %v2171, %v2296
    %v2328 = vadd.f32 %v2172, %v2298
    %v2329 = vadd.f32 %v2173, %v2300
    %v2330 = vadd.f32 %v2174, %v2302
    %v2331 = vadd.f32 %v2175, %v2304
    %v2332 = vadd.f32 %v2176, %v2306
    %v2333 = vadd.f32 %v2177, %v2308
    %v2334 = vadd.f32 %v2178, %v2310
    %v2336 = vrot.slane %v579, 2
    %2337 = vrot.lane.b32.xlu0 %v2336, 80
    %v2338 = vpop.permute.xlu0 %2337
    %s2339 = vtos %v2338
    %v2340 = vstv %s2339
    %v2342 = vmul.f32 %v2340, %v2179
    %v2343 = vmul.f32 %v2340, %v2180
    %v2344 = vmul.f32 %v2340, %v2181
    %v2345 = vmul.f32 %v2340, %v2182
    %v2346 = vmul.f32 %v2340, %v2183
    %v2347 = vmul.f32 %v2340, %v2184
    %v2348 = vmul.f32 %v2340, %v2185
    %v2349 = vmul.f32 %v2340, %v2186
    %v2350 = vmul.f32 %v2340, %v2187
    %v2351 = vmul.f32 %v2340, %v2188
    %v2352 = vmul.f32 %v2340, %v2189
    %v2353 = vmul.f32 %v2340, %v2190
    %2366 = vrot.lane.b32.xlu0 %v2342, 1
    %v2367 = vpop.permute.xlu0 %2366
    %2368 = vrot.lane.b32.xlu0 %v2343, 1
    %v2369 = vpop.permute.xlu0 %2368
    %2370 = vrot.lane.b32.xlu0 %v2344, 1
    %v2371 = vpop.permute.xlu0 %2370
    %2372 = vrot.lane.b32.xlu0 %v2345, 1
    %v2373 = vpop.permute.xlu0 %2372
    %2374 = vrot.lane.b32.xlu0 %v2346, 1
    %v2375 = vpop.permute.xlu0 %2374
    %2376 = vrot.lane.b32.xlu0 %v2347, 1
    %v2377 = vpop.permute.xlu0 %2376
    %2378 = vrot.lane.b32.xlu0 %v2348, 1
    %v2379 = vpop.permute.xlu0 %2378
    %2380 = vrot.lane.b32.xlu0 %v2349, 1
    %v2381 = vpop.permute.xlu0 %2380
    %2382 = vrot.lane.b32.xlu0 %v2350, 1
    %v2383 = vpop.permute.xlu0 %2382
    %2384 = vrot.lane.b32.xlu0 %v2351, 1
    %v2385 = vpop.permute.xlu0 %2384
    %2386 = vrot.lane.b32.xlu0 %v2352, 1
    %v2387 = vpop.permute.xlu0 %2386
    %2388 = vrot.lane.b32.xlu0 %v2353, 1
    %v2389 = vpop.permute.xlu0 %2388
    %v2402 = vadd.f32 %v2251, %v2367
    %v2403 = vadd.f32 %v2252, %v2369
    %v2404 = vadd.f32 %v2253, %v2371
    %v2405 = vadd.f32 %v2254, %v2373
    %v2406 = vadd.f32 %v2255, %v2375
    %v2407 = vadd.f32 %v2256, %v2377
    %v2408 = vadd.f32 %v2257, %v2379
    %v2409 = vadd.f32 %v2258, %v2381
    %v2410 = vadd.f32 %v2259, %v2383
    %v2411 = vadd.f32 %v2260, %v2385
    %v2412 = vadd.f32 %v2261, %v2387
    %v2413 = vadd.f32 %v2262, %v2389
    %v2415 = vrot.slane %v1336, 3
    %2416 = vrot.lane.b32.xlu0 %v2415, 80
    %v2417 = vpop.permute.xlu0 %2416
    %s2418 = vtos %v2417
    %v2419 = vstv %s2418
    %v2421 = vmul.f32 %v2419, %v2179
    %v2422 = vmul.f32 %v2419, %v2180
    %v2423 = vmul.f32 %v2419, %v2181
    %v2424 = vmul.f32 %v2419, %v2182
    %v2425 = vmul.f32 %v2419, %v2183
    %v2426 = vmul.f32 %v2419, %v2184
    %v2427 = vmul.f32 %v2419, %v2185
    %v2428 = vmul.f32 %v2419, %v2186
    %v2429 = vmul.f32 %v2419, %v2187
    %v2430 = vmul.f32 %v2419, %v2188
    %v2431 = vmul.f32 %v2419, %v2189
    %v2432 = vmul.f32 %v2419, %v2190
    %2445 = vrot.lane.b32.xlu0 %v2421, 1
    %v2446 = vpop.permute.xlu0 %2445
    %2447 = vrot.lane.b32.xlu0 %v2422, 1
    %v2448 = vpop.permute.xlu0 %2447
    %2449 = vrot.lane.b32.xlu0 %v2423, 1
    %v2450 = vpop.permute.xlu0 %2449
    %2451 = vrot.lane.b32.xlu0 %v2424, 1
    %v2452 = vpop.permute.xlu0 %2451
    %2453 = vrot.lane.b32.xlu0 %v2425, 1
    %v2454 = vpop.permute.xlu0 %2453
    %2455 = vrot.lane.b32.xlu0 %v2426, 1
    %v2456 = vpop.permute.xlu0 %2455
    %2457 = vrot.lane.b32.xlu0 %v2427, 1
    %v2458 = vpop.permute.xlu0 %2457
    %2459 = vrot.lane.b32.xlu0 %v2428, 1
    %v2460 = vpop.permute.xlu0 %2459
    %2461 = vrot.lane.b32.xlu0 %v2429, 1
    %v2462 = vpop.permute.xlu0 %2461
    %2463 = vrot.lane.b32.xlu0 %v2430, 1
    %v2464 = vpop.permute.xlu0 %2463
    %2465 = vrot.lane.b32.xlu0 %v2431, 1
    %v2466 = vpop.permute.xlu0 %2465
    %2467 = vrot.lane.b32.xlu0 %v2432, 1
    %v2468 = vpop.permute.xlu0 %2467
    %v2481 = vadd.f32 %v2323, %v2446
    %v2482 = vadd.f32 %v2324, %v2448
    %v2483 = vadd.f32 %v2325, %v2450
    %v2484 = vadd.f32 %v2326, %v2452
    %v2485 = vadd.f32 %v2327, %v2454
    %v2486 = vadd.f32 %v2328, %v2456
    %v2487 = vadd.f32 %v2329, %v2458
    %v2488 = vadd.f32 %v2330, %v2460
    %v2489 = vadd.f32 %v2331, %v2462
    %v2490 = vadd.f32 %v2332, %v2464
    %v2491 = vadd.f32 %v2333, %v2466
    %v2492 = vadd.f32 %v2334, %v2468
    %v2494 = vrot.slane %v684, 2
    %2495 = vrot.lane.b32.xlu0 %v2494, 80
    %v2496 = vpop.permute.xlu0 %2495
    %s2497 = vtos %v2496
    %v2498 = vstv %s2497
    %v2500 = vmul.f32 %v2498, %v2179
    %v2501 = vmul.f32 %v2498, %v2180
    %v2502 = vmul.f32 %v2498, %v2181
    %v2503 = vmul.f32 %v2498, %v2182
    %v2504 = vmul.f32 %v2498, %v2183
    %v2505 = vmul.f32 %v2498, %v2184
    %v2506 = vmul.f32 %v2498, %v2185
    %v2507 = vmul.f32 %v2498, %v2186
    %v2508 = vmul.f32 %v2498, %v2187
    %v2509 = vmul.f32 %v2498, %v2188
    %v2510 = vmul.f32 %v2498, %v2189
    %v2511 = vmul.f32 %v2498, %v2190
    %v2512 = vadd.f32 %v2402, %v2500
    %v2513 = vadd.f32 %v2403, %v2501
    %v2514 = vadd.f32 %v2404, %v2502
    %v2515 = vadd.f32 %v2405, %v2503
    %v2516 = vadd.f32 %v2406, %v2504
    %v2517 = vadd.f32 %v2407, %v2505
    %v2518 = vadd.f32 %v2408, %v2506
    %v2519 = vadd.f32 %v2409, %v2507
    %v2520 = vadd.f32 %v2410, %v2508
    %v2521 = vadd.f32 %v2411, %v2509
    %v2522 = vadd.f32 %v2412, %v2510
    %v2523 = vadd.f32 %v2413, %v2511
    %v2525 = vrot.slane %v1441, 3
    %2526 = vrot.lane.b32.xlu0 %v2525, 80
    %v2527 = vpop.permute.xlu0 %2526
    %s2528 = vtos %v2527
    %v2529 = vstv %s2528
    %v2531 = vmul.f32 %v2529, %v2179
    %v2532 = vmul.f32 %v2529, %v2180
    %v2533 = vmul.f32 %v2529, %v2181
    %v2534 = vmul.f32 %v2529, %v2182
    %v2535 = vmul.f32 %v2529, %v2183
    %v2536 = vmul.f32 %v2529, %v2184
    %v2537 = vmul.f32 %v2529, %v2185
    %v2538 = vmul.f32 %v2529, %v2186
    %v2539 = vmul.f32 %v2529, %v2187
    %v2540 = vmul.f32 %v2529, %v2188
    %v2541 = vmul.f32 %v2529, %v2189
    %v2542 = vmul.f32 %v2529, %v2190
    %v2543 = vadd.f32 %v2481, %v2531
    %v2544 = vadd.f32 %v2482, %v2532
    %v2545 = vadd.f32 %v2483, %v2533
    %v2546 = vadd.f32 %v2484, %v2534
    %v2547 = vadd.f32 %v2485, %v2535
    %v2548 = vadd.f32 %v2486, %v2536
    %v2549 = vadd.f32 %v2487, %v2537
    %v2550 = vadd.f32 %v2488, %v2538
    %v2551 = vadd.f32 %v2489, %v2539
    %v2552 = vadd.f32 %v2490, %v2540
    %v2553 = vadd.f32 %v2491, %v2541
    %v2554 = vadd.f32 %v2492, %v2542
    %2555 = vrot.lane.b32.xlu0 %v2342, 127
    %v2556 = vpop.permute.xlu0 %2555
    %2557 = vrot.lane.b32.xlu0 %v2343, 127
    %v2558 = vpop.permute.xlu0 %2557
    %2559 = vrot.lane.b32.xlu0 %v2344, 127
    %v2560 = vpop.permute.xlu0 %2559
    %2561 = vrot.lane.b32.xlu0 %v2345, 127
    %v2562 = vpop.permute.xlu0 %2561
    %2563 = vrot.lane.b32.xlu0 %v2346, 127
    %v2564 = vpop.permute.xlu0 %2563
    %2565 = vrot.lane.b32.xlu0 %v2347, 127
    %v2566 = vpop.permute.xlu0 %2565
    %2567 = vrot.lane.b32.xlu0 %v2348, 127
    %v2568 = vpop.permute.xlu0 %2567
    %2569 = vrot.lane.b32.xlu0 %v2349, 127
    %v2570 = vpop.permute.xlu0 %2569
    %2571 = vrot.lane.b32.xlu0 %v2350, 127
    %v2572 = vpop.permute.xlu0 %2571
    %2573 = vrot.lane.b32.xlu0 %v2351, 127
    %v2574 = vpop.permute.xlu0 %2573
    %2575 = vrot.lane.b32.xlu0 %v2352, 127
    %v2576 = vpop.permute.xlu0 %2575
    %2577 = vrot.lane.b32.xlu0 %v2353, 127
    %v2578 = vpop.permute.xlu0 %2577
    %v2591 = vadd.f32 %v2512, %v2556
    %v2592 = vadd.f32 %v2513, %v2558
    %v2593 = vadd.f32 %v2514, %v2560
    %v2594 = vadd.f32 %v2515, %v2562
    %v2595 = vadd.f32 %v2516, %v2564
    %v2596 = vadd.f32 %v2517, %v2566
    %v2597 = vadd.f32 %v2518, %v2568
    %v2598 = vadd.f32 %v2519, %v2570
    %v2599 = vadd.f32 %v2520, %v2572
    %v2600 = vadd.f32 %v2521, %v2574
    %v2601 = vadd.f32 %v2522, %v2576
    %v2602 = vadd.f32 %v2523, %v2578
    %2603 = vrot.lane.b32.xlu0 %v2421, 127
    %v2604 = vpop.permute.xlu0 %2603
    %2605 = vrot.lane.b32.xlu0 %v2422, 127
    %v2606 = vpop.permute.xlu0 %2605
    %2607 = vrot.lane.b32.xlu0 %v2423, 127
    %v2608 = vpop.permute.xlu0 %2607
    %2609 = vrot.lane.b32.xlu0 %v2424, 127
    %v2610 = vpop.permute.xlu0 %2609
    %2611 = vrot.lane.b32.xlu0 %v2425, 127
    %v2612 = vpop.permute.xlu0 %2611
    %2613 = vrot.lane.b32.xlu0 %v2426, 127
    %v2614 = vpop.permute.xlu0 %2613
    %2615 = vrot.lane.b32.xlu0 %v2427, 127
    %v2616 = vpop.permute.xlu0 %2615
    %2617 = vrot.lane.b32.xlu0 %v2428, 127
    %v2618 = vpop.permute.xlu0 %2617
    %2619 = vrot.lane.b32.xlu0 %v2429, 127
    %v2620 = vpop.permute.xlu0 %2619
    %2621 = vrot.lane.b32.xlu0 %v2430, 127
    %v2622 = vpop.permute.xlu0 %2621
    %2623 = vrot.lane.b32.xlu0 %v2431, 127
    %v2624 = vpop.permute.xlu0 %2623
    %2625 = vrot.lane.b32.xlu0 %v2432, 127
    %v2626 = vpop.permute.xlu0 %2625
    %v2639 = vadd.f32 %v2543, %v2604
    %v2640 = vadd.f32 %v2544, %v2606
    %v2641 = vadd.f32 %v2545, %v2608
    %v2642 = vadd.f32 %v2546, %v2610
    %v2643 = vadd.f32 %v2547, %v2612
    %v2644 = vadd.f32 %v2548, %v2614
    %v2645 = vadd.f32 %v2549, %v2616
    %v2646 = vadd.f32 %v2550, %v2618
    %v2647 = vadd.f32 %v2551, %v2620
    %v2648 = vadd.f32 %v2552, %v2622
    %v2649 = vadd.f32 %v2553, %v2624
    %v2650 = vadd.f32 %v2554, %v2626
    %2651 = vrot.lane.b32.xlu0 %v2191, 126
    %v2652 = vpop.permute.xlu0 %2651
    %2653 = vrot.lane.b32.xlu0 %v2192, 126
    %v2654 = vpop.permute.xlu0 %2653
    %2655 = vrot.lane.b32.xlu0 %v2193, 126
    %v2656 = vpop.permute.xlu0 %2655
    %2657 = vrot.lane.b32.xlu0 %v2194, 126
    %v2658 = vpop.permute.xlu0 %2657
    %2659 = vrot.lane.b32.xlu0 %v2195, 126
    %v2660 = vpop.permute.xlu0 %2659
    %2661 = vrot.lane.b32.xlu0 %v2196, 126
    %v2662 = vpop.permute.xlu0 %2661
    %2663 = vrot.lane.b32.xlu0 %v2197, 126
    %v2664 = vpop.permute.xlu0 %2663
    %2665 = vrot.lane.b32.xlu0 %v2198, 126
    %v2666 = vpop.permute.xlu0 %2665
    %2667 = vrot.lane.b32.xlu0 %v2199, 126
    %v2668 = vpop.permute.xlu0 %2667
    %2669 = vrot.lane.b32.xlu0 %v2200, 126
    %v2670 = vpop.permute.xlu0 %2669
    %2671 = vrot.lane.b32.xlu0 %v2201, 126
    %v2672 = vpop.permute.xlu0 %2671
    %2673 = vrot.lane.b32.xlu0 %v2202, 126
    %v2674 = vpop.permute.xlu0 %2673
    %v2687 = vadd.f32 %v2591, %v2652
    %v2688 = vadd.f32 %v2592, %v2654
    %v2689 = vadd.f32 %v2593, %v2656
    %v2690 = vadd.f32 %v2594, %v2658
    %v2691 = vadd.f32 %v2595, %v2660
    %v2692 = vadd.f32 %v2596, %v2662
    %v2693 = vadd.f32 %v2597, %v2664
    %v2694 = vadd.f32 %v2598, %v2666
    %v2695 = vadd.f32 %v2599, %v2668
    %v2696 = vadd.f32 %v2600, %v2670
    %v2697 = vadd.f32 %v2601, %v2672
    %v2698 = vadd.f32 %v2602, %v2674
    %2699 = vrot.lane.b32.xlu0 %v2263, 126
    %v2700 = vpop.permute.xlu0 %2699
    %2701 = vrot.lane.b32.xlu0 %v2264, 126
    %v2702 = vpop.permute.xlu0 %2701
    %2703 = vrot.lane.b32.xlu0 %v2265, 126
    %v2704 = vpop.permute.xlu0 %2703
    %2705 = vrot.lane.b32.xlu0 %v2266, 126
    %v2706 = vpop.permute.xlu0 %2705
    %2707 = vrot.lane.b32.xlu0 %v2267, 126
    %v2708 = vpop.permute.xlu0 %2707
    %2709 = vrot.lane.b32.xlu0 %v2268, 126
    %v2710 = vpop.permute.xlu0 %2709
    %2711 = vrot.lane.b32.xlu0 %v2269, 126
    %v2712 = vpop.permute.xlu0 %2711
    %2713 = vrot.lane.b32.xlu0 %v2270, 126
    %v2714 = vpop.permute.xlu0 %2713
    %2715 = vrot.lane.b32.xlu0 %v2271, 126
    %v2716 = vpop.permute.xlu0 %2715
    %2717 = vrot.lane.b32.xlu0 %v2272, 126
    %v2718 = vpop.permute.xlu0 %2717
    %2719 = vrot.lane.b32.xlu0 %v2273, 126
    %v2720 = vpop.permute.xlu0 %2719
    %2721 = vrot.lane.b32.xlu0 %v2274, 126
    %v2722 = vpop.permute.xlu0 %2721
    %v2735 = vadd.f32 %v2639, %v2700
    %v2736 = vadd.f32 %v2640, %v2702
    %v2737 = vadd.f32 %v2641, %v2704
    %v2738 = vadd.f32 %v2642, %v2706
    %v2739 = vadd.f32 %v2643, %v2708
    %v2740 = vadd.f32 %v2644, %v2710
    %v2741 = vadd.f32 %v2645, %v2712
    %v2742 = vadd.f32 %v2646, %v2714
    %v2743 = vadd.f32 %v2647, %v2716
    %v2744 = vadd.f32 %v2648, %v2718
    %v2745 = vadd.f32 %v2649, %v2720
    %v2746 = vadd.f32 %v2650, %v2722
    %v2747 = vld [vmem:[%s1 + $0x3] sm:$0xff]
    %v2748 = vld [vmem:[%s1 + $0xb] sm:$0xff]
    %v2749 = vld [vmem:[%s1 + $0x1b] sm:$0xff]
    %v2750 = vld [vmem:[%s1 + $0x23] sm:$0xff]
    %v2751 = vld [vmem:[%s1 + $0x33] sm:$0xff]
    %v2752 = vld [vmem:[%s1 + $0x3b] sm:$0xff]
    %v2753 = vld [vmem:[%s1 + $0x4b] sm:$0xff]
    %v2754 = vld [vmem:[%s1 + $0x53] sm:$0xff]
    %v2755 = vld [vmem:[%s1 + $0x63] sm:$0xff]
    %v2756 = vld [vmem:[%s1 + $0x6b] sm:$0xff]
    %v2757 = vld [vmem:[%s1 + $0x7b] sm:$0xff]
    %v2758 = vld [vmem:[%s1 + $0x83] sm:$0xff]
    %v2759 = vmul.f32 %v1564, %v2747
    %v2760 = vmul.f32 %v1564, %v2748
    %v2761 = vmul.f32 %v1564, %v2749
    %v2762 = vmul.f32 %v1564, %v2750
    %v2763 = vmul.f32 %v1564, %v2751
    %v2764 = vmul.f32 %v1564, %v2752
    %v2765 = vmul.f32 %v1564, %v2753
    %v2766 = vmul.f32 %v1564, %v2754
    %v2767 = vmul.f32 %v1564, %v2755
    %v2768 = vmul.f32 %v1564, %v2756
    %v2769 = vmul.f32 %v1564, %v2757
    %v2770 = vmul.f32 %v1564, %v2758
    %2783 = vrot.lane.b32.xlu0 %v2759, 3
    %v2784 = vpop.permute.xlu0 %2783
    %2785 = vrot.lane.b32.xlu0 %v2760, 3
    %v2786 = vpop.permute.xlu0 %2785
    %2787 = vrot.lane.b32.xlu0 %v2761, 3
    %v2788 = vpop.permute.xlu0 %2787
    %2789 = vrot.lane.b32.xlu0 %v2762, 3
    %v2790 = vpop.permute.xlu0 %2789
    %2791 = vrot.lane.b32.xlu0 %v2763, 3
    %v2792 = vpop.permute.xlu0 %2791
    %2793 = vrot.lane.b32.xlu0 %v2764, 3
    %v2794 = vpop.permute.xlu0 %2793
    %2795 = vrot.lane.b32.xlu0 %v2765, 3
    %v2796 = vpop.permute.xlu0 %2795
    %2797 = vrot.lane.b32.xlu0 %v2766, 3
    %v2798 = vpop.permute.xlu0 %2797
    %2799 = vrot.lane.b32.xlu0 %v2767, 3
    %v2800 = vpop.permute.xlu0 %2799
    %2801 = vrot.lane.b32.xlu0 %v2768, 3
    %v2802 = vpop.permute.xlu0 %2801
    %2803 = vrot.lane.b32.xlu0 %v2769, 3
    %v2804 = vpop.permute.xlu0 %2803
    %2805 = vrot.lane.b32.xlu0 %v2770, 3
    %v2806 = vpop.permute.xlu0 %2805
    %v2819 = vadd.f32 %v2687, %v2784
    %v2820 = vadd.f32 %v2688, %v2786
    %v2821 = vadd.f32 %v2689, %v2788
    %v2822 = vadd.f32 %v2690, %v2790
    %v2823 = vadd.f32 %v2691, %v2792
    %v2824 = vadd.f32 %v2692, %v2794
    %v2825 = vadd.f32 %v2693, %v2796
    %v2826 = vadd.f32 %v2694, %v2798
    %v2827 = vadd.f32 %v2695, %v2800
    %v2828 = vadd.f32 %v2696, %v2802
    %v2829 = vadd.f32 %v2697, %v2804
    %v2830 = vadd.f32 %v2698, %v2806
    %v2831 = vmul.f32 %v1583, %v2747
    %v2832 = vmul.f32 %v1583, %v2748
    %v2833 = vmul.f32 %v1583, %v2749
    %v2834 = vmul.f32 %v1583, %v2750
    %v2835 = vmul.f32 %v1583, %v2751
    %v2836 = vmul.f32 %v1583, %v2752
    %v2837 = vmul.f32 %v1583, %v2753
    %v2838 = vmul.f32 %v1583, %v2754
    %v2839 = vmul.f32 %v1583, %v2755
    %v2840 = vmul.f32 %v1583, %v2756
    %v2841 = vmul.f32 %v1583, %v2757
    %v2842 = vmul.f32 %v1583, %v2758
    %2855 = vrot.lane.b32.xlu0 %v2831, 3
    %v2856 = vpop.permute.xlu0 %2855
    %2857 = vrot.lane.b32.xlu0 %v2832, 3
    %v2858 = vpop.permute.xlu0 %2857
    %2859 = vrot.lane.b32.xlu0 %v2833, 3
    %v2860 = vpop.permute.xlu0 %2859
    %2861 = vrot.lane.b32.xlu0 %v2834, 3
    %v2862 = vpop.permute.xlu0 %2861
    %2863 = vrot.lane.b32.xlu0 %v2835, 3
    %v2864 = vpop.permute.xlu0 %2863
    %2865 = vrot.lane.b32.xlu0 %v2836, 3
    %v2866 = vpop.permute.xlu0 %2865
    %2867 = vrot.lane.b32.xlu0 %v2837, 3
    %v2868 = vpop.permute.xlu0 %2867
    %2869 = vrot.lane.b32.xlu0 %v2838, 3
    %v2870 = vpop.permute.xlu0 %2869
    %2871 = vrot.lane.b32.xlu0 %v2839, 3
    %v2872 = vpop.permute.xlu0 %2871
    %2873 = vrot.lane.b32.xlu0 %v2840, 3
    %v2874 = vpop.permute.xlu0 %2873
    %2875 = vrot.lane.b32.xlu0 %v2841, 3
    %v2876 = vpop.permute.xlu0 %2875
    %2877 = vrot.lane.b32.xlu0 %v2842, 3
    %v2878 = vpop.permute.xlu0 %2877
    %v2891 = vadd.f32 %v2735, %v2856
    %v2892 = vadd.f32 %v2736, %v2858
    %v2893 = vadd.f32 %v2737, %v2860
    %v2894 = vadd.f32 %v2738, %v2862
    %v2895 = vadd.f32 %v2739, %v2864
    %v2896 = vadd.f32 %v2740, %v2866
    %v2897 = vadd.f32 %v2741, %v2868
    %v2898 = vadd.f32 %v2742, %v2870
    %v2899 = vadd.f32 %v2743, %v2872
    %v2900 = vadd.f32 %v2744, %v2874
    %v2901 = vadd.f32 %v2745, %v2876
    %v2902 = vadd.f32 %v2746, %v2878
    %v2903 = vmul.f32 %v1930, %v2747
    %v2904 = vmul.f32 %v1930, %v2748
    %v2905 = vmul.f32 %v1930, %v2749
    %v2906 = vmul.f32 %v1930, %v2750
    %v2907 = vmul.f32 %v1930, %v2751
    %v2908 = vmul.f32 %v1930, %v2752
    %v2909 = vmul.f32 %v1930, %v2753
    %v2910 = vmul.f32 %v1930, %v2754
    %v2911 = vmul.f32 %v1930, %v2755
    %v2912 = vmul.f32 %v1930, %v2756
    %v2913 = vmul.f32 %v1930, %v2757
    %v2914 = vmul.f32 %v1930, %v2758
    %2927 = vrot.lane.b32.xlu0 %v2903, 2
    %v2928 = vpop.permute.xlu0 %2927
    %2929 = vrot.lane.b32.xlu0 %v2904, 2
    %v2930 = vpop.permute.xlu0 %2929
    %2931 = vrot.lane.b32.xlu0 %v2905, 2
    %v2932 = vpop.permute.xlu0 %2931
    %2933 = vrot.lane.b32.xlu0 %v2906, 2
    %v2934 = vpop.permute.xlu0 %2933
    %2935 = vrot.lane.b32.xlu0 %v2907, 2
    %v2936 = vpop.permute.xlu0 %2935
    %2937 = vrot.lane.b32.xlu0 %v2908, 2
    %v2938 = vpop.permute.xlu0 %2937
    %2939 = vrot.lane.b32.xlu0 %v2909, 2
    %v2940 = vpop.permute.xlu0 %2939
    %2941 = vrot.lane.b32.xlu0 %v2910, 2
    %v2942 = vpop.permute.xlu0 %2941
    %2943 = vrot.lane.b32.xlu0 %v2911, 2
    %v2944 = vpop.permute.xlu0 %2943
    %2945 = vrot.lane.b32.xlu0 %v2912, 2
    %v2946 = vpop.permute.xlu0 %2945
    %2947 = vrot.lane.b32.xlu0 %v2913, 2
    %v2948 = vpop.permute.xlu0 %2947
    %2949 = vrot.lane.b32.xlu0 %v2914, 2
    %v2950 = vpop.permute.xlu0 %2949
    %v2963 = vadd.f32 %v2819, %v2928
    %v2964 = vadd.f32 %v2820, %v2930
    %v2965 = vadd.f32 %v2821, %v2932
    %v2966 = vadd.f32 %v2822, %v2934
    %v2967 = vadd.f32 %v2823, %v2936
    %v2968 = vadd.f32 %v2824, %v2938
    %v2969 = vadd.f32 %v2825, %v2940
    %v2970 = vadd.f32 %v2826, %v2942
    %v2971 = vadd.f32 %v2827, %v2944
    %v2972 = vadd.f32 %v2828, %v2946
    %v2973 = vadd.f32 %v2829, %v2948
    %v2974 = vadd.f32 %v2830, %v2950
    %v2975 = vmul.f32 %v1961, %v2747
    %v2976 = vmul.f32 %v1961, %v2748
    %v2977 = vmul.f32 %v1961, %v2749
    %v2978 = vmul.f32 %v1961, %v2750
    %v2979 = vmul.f32 %v1961, %v2751
    %v2980 = vmul.f32 %v1961, %v2752
    %v2981 = vmul.f32 %v1961, %v2753
    %v2982 = vmul.f32 %v1961, %v2754
    %v2983 = vmul.f32 %v1961, %v2755
    %v2984 = vmul.f32 %v1961, %v2756
    %v2985 = vmul.f32 %v1961, %v2757
    %v2986 = vmul.f32 %v1961, %v2758
    %2999 = vrot.lane.b32.xlu0 %v2975, 2
    %v3000 = vpop.permute.xlu0 %2999
    %3001 = vrot.lane.b32.xlu0 %v2976, 2
    %v3002 = vpop.permute.xlu0 %3001
    %3003 = vrot.lane.b32.xlu0 %v2977, 2
    %v3004 = vpop.permute.xlu0 %3003
    %3005 = vrot.lane.b32.xlu0 %v2978, 2
    %v3006 = vpop.permute.xlu0 %3005
    %3007 = vrot.lane.b32.xlu0 %v2979, 2
    %v3008 = vpop.permute.xlu0 %3007
    %3009 = vrot.lane.b32.xlu0 %v2980, 2
    %v3010 = vpop.permute.xlu0 %3009
    %3011 = vrot.lane.b32.xlu0 %v2981, 2
    %v3012 = vpop.permute.xlu0 %3011
    %3013 = vrot.lane.b32.xlu0 %v2982, 2
    %v3014 = vpop.permute.xlu0 %3013
    %3015 = vrot.lane.b32.xlu0 %v2983, 2
    %v3016 = vpop.permute.xlu0 %3015
    %3017 = vrot.lane.b32.xlu0 %v2984, 2
    %v3018 = vpop.permute.xlu0 %3017
    %3019 = vrot.lane.b32.xlu0 %v2985, 2
    %v3020 = vpop.permute.xlu0 %3019
    %3021 = vrot.lane.b32.xlu0 %v2986, 2
    %v3022 = vpop.permute.xlu0 %3021
    %v3035 = vadd.f32 %v2891, %v3000
    %v3036 = vadd.f32 %v2892, %v3002
    %v3037 = vadd.f32 %v2893, %v3004
    %v3038 = vadd.f32 %v2894, %v3006
    %v3039 = vadd.f32 %v2895, %v3008
    %v3040 = vadd.f32 %v2896, %v3010
    %v3041 = vadd.f32 %v2897, %v3012
    %v3042 = vadd.f32 %v2898, %v3014
    %v3043 = vadd.f32 %v2899, %v3016
    %v3044 = vadd.f32 %v2900, %v3018
    %v3045 = vadd.f32 %v2901, %v3020
    %v3046 = vadd.f32 %v2902, %v3022
    %v3047 = vmul.f32 %v2498, %v2747
    %v3048 = vmul.f32 %v2498, %v2748
    %v3049 = vmul.f32 %v2498, %v2749
    %v3050 = vmul.f32 %v2498, %v2750
    %v3051 = vmul.f32 %v2498, %v2751
    %v3052 = vmul.f32 %v2498, %v2752
    %v3053 = vmul.f32 %v2498, %v2753
    %v3054 = vmul.f32 %v2498, %v2754
    %v3055 = vmul.f32 %v2498, %v2755
    %v3056 = vmul.f32 %v2498, %v2756
    %v3057 = vmul.f32 %v2498, %v2757
    %v3058 = vmul.f32 %v2498, %v2758
    %3071 = vrot.lane.b32.xlu0 %v3047, 1
    %v3072 = vpop.permute.xlu0 %3071
    %3073 = vrot.lane.b32.xlu0 %v3048, 1
    %v3074 = vpop.permute.xlu0 %3073
    %3075 = vrot.lane.b32.xlu0 %v3049, 1
    %v3076 = vpop.permute.xlu0 %3075
    %3077 = vrot.lane.b32.xlu0 %v3050, 1
    %v3078 = vpop.permute.xlu0 %3077
    %3079 = vrot.lane.b32.xlu0 %v3051, 1
    %v3080 = vpop.permute.xlu0 %3079
    %3081 = vrot.lane.b32.xlu0 %v3052, 1
    %v3082 = vpop.permute.xlu0 %3081
    %3083 = vrot.lane.b32.xlu0 %v3053, 1
    %v3084 = vpop.permute.xlu0 %3083
    %3085 = vrot.lane.b32.xlu0 %v3054, 1
    %v3086 = vpop.permute.xlu0 %3085
    %3087 = vrot.lane.b32.xlu0 %v3055, 1
    %v3088 = vpop.permute.xlu0 %3087
    %3089 = vrot.lane.b32.xlu0 %v3056, 1
    %v3090 = vpop.permute.xlu0 %3089
    %3091 = vrot.lane.b32.xlu0 %v3057, 1
    %v3092 = vpop.permute.xlu0 %3091
    %3093 = vrot.lane.b32.xlu0 %v3058, 1
    %v3094 = vpop.permute.xlu0 %3093
    %v3107 = vadd.f32 %v2963, %v3072
    %v3108 = vadd.f32 %v2964, %v3074
    %v3109 = vadd.f32 %v2965, %v3076
    %v3110 = vadd.f32 %v2966, %v3078
    %v3111 = vadd.f32 %v2967, %v3080
    %v3112 = vadd.f32 %v2968, %v3082
    %v3113 = vadd.f32 %v2969, %v3084
    %v3114 = vadd.f32 %v2970, %v3086
    %v3115 = vadd.f32 %v2971, %v3088
    %v3116 = vadd.f32 %v2972, %v3090
    %v3117 = vadd.f32 %v2973, %v3092
    %v3118 = vadd.f32 %v2974, %v3094
    %v3119 = vmul.f32 %v2529, %v2747
    %v3120 = vmul.f32 %v2529, %v2748
    %v3121 = vmul.f32 %v2529, %v2749
    %v3122 = vmul.f32 %v2529, %v2750
    %v3123 = vmul.f32 %v2529, %v2751
    %v3124 = vmul.f32 %v2529, %v2752
    %v3125 = vmul.f32 %v2529, %v2753
    %v3126 = vmul.f32 %v2529, %v2754
    %v3127 = vmul.f32 %v2529, %v2755
    %v3128 = vmul.f32 %v2529, %v2756
    %v3129 = vmul.f32 %v2529, %v2757
    %v3130 = vmul.f32 %v2529, %v2758
    %3143 = vrot.lane.b32.xlu0 %v3119, 1
    %v3144 = vpop.permute.xlu0 %3143
    %3145 = vrot.lane.b32.xlu0 %v3120, 1
    %v3146 = vpop.permute.xlu0 %3145
    %3147 = vrot.lane.b32.xlu0 %v3121, 1
    %v3148 = vpop.permute.xlu0 %3147
    %3149 = vrot.lane.b32.xlu0 %v3122, 1
    %v3150 = vpop.permute.xlu0 %3149
    %3151 = vrot.lane.b32.xlu0 %v3123, 1
    %v3152 = vpop.permute.xlu0 %3151
    %3153 = vrot.lane.b32.xlu0 %v3124, 1
    %v3154 = vpop.permute.xlu0 %3153
    %3155 = vrot.lane.b32.xlu0 %v3125, 1
    %v3156 = vpop.permute.xlu0 %3155
    %3157 = vrot.lane.b32.xlu0 %v3126, 1
    %v3158 = vpop.permute.xlu0 %3157
    %3159 = vrot.lane.b32.xlu0 %v3127, 1
    %v3160 = vpop.permute.xlu0 %3159
    %3161 = vrot.lane.b32.xlu0 %v3128, 1
    %v3162 = vpop.permute.xlu0 %3161
    %3163 = vrot.lane.b32.xlu0 %v3129, 1
    %v3164 = vpop.permute.xlu0 %3163
    %3165 = vrot.lane.b32.xlu0 %v3130, 1
    %v3166 = vpop.permute.xlu0 %3165
    %v3179 = vadd.f32 %v3035, %v3144
    %v3180 = vadd.f32 %v3036, %v3146
    %v3181 = vadd.f32 %v3037, %v3148
    %v3182 = vadd.f32 %v3038, %v3150
    %v3183 = vadd.f32 %v3039, %v3152
    %v3184 = vadd.f32 %v3040, %v3154
    %v3185 = vadd.f32 %v3041, %v3156
    %v3186 = vadd.f32 %v3042, %v3158
    %v3187 = vadd.f32 %v3043, %v3160
    %v3188 = vadd.f32 %v3044, %v3162
    %v3189 = vadd.f32 %v3045, %v3164
    %v3190 = vadd.f32 %v3046, %v3166
    %v3192 = vrot.slane %v789, 2
    %3193 = vrot.lane.b32.xlu0 %v3192, 80
    %v3194 = vpop.permute.xlu0 %3193
    %s3195 = vtos %v3194
    %v3196 = vstv %s3195
    %v3198 = vmul.f32 %v3196, %v2747
    %v3199 = vmul.f32 %v3196, %v2748
    %v3200 = vmul.f32 %v3196, %v2749
    %v3201 = vmul.f32 %v3196, %v2750
    %v3202 = vmul.f32 %v3196, %v2751
    %v3203 = vmul.f32 %v3196, %v2752
    %v3204 = vmul.f32 %v3196, %v2753
    %v3205 = vmul.f32 %v3196, %v2754
    %v3206 = vmul.f32 %v3196, %v2755
    %v3207 = vmul.f32 %v3196, %v2756
    %v3208 = vmul.f32 %v3196, %v2757
    %v3209 = vmul.f32 %v3196, %v2758
    %v3210 = vadd.f32 %v3107, %v3198
    %v3211 = vadd.f32 %v3108, %v3199
    %v3212 = vadd.f32 %v3109, %v3200
    %v3213 = vadd.f32 %v3110, %v3201
    %v3214 = vadd.f32 %v3111, %v3202
    %v3215 = vadd.f32 %v3112, %v3203
    %v3216 = vadd.f32 %v3113, %v3204
    %v3217 = vadd.f32 %v3114, %v3205
    %v3218 = vadd.f32 %v3115, %v3206
    %v3219 = vadd.f32 %v3116, %v3207
    %v3220 = vadd.f32 %v3117, %v3208
    %v3221 = vadd.f32 %v3118, %v3209
    %v3223 = vrot.slane %v1546, 3
    %3224 = vrot.lane.b32.xlu0 %v3223, 80
    %v3225 = vpop.permute.xlu0 %3224
    %s3226 = vtos %v3225
    %v3227 = vstv %s3226
    %v3229 = vmul.f32 %v3227, %v2747
    %v3230 = vmul.f32 %v3227, %v2748
    %v3231 = vmul.f32 %v3227, %v2749
    %v3232 = vmul.f32 %v3227, %v2750
    %v3233 = vmul.f32 %v3227, %v2751
    %v3234 = vmul.f32 %v3227, %v2752
    %v3235 = vmul.f32 %v3227, %v2753
    %v3236 = vmul.f32 %v3227, %v2754
    %v3237 = vmul.f32 %v3227, %v2755
    %v3238 = vmul.f32 %v3227, %v2756
    %v3239 = vmul.f32 %v3227, %v2757
    %v3240 = vmul.f32 %v3227, %v2758
    %v3241 = vadd.f32 %v3179, %v3229
    %v3242 = vadd.f32 %v3180, %v3230
    %v3243 = vadd.f32 %v3181, %v3231
    %v3244 = vadd.f32 %v3182, %v3232
    %v3245 = vadd.f32 %v3183, %v3233
    %v3246 = vadd.f32 %v3184, %v3234
    %v3247 = vadd.f32 %v3185, %v3235
    %v3248 = vadd.f32 %v3186, %v3236
    %v3249 = vadd.f32 %v3187, %v3237
    %v3250 = vadd.f32 %v3188, %v3238
    %v3251 = vadd.f32 %v3189, %v3239
    %v3252 = vadd.f32 %v3190, %v3240
    %3253 = vrot.lane.b32.xlu0 %v3047, 127
    %v3254 = vpop.permute.xlu0 %3253
    %3255 = vrot.lane.b32.xlu0 %v3048, 127
    %v3256 = vpop.permute.xlu0 %3255
    %3257 = vrot.lane.b32.xlu0 %v3049, 127
    %v3258 = vpop.permute.xlu0 %3257
    %3259 = vrot.lane.b32.xlu0 %v3050, 127
    %v3260 = vpop.permute.xlu0 %3259
    %3261 = vrot.lane.b32.xlu0 %v3051, 127
    %v3262 = vpop.permute.xlu0 %3261
    %3263 = vrot.lane.b32.xlu0 %v3052, 127
    %v3264 = vpop.permute.xlu0 %3263
    %3265 = vrot.lane.b32.xlu0 %v3053, 127
    %v3266 = vpop.permute.xlu0 %3265
    %3267 = vrot.lane.b32.xlu0 %v3054, 127
    %v3268 = vpop.permute.xlu0 %3267
    %3269 = vrot.lane.b32.xlu0 %v3055, 127
    %v3270 = vpop.permute.xlu0 %3269
    %3271 = vrot.lane.b32.xlu0 %v3056, 127
    %v3272 = vpop.permute.xlu0 %3271
    %3273 = vrot.lane.b32.xlu0 %v3057, 127
    %v3274 = vpop.permute.xlu0 %3273
    %3275 = vrot.lane.b32.xlu0 %v3058, 127
    %v3276 = vpop.permute.xlu0 %3275
    %v3289 = vadd.f32 %v3210, %v3254
    %v3290 = vadd.f32 %v3211, %v3256
    %v3291 = vadd.f32 %v3212, %v3258
    %v3292 = vadd.f32 %v3213, %v3260
    %v3293 = vadd.f32 %v3214, %v3262
    %v3294 = vadd.f32 %v3215, %v3264
    %v3295 = vadd.f32 %v3216, %v3266
    %v3296 = vadd.f32 %v3217, %v3268
    %v3297 = vadd.f32 %v3218, %v3270
    %v3298 = vadd.f32 %v3219, %v3272
    %v3299 = vadd.f32 %v3220, %v3274
    %v3300 = vadd.f32 %v3221, %v3276
    %3301 = vrot.lane.b32.xlu0 %v3119, 127
    %v3302 = vpop.permute.xlu0 %3301
    %3303 = vrot.lane.b32.xlu0 %v3120, 127
    %v3304 = vpop.permute.xlu0 %3303
    %3305 = vrot.lane.b32.xlu0 %v3121, 127
    %v3306 = vpop.permute.xlu0 %3305
    %3307 = vrot.lane.b32.xlu0 %v3122, 127
    %v3308 = vpop.permute.xlu0 %3307
    %3309 = vrot.lane.b32.xlu0 %v3123, 127
    %v3310 = vpop.permute.xlu0 %3309
    %3311 = vrot.lane.b32.xlu0 %v3124, 127
    %v3312 = vpop.permute.xlu0 %3311
    %3313 = vrot.lane.b32.xlu0 %v3125, 127
    %v3314 = vpop.permute.xlu0 %3313
    %3315 = vrot.lane.b32.xlu0 %v3126, 127
    %v3316 = vpop.permute.xlu0 %3315
    %3317 = vrot.lane.b32.xlu0 %v3127, 127
    %v3318 = vpop.permute.xlu0 %3317
    %3319 = vrot.lane.b32.xlu0 %v3128, 127
    %v3320 = vpop.permute.xlu0 %3319
    %3321 = vrot.lane.b32.xlu0 %v3129, 127
    %v3322 = vpop.permute.xlu0 %3321
    %3323 = vrot.lane.b32.xlu0 %v3130, 127
    %v3324 = vpop.permute.xlu0 %3323
    %v3337 = vadd.f32 %v3241, %v3302
    %v3338 = vadd.f32 %v3242, %v3304
    %v3339 = vadd.f32 %v3243, %v3306
    %v3340 = vadd.f32 %v3244, %v3308
    %v3341 = vadd.f32 %v3245, %v3310
    %v3342 = vadd.f32 %v3246, %v3312
    %v3343 = vadd.f32 %v3247, %v3314
    %v3344 = vadd.f32 %v3248, %v3316
    %v3345 = vadd.f32 %v3249, %v3318
    %v3346 = vadd.f32 %v3250, %v3320
    %v3347 = vadd.f32 %v3251, %v3322
    %v3348 = vadd.f32 %v3252, %v3324
    %3349 = vrot.lane.b32.xlu0 %v2903, 126
    %v3350 = vpop.permute.xlu0 %3349
    %3351 = vrot.lane.b32.xlu0 %v2904, 126
    %v3352 = vpop.permute.xlu0 %3351
    %3353 = vrot.lane.b32.xlu0 %v2905, 126
    %v3354 = vpop.permute.xlu0 %3353
    %3355 = vrot.lane.b32.xlu0 %v2906, 126
    %v3356 = vpop.permute.xlu0 %3355
    %3357 = vrot.lane.b32.xlu0 %v2907, 126
    %v3358 = vpop.permute.xlu0 %3357
    %3359 = vrot.lane.b32.xlu0 %v2908, 126
    %v3360 = vpop.permute.xlu0 %3359
    %3361 = vrot.lane.b32.xlu0 %v2909, 126
    %v3362 = vpop.permute.xlu0 %3361
    %3363 = vrot.lane.b32.xlu0 %v2910, 126
    %v3364 = vpop.permute.xlu0 %3363
    %3365 = vrot.lane.b32.xlu0 %v2911, 126
    %v3366 = vpop.permute.xlu0 %3365
    %3367 = vrot.lane.b32.xlu0 %v2912, 126
    %v3368 = vpop.permute.xlu0 %3367
    %3369 = vrot.lane.b32.xlu0 %v2913, 126
    %v3370 = vpop.permute.xlu0 %3369
    %3371 = vrot.lane.b32.xlu0 %v2914, 126
    %v3372 = vpop.permute.xlu0 %3371
    %v3385 = vadd.f32 %v3289, %v3350
    %v3386 = vadd.f32 %v3290, %v3352
    %v3387 = vadd.f32 %v3291, %v3354
    %v3388 = vadd.f32 %v3292, %v3356
    %v3389 = vadd.f32 %v3293, %v3358
    %v3390 = vadd.f32 %v3294, %v3360
    %v3391 = vadd.f32 %v3295, %v3362
    %v3392 = vadd.f32 %v3296, %v3364
    %v3393 = vadd.f32 %v3297, %v3366
    %v3394 = vadd.f32 %v3298, %v3368
    %v3395 = vadd.f32 %v3299, %v3370
    %v3396 = vadd.f32 %v3300, %v3372
    %3397 = vrot.lane.b32.xlu0 %v2975, 126
    %v3398 = vpop.permute.xlu0 %3397
    %3399 = vrot.lane.b32.xlu0 %v2976, 126
    %v3400 = vpop.permute.xlu0 %3399
    %3401 = vrot.lane.b32.xlu0 %v2977, 126
    %v3402 = vpop.permute.xlu0 %3401
    %3403 = vrot.lane.b32.xlu0 %v2978, 126
    %v3404 = vpop.permute.xlu0 %3403
    %3405 = vrot.lane.b32.xlu0 %v2979, 126
    %v3406 = vpop.permute.xlu0 %3405
    %3407 = vrot.lane.b32.xlu0 %v2980, 126
    %v3408 = vpop.permute.xlu0 %3407
    %3409 = vrot.lane.b32.xlu0 %v2981, 126
    %v3410 = vpop.permute.xlu0 %3409
    %3411 = vrot.lane.b32.xlu0 %v2982, 126
    %v3412 = vpop.permute.xlu0 %3411
    %3413 = vrot.lane.b32.xlu0 %v2983, 126
    %v3414 = vpop.permute.xlu0 %3413
    %3415 = vrot.lane.b32.xlu0 %v2984, 126
    %v3416 = vpop.permute.xlu0 %3415
    %3417 = vrot.lane.b32.xlu0 %v2985, 126
    %v3418 = vpop.permute.xlu0 %3417
    %3419 = vrot.lane.b32.xlu0 %v2986, 126
    %v3420 = vpop.permute.xlu0 %3419
    %v3433 = vadd.f32 %v3337, %v3398
    %v3434 = vadd.f32 %v3338, %v3400
    %v3435 = vadd.f32 %v3339, %v3402
    %v3436 = vadd.f32 %v3340, %v3404
    %v3437 = vadd.f32 %v3341, %v3406
    %v3438 = vadd.f32 %v3342, %v3408
    %v3439 = vadd.f32 %v3343, %v3410
    %v3440 = vadd.f32 %v3344, %v3412
    %v3441 = vadd.f32 %v3345, %v3414
    %v3442 = vadd.f32 %v3346, %v3416
    %v3443 = vadd.f32 %v3347, %v3418
    %v3444 = vadd.f32 %v3348, %v3420
    %3445 = vrot.lane.b32.xlu0 %v2759, 125
    %v3446 = vpop.permute.xlu0 %3445
    %3447 = vrot.lane.b32.xlu0 %v2760, 125
    %v3448 = vpop.permute.xlu0 %3447
    %3449 = vrot.lane.b32.xlu0 %v2761, 125
    %v3450 = vpop.permute.xlu0 %3449
    %3451 = vrot.lane.b32.xlu0 %v2762, 125
    %v3452 = vpop.permute.xlu0 %3451
    %3453 = vrot.lane.b32.xlu0 %v2763, 125
    %v3454 = vpop.permute.xlu0 %3453
    %3455 = vrot.lane.b32.xlu0 %v2764, 125
    %v3456 = vpop.permute.xlu0 %3455
    %3457 = vrot.lane.b32.xlu0 %v2765, 125
    %v3458 = vpop.permute.xlu0 %3457
    %3459 = vrot.lane.b32.xlu0 %v2766, 125
    %v3460 = vpop.permute.xlu0 %3459
    %3461 = vrot.lane.b32.xlu0 %v2767, 125
    %v3462 = vpop.permute.xlu0 %3461
    %3463 = vrot.lane.b32.xlu0 %v2768, 125
    %v3464 = vpop.permute.xlu0 %3463
    %3465 = vrot.lane.b32.xlu0 %v2769, 125
    %v3466 = vpop.permute.xlu0 %3465
    %3467 = vrot.lane.b32.xlu0 %v2770, 125
    %v3468 = vpop.permute.xlu0 %3467
    %v3481 = vadd.f32 %v3385, %v3446
    %v3482 = vadd.f32 %v3386, %v3448
    %v3483 = vadd.f32 %v3387, %v3450
    %v3484 = vadd.f32 %v3388, %v3452
    %v3485 = vadd.f32 %v3389, %v3454
    %v3486 = vadd.f32 %v3390, %v3456
    %v3487 = vadd.f32 %v3391, %v3458
    %v3488 = vadd.f32 %v3392, %v3460
    %v3489 = vadd.f32 %v3393, %v3462
    %v3490 = vadd.f32 %v3394, %v3464
    %v3491 = vadd.f32 %v3395, %v3466
    %v3492 = vadd.f32 %v3396, %v3468
    %3493 = vrot.lane.b32.xlu0 %v2831, 125
    %v3494 = vpop.permute.xlu0 %3493
    %3495 = vrot.lane.b32.xlu0 %v2832, 125
    %v3496 = vpop.permute.xlu0 %3495
    %3497 = vrot.lane.b32.xlu0 %v2833, 125
    %v3498 = vpop.permute.xlu0 %3497
    %3499 = vrot.lane.b32.xlu0 %v2834, 125
    %v3500 = vpop.permute.xlu0 %3499
    %3501 = vrot.lane.b32.xlu0 %v2835, 125
    %v3502 = vpop.permute.xlu0 %3501
    %3503 = vrot.lane.b32.xlu0 %v2836, 125
    %v3504 = vpop.permute.xlu0 %3503
    %3505 = vrot.lane.b32.xlu0 %v2837, 125
    %v3506 = vpop.permute.xlu0 %3505
    %3507 = vrot.lane.b32.xlu0 %v2838, 125
    %v3508 = vpop.permute.xlu0 %3507
    %3509 = vrot.lane.b32.xlu0 %v2839, 125
    %v3510 = vpop.permute.xlu0 %3509
    %3511 = vrot.lane.b32.xlu0 %v2840, 125
    %v3512 = vpop.permute.xlu0 %3511
    %3513 = vrot.lane.b32.xlu0 %v2841, 125
    %v3514 = vpop.permute.xlu0 %3513
    %3515 = vrot.lane.b32.xlu0 %v2842, 125
    %v3516 = vpop.permute.xlu0 %3515
    %v3529 = vadd.f32 %v3433, %v3494
    %v3530 = vadd.f32 %v3434, %v3496
    %v3531 = vadd.f32 %v3435, %v3498
    %v3532 = vadd.f32 %v3436, %v3500
    %v3533 = vadd.f32 %v3437, %v3502
    %v3534 = vadd.f32 %v3438, %v3504
    %v3535 = vadd.f32 %v3439, %v3506
    %v3536 = vadd.f32 %v3440, %v3508
    %v3537 = vadd.f32 %v3441, %v3510
    %v3538 = vadd.f32 %v3442, %v3512
    %v3539 = vadd.f32 %v3443, %v3514
    %v3540 = vadd.f32 %v3444, %v3516
    %v3541 = vld [vmem:[%s1 + $0x4] sm:$0xff]
    %v3542 = vld [vmem:[%s1 + $0xc] sm:$0xff]
    %v3543 = vld [vmem:[%s1 + $0x1c] sm:$0xff]
    %v3544 = vld [vmem:[%s1 + $0x24] sm:$0xff]
    %v3545 = vld [vmem:[%s1 + $0x34] sm:$0xff]
    %v3546 = vld [vmem:[%s1 + $0x3c] sm:$0xff]
    %v3547 = vld [vmem:[%s1 + $0x4c] sm:$0xff]
    %v3548 = vld [vmem:[%s1 + $0x54] sm:$0xff]
    %v3549 = vld [vmem:[%s1 + $0x64] sm:$0xff]
    %v3550 = vld [vmem:[%s1 + $0x6c] sm:$0xff]
    %v3551 = vld [vmem:[%s1 + $0x7c] sm:$0xff]
    %v3552 = vld [vmem:[%s1 + $0x84] sm:$0xff]
    %v3553 = vmul.f32 %v1772, %v3541
    %v3554 = vmul.f32 %v1772, %v3542
    %v3555 = vmul.f32 %v1772, %v3543
    %v3556 = vmul.f32 %v1772, %v3544
    %v3557 = vmul.f32 %v1772, %v3545
    %v3558 = vmul.f32 %v1772, %v3546
    %v3559 = vmul.f32 %v1772, %v3547
    %v3560 = vmul.f32 %v1772, %v3548
    %v3561 = vmul.f32 %v1772, %v3549
    %v3562 = vmul.f32 %v1772, %v3550
    %v3563 = vmul.f32 %v1772, %v3551
    %v3564 = vmul.f32 %v1772, %v3552
    %3577 = vrot.lane.b32.xlu0 %v3553, 2
    %v3578 = vpop.permute.xlu0 %3577
    %3579 = vrot.lane.b32.xlu0 %v3554, 2
    %v3580 = vpop.permute.xlu0 %3579
    %3581 = vrot.lane.b32.xlu0 %v3555, 2
    %v3582 = vpop.permute.xlu0 %3581
    %3583 = vrot.lane.b32.xlu0 %v3556, 2
    %v3584 = vpop.permute.xlu0 %3583
    %3585 = vrot.lane.b32.xlu0 %v3557, 2
    %v3586 = vpop.permute.xlu0 %3585
    %3587 = vrot.lane.b32.xlu0 %v3558, 2
    %v3588 = vpop.permute.xlu0 %3587
    %3589 = vrot.lane.b32.xlu0 %v3559, 2
    %v3590 = vpop.permute.xlu0 %3589
    %3591 = vrot.lane.b32.xlu0 %v3560, 2
    %v3592 = vpop.permute.xlu0 %3591
    %3593 = vrot.lane.b32.xlu0 %v3561, 2
    %v3594 = vpop.permute.xlu0 %3593
    %3595 = vrot.lane.b32.xlu0 %v3562, 2
    %v3596 = vpop.permute.xlu0 %3595
    %3597 = vrot.lane.b32.xlu0 %v3563, 2
    %v3598 = vpop.permute.xlu0 %3597
    %3599 = vrot.lane.b32.xlu0 %v3564, 2
    %v3600 = vpop.permute.xlu0 %3599
    %v3613 = vadd.f32 %v3481, %v3578
    %v3614 = vadd.f32 %v3482, %v3580
    %v3615 = vadd.f32 %v3483, %v3582
    %v3616 = vadd.f32 %v3484, %v3584
    %v3617 = vadd.f32 %v3485, %v3586
    %v3618 = vadd.f32 %v3486, %v3588
    %v3619 = vadd.f32 %v3487, %v3590
    %v3620 = vadd.f32 %v3488, %v3592
    %v3621 = vadd.f32 %v3489, %v3594
    %v3622 = vadd.f32 %v3490, %v3596
    %v3623 = vadd.f32 %v3491, %v3598
    %v3624 = vadd.f32 %v3492, %v3600
    %v3625 = vmul.f32 %v1851, %v3541
    %v3626 = vmul.f32 %v1851, %v3542
    %v3627 = vmul.f32 %v1851, %v3543
    %v3628 = vmul.f32 %v1851, %v3544
    %v3629 = vmul.f32 %v1851, %v3545
    %v3630 = vmul.f32 %v1851, %v3546
    %v3631 = vmul.f32 %v1851, %v3547
    %v3632 = vmul.f32 %v1851, %v3548
    %v3633 = vmul.f32 %v1851, %v3549
    %v3634 = vmul.f32 %v1851, %v3550
    %v3635 = vmul.f32 %v1851, %v3551
    %v3636 = vmul.f32 %v1851, %v3552
    %3649 = vrot.lane.b32.xlu0 %v3625, 2
    %v3650 = vpop.permute.xlu0 %3649
    %3651 = vrot.lane.b32.xlu0 %v3626, 2
    %v3652 = vpop.permute.xlu0 %3651
    %3653 = vrot.lane.b32.xlu0 %v3627, 2
    %v3654 = vpop.permute.xlu0 %3653
    %3655 = vrot.lane.b32.xlu0 %v3628, 2
    %v3656 = vpop.permute.xlu0 %3655
    %3657 = vrot.lane.b32.xlu0 %v3629, 2
    %v3658 = vpop.permute.xlu0 %3657
    %3659 = vrot.lane.b32.xlu0 %v3630, 2
    %v3660 = vpop.permute.xlu0 %3659
    %3661 = vrot.lane.b32.xlu0 %v3631, 2
    %v3662 = vpop.permute.xlu0 %3661
    %3663 = vrot.lane.b32.xlu0 %v3632, 2
    %v3664 = vpop.permute.xlu0 %3663
    %3665 = vrot.lane.b32.xlu0 %v3633, 2
    %v3666 = vpop.permute.xlu0 %3665
    %3667 = vrot.lane.b32.xlu0 %v3634, 2
    %v3668 = vpop.permute.xlu0 %3667
    %3669 = vrot.lane.b32.xlu0 %v3635, 2
    %v3670 = vpop.permute.xlu0 %3669
    %3671 = vrot.lane.b32.xlu0 %v3636, 2
    %v3672 = vpop.permute.xlu0 %3671
    %v3685 = vadd.f32 %v3529, %v3650
    %v3686 = vadd.f32 %v3530, %v3652
    %v3687 = vadd.f32 %v3531, %v3654
    %v3688 = vadd.f32 %v3532, %v3656
    %v3689 = vadd.f32 %v3533, %v3658
    %v3690 = vadd.f32 %v3534, %v3660
    %v3691 = vadd.f32 %v3535, %v3662
    %v3692 = vadd.f32 %v3536, %v3664
    %v3693 = vadd.f32 %v3537, %v3666
    %v3694 = vadd.f32 %v3538, %v3668
    %v3695 = vadd.f32 %v3539, %v3670
    %v3696 = vadd.f32 %v3540, %v3672
    %v3697 = vmul.f32 %v2340, %v3541
    %v3698 = vmul.f32 %v2340, %v3542
    %v3699 = vmul.f32 %v2340, %v3543
    %v3700 = vmul.f32 %v2340, %v3544
    %v3701 = vmul.f32 %v2340, %v3545
    %v3702 = vmul.f32 %v2340, %v3546
    %v3703 = vmul.f32 %v2340, %v3547
    %v3704 = vmul.f32 %v2340, %v3548
    %v3705 = vmul.f32 %v2340, %v3549
    %v3706 = vmul.f32 %v2340, %v3550
    %v3707 = vmul.f32 %v2340, %v3551
    %v3708 = vmul.f32 %v2340, %v3552
    %3721 = vrot.lane.b32.xlu0 %v3697, 1
    %v3722 = vpop.permute.xlu0 %3721
    %3723 = vrot.lane.b32.xlu0 %v3698, 1
    %v3724 = vpop.permute.xlu0 %3723
    %3725 = vrot.lane.b32.xlu0 %v3699, 1
    %v3726 = vpop.permute.xlu0 %3725
    %3727 = vrot.lane.b32.xlu0 %v3700, 1
    %v3728 = vpop.permute.xlu0 %3727
    %3729 = vrot.lane.b32.xlu0 %v3701, 1
    %v3730 = vpop.permute.xlu0 %3729
    %3731 = vrot.lane.b32.xlu0 %v3702, 1
    %v3732 = vpop.permute.xlu0 %3731
    %3733 = vrot.lane.b32.xlu0 %v3703, 1
    %v3734 = vpop.permute.xlu0 %3733
    %3735 = vrot.lane.b32.xlu0 %v3704, 1
    %v3736 = vpop.permute.xlu0 %3735
    %3737 = vrot.lane.b32.xlu0 %v3705, 1
    %v3738 = vpop.permute.xlu0 %3737
    %3739 = vrot.lane.b32.xlu0 %v3706, 1
    %v3740 = vpop.permute.xlu0 %3739
    %3741 = vrot.lane.b32.xlu0 %v3707, 1
    %v3742 = vpop.permute.xlu0 %3741
    %3743 = vrot.lane.b32.xlu0 %v3708, 1
    %v3744 = vpop.permute.xlu0 %3743
    %v3757 = vadd.f32 %v3613, %v3722
    %v3758 = vadd.f32 %v3614, %v3724
    %v3759 = vadd.f32 %v3615, %v3726
    %v3760 = vadd.f32 %v3616, %v3728
    %v3761 = vadd.f32 %v3617, %v3730
    %v3762 = vadd.f32 %v3618, %v3732
    %v3763 = vadd.f32 %v3619, %v3734
    %v3764 = vadd.f32 %v3620, %v3736
    %v3765 = vadd.f32 %v3621, %v3738
    %v3766 = vadd.f32 %v3622, %v3740
    %v3767 = vadd.f32 %v3623, %v3742
    %v3768 = vadd.f32 %v3624, %v3744
    %v3769 = vmul.f32 %v2419, %v3541
    %v3770 = vmul.f32 %v2419, %v3542
    %v3771 = vmul.f32 %v2419, %v3543
    %v3772 = vmul.f32 %v2419, %v3544
    %v3773 = vmul.f32 %v2419, %v3545
    %v3774 = vmul.f32 %v2419, %v3546
    %v3775 = vmul.f32 %v2419, %v3547
    %v3776 = vmul.f32 %v2419, %v3548
    %v3777 = vmul.f32 %v2419, %v3549
    %v3778 = vmul.f32 %v2419, %v3550
    %v3779 = vmul.f32 %v2419, %v3551
    %v3780 = vmul.f32 %v2419, %v3552
    %3793 = vrot.lane.b32.xlu0 %v3769, 1
    %v3794 = vpop.permute.xlu0 %3793
    %3795 = vrot.lane.b32.xlu0 %v3770, 1
    %v3796 = vpop.permute.xlu0 %3795
    %3797 = vrot.lane.b32.xlu0 %v3771, 1
    %v3798 = vpop.permute.xlu0 %3797
    %3799 = vrot.lane.b32.xlu0 %v3772, 1
    %v3800 = vpop.permute.xlu0 %3799
    %3801 = vrot.lane.b32.xlu0 %v3773, 1
    %v3802 = vpop.permute.xlu0 %3801
    %3803 = vrot.lane.b32.xlu0 %v3774, 1
    %v3804 = vpop.permute.xlu0 %3803
    %3805 = vrot.lane.b32.xlu0 %v3775, 1
    %v3806 = vpop.permute.xlu0 %3805
    %3807 = vrot.lane.b32.xlu0 %v3776, 1
    %v3808 = vpop.permute.xlu0 %3807
    %3809 = vrot.lane.b32.xlu0 %v3777, 1
    %v3810 = vpop.permute.xlu0 %3809
    %3811 = vrot.lane.b32.xlu0 %v3778, 1
    %v3812 = vpop.permute.xlu0 %3811
    %3813 = vrot.lane.b32.xlu0 %v3779, 1
    %v3814 = vpop.permute.xlu0 %3813
    %3815 = vrot.lane.b32.xlu0 %v3780, 1
    %v3816 = vpop.permute.xlu0 %3815
    %v3829 = vadd.f32 %v3685, %v3794
    %v3830 = vadd.f32 %v3686, %v3796
    %v3831 = vadd.f32 %v3687, %v3798
    %v3832 = vadd.f32 %v3688, %v3800
    %v3833 = vadd.f32 %v3689, %v3802
    %v3834 = vadd.f32 %v3690, %v3804
    %v3835 = vadd.f32 %v3691, %v3806
    %v3836 = vadd.f32 %v3692, %v3808
    %v3837 = vadd.f32 %v3693, %v3810
    %v3838 = vadd.f32 %v3694, %v3812
    %v3839 = vadd.f32 %v3695, %v3814
    %v3840 = vadd.f32 %v3696, %v3816
    %v3841 = vmul.f32 %v2498, %v3541
    %v3842 = vmul.f32 %v2498, %v3542
    %v3843 = vmul.f32 %v2498, %v3543
    %v3844 = vmul.f32 %v2498, %v3544
    %v3845 = vmul.f32 %v2498, %v3545
    %v3846 = vmul.f32 %v2498, %v3546
    %v3847 = vmul.f32 %v2498, %v3547
    %v3848 = vmul.f32 %v2498, %v3548
    %v3849 = vmul.f32 %v2498, %v3549
    %v3850 = vmul.f32 %v2498, %v3550
    %v3851 = vmul.f32 %v2498, %v3551
    %v3852 = vmul.f32 %v2498, %v3552
    %v3853 = vadd.f32 %v3757, %v3841
    %v3854 = vadd.f32 %v3758, %v3842
    %v3855 = vadd.f32 %v3759, %v3843
    %v3856 = vadd.f32 %v3760, %v3844
    %v3857 = vadd.f32 %v3761, %v3845
    %v3858 = vadd.f32 %v3762, %v3846
    %v3859 = vadd.f32 %v3763, %v3847
    %v3860 = vadd.f32 %v3764, %v3848
    %v3861 = vadd.f32 %v3765, %v3849
    %v3862 = vadd.f32 %v3766, %v3850
    %v3863 = vadd.f32 %v3767, %v3851
    %v3864 = vadd.f32 %v3768, %v3852
    %v3865 = vmul.f32 %v2529, %v3541
    %v3866 = vmul.f32 %v2529, %v3542
    %v3867 = vmul.f32 %v2529, %v3543
    %v3868 = vmul.f32 %v2529, %v3544
    %v3869 = vmul.f32 %v2529, %v3545
    %v3870 = vmul.f32 %v2529, %v3546
    %v3871 = vmul.f32 %v2529, %v3547
    %v3872 = vmul.f32 %v2529, %v3548
    %v3873 = vmul.f32 %v2529, %v3549
    %v3874 = vmul.f32 %v2529, %v3550
    %v3875 = vmul.f32 %v2529, %v3551
    %v3876 = vmul.f32 %v2529, %v3552
    %v3877 = vadd.f32 %v3829, %v3865
    %v3878 = vadd.f32 %v3830, %v3866
    %v3879 = vadd.f32 %v3831, %v3867
    %v3880 = vadd.f32 %v3832, %v3868
    %v3881 = vadd.f32 %v3833, %v3869
    %v3882 = vadd.f32 %v3834, %v3870
    %v3883 = vadd.f32 %v3835, %v3871
    %v3884 = vadd.f32 %v3836, %v3872
    %v3885 = vadd.f32 %v3837, %v3873
    %v3886 = vadd.f32 %v3838, %v3874
    %v3887 = vadd.f32 %v3839, %v3875
    %v3888 = vadd.f32 %v3840, %v3876
    %3889 = vrot.lane.b32.xlu0 %v3697, 127
    %v3890 = vpop.permute.xlu0 %3889
    %3891 = vrot.lane.b32.xlu0 %v3698, 127
    %v3892 = vpop.permute.xlu0 %3891
    %3893 = vrot.lane.b32.xlu0 %v3699, 127
    %v3894 = vpop.permute.xlu0 %3893
    %3895 = vrot.lane.b32.xlu0 %v3700, 127
    %v3896 = vpop.permute.xlu0 %3895
    %3897 = vrot.lane.b32.xlu0 %v3701, 127
    %v3898 = vpop.permute.xlu0 %3897
    %3899 = vrot.lane.b32.xlu0 %v3702, 127
    %v3900 = vpop.permute.xlu0 %3899
    %3901 = vrot.lane.b32.xlu0 %v3703, 127
    %v3902 = vpop.permute.xlu0 %3901
    %3903 = vrot.lane.b32.xlu0 %v3704, 127
    %v3904 = vpop.permute.xlu0 %3903
    %3905 = vrot.lane.b32.xlu0 %v3705, 127
    %v3906 = vpop.permute.xlu0 %3905
    %3907 = vrot.lane.b32.xlu0 %v3706, 127
    %v3908 = vpop.permute.xlu0 %3907
    %3909 = vrot.lane.b32.xlu0 %v3707, 127
    %v3910 = vpop.permute.xlu0 %3909
    %3911 = vrot.lane.b32.xlu0 %v3708, 127
    %v3912 = vpop.permute.xlu0 %3911
    %v3925 = vadd.f32 %v3853, %v3890
    %v3926 = vadd.f32 %v3854, %v3892
    %v3927 = vadd.f32 %v3855, %v3894
    %v3928 = vadd.f32 %v3856, %v3896
    %v3929 = vadd.f32 %v3857, %v3898
    %v3930 = vadd.f32 %v3858, %v3900
    %v3931 = vadd.f32 %v3859, %v3902
    %v3932 = vadd.f32 %v3860, %v3904
    %v3933 = vadd.f32 %v3861, %v3906
    %v3934 = vadd.f32 %v3862, %v3908
    %v3935 = vadd.f32 %v3863, %v3910
    %v3936 = vadd.f32 %v3864, %v3912
    %3937 = vrot.lane.b32.xlu0 %v3769, 127
    %v3938 = vpop.permute.xlu0 %3937
    %3939 = vrot.lane.b32.xlu0 %v3770, 127
    %v3940 = vpop.permute.xlu0 %3939
    %3941 = vrot.lane.b32.xlu0 %v3771, 127
    %v3942 = vpop.permute.xlu0 %3941
    %3943 = vrot.lane.b32.xlu0 %v3772, 127
    %v3944 = vpop.permute.xlu0 %3943
    %3945 = vrot.lane.b32.xlu0 %v3773, 127
    %v3946 = vpop.permute.xlu0 %3945
    %3947 = vrot.lane.b32.xlu0 %v3774, 127
    %v3948 = vpop.permute.xlu0 %3947
    %3949 = vrot.lane.b32.xlu0 %v3775, 127
    %v3950 = vpop.permute.xlu0 %3949
    %3951 = vrot.lane.b32.xlu0 %v3776, 127
    %v3952 = vpop.permute.xlu0 %3951
    %3953 = vrot.lane.b32.xlu0 %v3777, 127
    %v3954 = vpop.permute.xlu0 %3953
    %3955 = vrot.lane.b32.xlu0 %v3778, 127
    %v3956 = vpop.permute.xlu0 %3955
    %3957 = vrot.lane.b32.xlu0 %v3779, 127
    %v3958 = vpop.permute.xlu0 %3957
    %3959 = vrot.lane.b32.xlu0 %v3780, 127
    %v3960 = vpop.permute.xlu0 %3959
    %v3973 = vadd.f32 %v3877, %v3938
    %v3974 = vadd.f32 %v3878, %v3940
    %v3975 = vadd.f32 %v3879, %v3942
    %v3976 = vadd.f32 %v3880, %v3944
    %v3977 = vadd.f32 %v3881, %v3946
    %v3978 = vadd.f32 %v3882, %v3948
    %v3979 = vadd.f32 %v3883, %v3950
    %v3980 = vadd.f32 %v3884, %v3952
    %v3981 = vadd.f32 %v3885, %v3954
    %v3982 = vadd.f32 %v3886, %v3956
    %v3983 = vadd.f32 %v3887, %v3958
    %v3984 = vadd.f32 %v3888, %v3960
    %3985 = vrot.lane.b32.xlu0 %v3553, 126
    %v3986 = vpop.permute.xlu0 %3985
    %3987 = vrot.lane.b32.xlu0 %v3554, 126
    %v3988 = vpop.permute.xlu0 %3987
    %3989 = vrot.lane.b32.xlu0 %v3555, 126
    %v3990 = vpop.permute.xlu0 %3989
    %3991 = vrot.lane.b32.xlu0 %v3556, 126
    %v3992 = vpop.permute.xlu0 %3991
    %3993 = vrot.lane.b32.xlu0 %v3557, 126
    %v3994 = vpop.permute.xlu0 %3993
    %3995 = vrot.lane.b32.xlu0 %v3558, 126
    %v3996 = vpop.permute.xlu0 %3995
    %3997 = vrot.lane.b32.xlu0 %v3559, 126
    %v3998 = vpop.permute.xlu0 %3997
    %3999 = vrot.lane.b32.xlu0 %v3560, 126
    %v4000 = vpop.permute.xlu0 %3999
    %4001 = vrot.lane.b32.xlu0 %v3561, 126
    %v4002 = vpop.permute.xlu0 %4001
    %4003 = vrot.lane.b32.xlu0 %v3562, 126
    %v4004 = vpop.permute.xlu0 %4003
    %4005 = vrot.lane.b32.xlu0 %v3563, 126
    %v4006 = vpop.permute.xlu0 %4005
    %4007 = vrot.lane.b32.xlu0 %v3564, 126
    %v4008 = vpop.permute.xlu0 %4007
    %v4021 = vadd.f32 %v3925, %v3986
    %v4022 = vadd.f32 %v3926, %v3988
    %v4023 = vadd.f32 %v3927, %v3990
    %v4024 = vadd.f32 %v3928, %v3992
    %v4025 = vadd.f32 %v3929, %v3994
    %v4026 = vadd.f32 %v3930, %v3996
    %v4027 = vadd.f32 %v3931, %v3998
    %v4028 = vadd.f32 %v3932, %v4000
    %v4029 = vadd.f32 %v3933, %v4002
    %v4030 = vadd.f32 %v3934, %v4004
    %v4031 = vadd.f32 %v3935, %v4006
    %v4032 = vadd.f32 %v3936, %v4008
    %4033 = vrot.lane.b32.xlu0 %v3625, 126
    %v4034 = vpop.permute.xlu0 %4033
    %4035 = vrot.lane.b32.xlu0 %v3626, 126
    %v4036 = vpop.permute.xlu0 %4035
    %4037 = vrot.lane.b32.xlu0 %v3627, 126
    %v4038 = vpop.permute.xlu0 %4037
    %4039 = vrot.lane.b32.xlu0 %v3628, 126
    %v4040 = vpop.permute.xlu0 %4039
    %4041 = vrot.lane.b32.xlu0 %v3629, 126
    %v4042 = vpop.permute.xlu0 %4041
    %4043 = vrot.lane.b32.xlu0 %v3630, 126
    %v4044 = vpop.permute.xlu0 %4043
    %4045 = vrot.lane.b32.xlu0 %v3631, 126
    %v4046 = vpop.permute.xlu0 %4045
    %4047 = vrot.lane.b32.xlu0 %v3632, 126
    %v4048 = vpop.permute.xlu0 %4047
    %4049 = vrot.lane.b32.xlu0 %v3633, 126
    %v4050 = vpop.permute.xlu0 %4049
    %4051 = vrot.lane.b32.xlu0 %v3634, 126
    %v4052 = vpop.permute.xlu0 %4051
    %4053 = vrot.lane.b32.xlu0 %v3635, 126
    %v4054 = vpop.permute.xlu0 %4053
    %4055 = vrot.lane.b32.xlu0 %v3636, 126
    %v4056 = vpop.permute.xlu0 %4055
    %v4069 = vadd.f32 %v3973, %v4034
    %v4070 = vadd.f32 %v3974, %v4036
    %v4071 = vadd.f32 %v3975, %v4038
    %v4072 = vadd.f32 %v3976, %v4040
    %v4073 = vadd.f32 %v3977, %v4042
    %v4074 = vadd.f32 %v3978, %v4044
    %v4075 = vadd.f32 %v3979, %v4046
    %v4076 = vadd.f32 %v3980, %v4048
    %v4077 = vadd.f32 %v3981, %v4050
    %v4078 = vadd.f32 %v3982, %v4052
    %v4079 = vadd.f32 %v3983, %v4054
    %v4080 = vadd.f32 %v3984, %v4056
    %v4081 = vld [vmem:[%s1 + $0x5] sm:$0xff]
    %v4082 = vld [vmem:[%s1 + $0xd] sm:$0xff]
    %v4083 = vld [vmem:[%s1 + $0x1d] sm:$0xff]
    %v4084 = vld [vmem:[%s1 + $0x25] sm:$0xff]
    %v4085 = vld [vmem:[%s1 + $0x35] sm:$0xff]
    %v4086 = vld [vmem:[%s1 + $0x3d] sm:$0xff]
    %v4087 = vld [vmem:[%s1 + $0x4d] sm:$0xff]
    %v4088 = vld [vmem:[%s1 + $0x55] sm:$0xff]
    %v4089 = vld [vmem:[%s1 + $0x65] sm:$0xff]
    %v4090 = vld [vmem:[%s1 + $0x6d] sm:$0xff]
    %v4091 = vld [vmem:[%s1 + $0x7d] sm:$0xff]
    %v4092 = vld [vmem:[%s1 + $0x85] sm:$0xff]
    %v4093 = vmul.f32 %v1614, %v4081
    %v4094 = vmul.f32 %v1614, %v4082
    %v4095 = vmul.f32 %v1614, %v4083
    %v4096 = vmul.f32 %v1614, %v4084
    %v4097 = vmul.f32 %v1614, %v4085
    %v4098 = vmul.f32 %v1614, %v4086
    %v4099 = vmul.f32 %v1614, %v4087
    %v4100 = vmul.f32 %v1614, %v4088
    %v4101 = vmul.f32 %v1614, %v4089
    %v4102 = vmul.f32 %v1614, %v4090
    %v4103 = vmul.f32 %v1614, %v4091
    %v4104 = vmul.f32 %v1614, %v4092
    %4117 = vrot.lane.b32.xlu0 %v4093, 2
    %v4118 = vpop.permute.xlu0 %4117
    %4119 = vrot.lane.b32.xlu0 %v4094, 2
    %v4120 = vpop.permute.xlu0 %4119
    %4121 = vrot.lane.b32.xlu0 %v4095, 2
    %v4122 = vpop.permute.xlu0 %4121
    %4123 = vrot.lane.b32.xlu0 %v4096, 2
    %v4124 = vpop.permute.xlu0 %4123
    %4125 = vrot.lane.b32.xlu0 %v4097, 2
    %v4126 = vpop.permute.xlu0 %4125
    %4127 = vrot.lane.b32.xlu0 %v4098, 2
    %v4128 = vpop.permute.xlu0 %4127
    %4129 = vrot.lane.b32.xlu0 %v4099, 2
    %v4130 = vpop.permute.xlu0 %4129
    %4131 = vrot.lane.b32.xlu0 %v4100, 2
    %v4132 = vpop.permute.xlu0 %4131
    %4133 = vrot.lane.b32.xlu0 %v4101, 2
    %v4134 = vpop.permute.xlu0 %4133
    %4135 = vrot.lane.b32.xlu0 %v4102, 2
    %v4136 = vpop.permute.xlu0 %4135
    %4137 = vrot.lane.b32.xlu0 %v4103, 2
    %v4138 = vpop.permute.xlu0 %4137
    %4139 = vrot.lane.b32.xlu0 %v4104, 2
    %v4140 = vpop.permute.xlu0 %4139
    %v4153 = vadd.f32 %v4021, %v4118
    %v4154 = vadd.f32 %v4022, %v4120
    %v4155 = vadd.f32 %v4023, %v4122
    %v4156 = vadd.f32 %v4024, %v4124
    %v4157 = vadd.f32 %v4025, %v4126
    %v4158 = vadd.f32 %v4026, %v4128
    %v4159 = vadd.f32 %v4027, %v4130
    %v4160 = vadd.f32 %v4028, %v4132
    %v4161 = vadd.f32 %v4029, %v4134
    %v4162 = vadd.f32 %v4030, %v4136
    %v4163 = vadd.f32 %v4031, %v4138
    %v4164 = vadd.f32 %v4032, %v4140
    %v4165 = vmul.f32 %v1693, %v4081
    %v4166 = vmul.f32 %v1693, %v4082
    %v4167 = vmul.f32 %v1693, %v4083
    %v4168 = vmul.f32 %v1693, %v4084
    %v4169 = vmul.f32 %v1693, %v4085
    %v4170 = vmul.f32 %v1693, %v4086
    %v4171 = vmul.f32 %v1693, %v4087
    %v4172 = vmul.f32 %v1693, %v4088
    %v4173 = vmul.f32 %v1693, %v4089
    %v4174 = vmul.f32 %v1693, %v4090
    %v4175 = vmul.f32 %v1693, %v4091
    %v4176 = vmul.f32 %v1693, %v4092
    %4189 = vrot.lane.b32.xlu0 %v4165, 2
    %v4190 = vpop.permute.xlu0 %4189
    %4191 = vrot.lane.b32.xlu0 %v4166, 2
    %v4192 = vpop.permute.xlu0 %4191
    %4193 = vrot.lane.b32.xlu0 %v4167, 2
    %v4194 = vpop.permute.xlu0 %4193
    %4195 = vrot.lane.b32.xlu0 %v4168, 2
    %v4196 = vpop.permute.xlu0 %4195
    %4197 = vrot.lane.b32.xlu0 %v4169, 2
    %v4198 = vpop.permute.xlu0 %4197
    %4199 = vrot.lane.b32.xlu0 %v4170, 2
    %v4200 = vpop.permute.xlu0 %4199
    %4201 = vrot.lane.b32.xlu0 %v4171, 2
    %v4202 = vpop.permute.xlu0 %4201
    %4203 = vrot.lane.b32.xlu0 %v4172, 2
    %v4204 = vpop.permute.xlu0 %4203
    %4205 = vrot.lane.b32.xlu0 %v4173, 2
    %v4206 = vpop.permute.xlu0 %4205
    %4207 = vrot.lane.b32.xlu0 %v4174, 2
    %v4208 = vpop.permute.xlu0 %4207
    %4209 = vrot.lane.b32.xlu0 %v4175, 2
    %v4210 = vpop.permute.xlu0 %4209
    %4211 = vrot.lane.b32.xlu0 %v4176, 2
    %v4212 = vpop.permute.xlu0 %4211
    %v4225 = vadd.f32 %v4069, %v4190
    %v4226 = vadd.f32 %v4070, %v4192
    %v4227 = vadd.f32 %v4071, %v4194
    %v4228 = vadd.f32 %v4072, %v4196
    %v4229 = vadd.f32 %v4073, %v4198
    %v4230 = vadd.f32 %v4074, %v4200
    %v4231 = vadd.f32 %v4075, %v4202
    %v4232 = vadd.f32 %v4076, %v4204
    %v4233 = vadd.f32 %v4077, %v4206
    %v4234 = vadd.f32 %v4078, %v4208
    %v4235 = vadd.f32 %v4079, %v4210
    %v4236 = vadd.f32 %v4080, %v4212
    %v4237 = vmul.f32 %v1772, %v4081
    %v4238 = vmul.f32 %v1772, %v4082
    %v4239 = vmul.f32 %v1772, %v4083
    %v4240 = vmul.f32 %v1772, %v4084
    %v4241 = vmul.f32 %v1772, %v4085
    %v4242 = vmul.f32 %v1772, %v4086
    %v4243 = vmul.f32 %v1772, %v4087
    %v4244 = vmul.f32 %v1772, %v4088
    %v4245 = vmul.f32 %v1772, %v4089
    %v4246 = vmul.f32 %v1772, %v4090
    %v4247 = vmul.f32 %v1772, %v4091
    %v4248 = vmul.f32 %v1772, %v4092
    %4261 = vrot.lane.b32.xlu0 %v4237, 1
    %v4262 = vpop.permute.xlu0 %4261
    %4263 = vrot.lane.b32.xlu0 %v4238, 1
    %v4264 = vpop.permute.xlu0 %4263
    %4265 = vrot.lane.b32.xlu0 %v4239, 1
    %v4266 = vpop.permute.xlu0 %4265
    %4267 = vrot.lane.b32.xlu0 %v4240, 1
    %v4268 = vpop.permute.xlu0 %4267
    %4269 = vrot.lane.b32.xlu0 %v4241, 1
    %v4270 = vpop.permute.xlu0 %4269
    %4271 = vrot.lane.b32.xlu0 %v4242, 1
    %v4272 = vpop.permute.xlu0 %4271
    %4273 = vrot.lane.b32.xlu0 %v4243, 1
    %v4274 = vpop.permute.xlu0 %4273
    %4275 = vrot.lane.b32.xlu0 %v4244, 1
    %v4276 = vpop.permute.xlu0 %4275
    %4277 = vrot.lane.b32.xlu0 %v4245, 1
    %v4278 = vpop.permute.xlu0 %4277
    %4279 = vrot.lane.b32.xlu0 %v4246, 1
    %v4280 = vpop.permute.xlu0 %4279
    %4281 = vrot.lane.b32.xlu0 %v4247, 1
    %v4282 = vpop.permute.xlu0 %4281
    %4283 = vrot.lane.b32.xlu0 %v4248, 1
    %v4284 = vpop.permute.xlu0 %4283
    %v4297 = vadd.f32 %v4153, %v4262
    %v4298 = vadd.f32 %v4154, %v4264
    %v4299 = vadd.f32 %v4155, %v4266
    %v4300 = vadd.f32 %v4156, %v4268
    %v4301 = vadd.f32 %v4157, %v4270
    %v4302 = vadd.f32 %v4158, %v4272
    %v4303 = vadd.f32 %v4159, %v4274
    %v4304 = vadd.f32 %v4160, %v4276
    %v4305 = vadd.f32 %v4161, %v4278
    %v4306 = vadd.f32 %v4162, %v4280
    %v4307 = vadd.f32 %v4163, %v4282
    %v4308 = vadd.f32 %v4164, %v4284
    %v4309 = vmul.f32 %v1851, %v4081
    %v4310 = vmul.f32 %v1851, %v4082
    %v4311 = vmul.f32 %v1851, %v4083
    %v4312 = vmul.f32 %v1851, %v4084
    %v4313 = vmul.f32 %v1851, %v4085
    %v4314 = vmul.f32 %v1851, %v4086
    %v4315 = vmul.f32 %v1851, %v4087
    %v4316 = vmul.f32 %v1851, %v4088
    %v4317 = vmul.f32 %v1851, %v4089
    %v4318 = vmul.f32 %v1851, %v4090
    %v4319 = vmul.f32 %v1851, %v4091
    %v4320 = vmul.f32 %v1851, %v4092
    %4333 = vrot.lane.b32.xlu0 %v4309, 1
    %v4334 = vpop.permute.xlu0 %4333
    %4335 = vrot.lane.b32.xlu0 %v4310, 1
    %v4336 = vpop.permute.xlu0 %4335
    %4337 = vrot.lane.b32.xlu0 %v4311, 1
    %v4338 = vpop.permute.xlu0 %4337
    %4339 = vrot.lane.b32.xlu0 %v4312, 1
    %v4340 = vpop.permute.xlu0 %4339
    %4341 = vrot.lane.b32.xlu0 %v4313, 1
    %v4342 = vpop.permute.xlu0 %4341
    %4343 = vrot.lane.b32.xlu0 %v4314, 1
    %v4344 = vpop.permute.xlu0 %4343
    %4345 = vrot.lane.b32.xlu0 %v4315, 1
    %v4346 = vpop.permute.xlu0 %4345
    %4347 = vrot.lane.b32.xlu0 %v4316, 1
    %v4348 = vpop.permute.xlu0 %4347
    %4349 = vrot.lane.b32.xlu0 %v4317, 1
    %v4350 = vpop.permute.xlu0 %4349
    %4351 = vrot.lane.b32.xlu0 %v4318, 1
    %v4352 = vpop.permute.xlu0 %4351
    %4353 = vrot.lane.b32.xlu0 %v4319, 1
    %v4354 = vpop.permute.xlu0 %4353
    %4355 = vrot.lane.b32.xlu0 %v4320, 1
    %v4356 = vpop.permute.xlu0 %4355
    %v4369 = vadd.f32 %v4225, %v4334
    %v4370 = vadd.f32 %v4226, %v4336
    %v4371 = vadd.f32 %v4227, %v4338
    %v4372 = vadd.f32 %v4228, %v4340
    %v4373 = vadd.f32 %v4229, %v4342
    %v4374 = vadd.f32 %v4230, %v4344
    %v4375 = vadd.f32 %v4231, %v4346
    %v4376 = vadd.f32 %v4232, %v4348
    %v4377 = vadd.f32 %v4233, %v4350
    %v4378 = vadd.f32 %v4234, %v4352
    %v4379 = vadd.f32 %v4235, %v4354
    %v4380 = vadd.f32 %v4236, %v4356
    %v4381 = vmul.f32 %v1930, %v4081
    %v4382 = vmul.f32 %v1930, %v4082
    %v4383 = vmul.f32 %v1930, %v4083
    %v4384 = vmul.f32 %v1930, %v4084
    %v4385 = vmul.f32 %v1930, %v4085
    %v4386 = vmul.f32 %v1930, %v4086
    %v4387 = vmul.f32 %v1930, %v4087
    %v4388 = vmul.f32 %v1930, %v4088
    %v4389 = vmul.f32 %v1930, %v4089
    %v4390 = vmul.f32 %v1930, %v4090
    %v4391 = vmul.f32 %v1930, %v4091
    %v4392 = vmul.f32 %v1930, %v4092
    %v4393 = vadd.f32 %v4297, %v4381
    %v4394 = vadd.f32 %v4298, %v4382
    %v4395 = vadd.f32 %v4299, %v4383
    %v4396 = vadd.f32 %v4300, %v4384
    %v4397 = vadd.f32 %v4301, %v4385
    %v4398 = vadd.f32 %v4302, %v4386
    %v4399 = vadd.f32 %v4303, %v4387
    %v4400 = vadd.f32 %v4304, %v4388
    %v4401 = vadd.f32 %v4305, %v4389
    %v4402 = vadd.f32 %v4306, %v4390
    %v4403 = vadd.f32 %v4307, %v4391
    %v4404 = vadd.f32 %v4308, %v4392
    %v4405 = vmul.f32 %v1961, %v4081
    %v4406 = vmul.f32 %v1961, %v4082
    %v4407 = vmul.f32 %v1961, %v4083
    %v4408 = vmul.f32 %v1961, %v4084
    %v4409 = vmul.f32 %v1961, %v4085
    %v4410 = vmul.f32 %v1961, %v4086
    %v4411 = vmul.f32 %v1961, %v4087
    %v4412 = vmul.f32 %v1961, %v4088
    %v4413 = vmul.f32 %v1961, %v4089
    %v4414 = vmul.f32 %v1961, %v4090
    %v4415 = vmul.f32 %v1961, %v4091
    %v4416 = vmul.f32 %v1961, %v4092
    %v4417 = vadd.f32 %v4369, %v4405
    %v4418 = vadd.f32 %v4370, %v4406
    %v4419 = vadd.f32 %v4371, %v4407
    %v4420 = vadd.f32 %v4372, %v4408
    %v4421 = vadd.f32 %v4373, %v4409
    %v4422 = vadd.f32 %v4374, %v4410
    %v4423 = vadd.f32 %v4375, %v4411
    %v4424 = vadd.f32 %v4376, %v4412
    %v4425 = vadd.f32 %v4377, %v4413
    %v4426 = vadd.f32 %v4378, %v4414
    %v4427 = vadd.f32 %v4379, %v4415
    %v4428 = vadd.f32 %v4380, %v4416
    %4429 = vrot.lane.b32.xlu0 %v4237, 127
    %v4430 = vpop.permute.xlu0 %4429
    %4431 = vrot.lane.b32.xlu0 %v4238, 127
    %v4432 = vpop.permute.xlu0 %4431
    %4433 = vrot.lane.b32.xlu0 %v4239, 127
    %v4434 = vpop.permute.xlu0 %4433
    %4435 = vrot.lane.b32.xlu0 %v4240, 127
    %v4436 = vpop.permute.xlu0 %4435
    %4437 = vrot.lane.b32.xlu0 %v4241, 127
    %v4438 = vpop.permute.xlu0 %4437
    %4439 = vrot.lane.b32.xlu0 %v4242, 127
    %v4440 = vpop.permute.xlu0 %4439
    %4441 = vrot.lane.b32.xlu0 %v4243, 127
    %v4442 = vpop.permute.xlu0 %4441
    %4443 = vrot.lane.b32.xlu0 %v4244, 127
    %v4444 = vpop.permute.xlu0 %4443
    %4445 = vrot.lane.b32.xlu0 %v4245, 127
    %v4446 = vpop.permute.xlu0 %4445
    %4447 = vrot.lane.b32.xlu0 %v4246, 127
    %v4448 = vpop.permute.xlu0 %4447
    %4449 = vrot.lane.b32.xlu0 %v4247, 127
    %v4450 = vpop.permute.xlu0 %4449
    %4451 = vrot.lane.b32.xlu0 %v4248, 127
    %v4452 = vpop.permute.xlu0 %4451
    %v4465 = vadd.f32 %v4393, %v4430
    %v4466 = vadd.f32 %v4394, %v4432
    %v4467 = vadd.f32 %v4395, %v4434
    %v4468 = vadd.f32 %v4396, %v4436
    %v4469 = vadd.f32 %v4397, %v4438
    %v4470 = vadd.f32 %v4398, %v4440
    %v4471 = vadd.f32 %v4399, %v4442
    %v4472 = vadd.f32 %v4400, %v4444
    %v4473 = vadd.f32 %v4401, %v4446
    %v4474 = vadd.f32 %v4402, %v4448
    %v4475 = vadd.f32 %v4403, %v4450
    %v4476 = vadd.f32 %v4404, %v4452
    %4477 = vrot.lane.b32.xlu0 %v4309, 127
    %v4478 = vpop.permute.xlu0 %4477
    %4479 = vrot.lane.b32.xlu0 %v4310, 127
    %v4480 = vpop.permute.xlu0 %4479
    %4481 = vrot.lane.b32.xlu0 %v4311, 127
    %v4482 = vpop.permute.xlu0 %4481
    %4483 = vrot.lane.b32.xlu0 %v4312, 127
    %v4484 = vpop.permute.xlu0 %4483
    %4485 = vrot.lane.b32.xlu0 %v4313, 127
    %v4486 = vpop.permute.xlu0 %4485
    %4487 = vrot.lane.b32.xlu0 %v4314, 127
    %v4488 = vpop.permute.xlu0 %4487
    %4489 = vrot.lane.b32.xlu0 %v4315, 127
    %v4490 = vpop.permute.xlu0 %4489
    %4491 = vrot.lane.b32.xlu0 %v4316, 127
    %v4492 = vpop.permute.xlu0 %4491
    %4493 = vrot.lane.b32.xlu0 %v4317, 127
    %v4494 = vpop.permute.xlu0 %4493
    %4495 = vrot.lane.b32.xlu0 %v4318, 127
    %v4496 = vpop.permute.xlu0 %4495
    %4497 = vrot.lane.b32.xlu0 %v4319, 127
    %v4498 = vpop.permute.xlu0 %4497
    %4499 = vrot.lane.b32.xlu0 %v4320, 127
    %v4500 = vpop.permute.xlu0 %4499
    %v4513 = vadd.f32 %v4417, %v4478
    %v4514 = vadd.f32 %v4418, %v4480
    %v4515 = vadd.f32 %v4419, %v4482
    %v4516 = vadd.f32 %v4420, %v4484
    %v4517 = vadd.f32 %v4421, %v4486
    %v4518 = vadd.f32 %v4422, %v4488
    %v4519 = vadd.f32 %v4423, %v4490
    %v4520 = vadd.f32 %v4424, %v4492
    %v4521 = vadd.f32 %v4425, %v4494
    %v4522 = vadd.f32 %v4426, %v4496
    %v4523 = vadd.f32 %v4427, %v4498
    %v4524 = vadd.f32 %v4428, %v4500
    %4525 = vrot.lane.b32.xlu0 %v4093, 126
    %v4526 = vpop.permute.xlu0 %4525
    %4527 = vrot.lane.b32.xlu0 %v4094, 126
    %v4528 = vpop.permute.xlu0 %4527
    %4529 = vrot.lane.b32.xlu0 %v4095, 126
    %v4530 = vpop.permute.xlu0 %4529
    %4531 = vrot.lane.b32.xlu0 %v4096, 126
    %v4532 = vpop.permute.xlu0 %4531
    %4533 = vrot.lane.b32.xlu0 %v4097, 126
    %v4534 = vpop.permute.xlu0 %4533
    %4535 = vrot.lane.b32.xlu0 %v4098, 126
    %v4536 = vpop.permute.xlu0 %4535
    %4537 = vrot.lane.b32.xlu0 %v4099, 126
    %v4538 = vpop.permute.xlu0 %4537
    %4539 = vrot.lane.b32.xlu0 %v4100, 126
    %v4540 = vpop.permute.xlu0 %4539
    %4541 = vrot.lane.b32.xlu0 %v4101, 126
    %v4542 = vpop.permute.xlu0 %4541
    %4543 = vrot.lane.b32.xlu0 %v4102, 126
    %v4544 = vpop.permute.xlu0 %4543
    %4545 = vrot.lane.b32.xlu0 %v4103, 126
    %v4546 = vpop.permute.xlu0 %4545
    %4547 = vrot.lane.b32.xlu0 %v4104, 126
    %v4548 = vpop.permute.xlu0 %4547
    %v4561 = vadd.f32 %v4465, %v4526
    %v4562 = vadd.f32 %v4466, %v4528
    %v4563 = vadd.f32 %v4467, %v4530
    %v4564 = vadd.f32 %v4468, %v4532
    %v4565 = vadd.f32 %v4469, %v4534
    %v4566 = vadd.f32 %v4470, %v4536
    %v4567 = vadd.f32 %v4471, %v4538
    %v4568 = vadd.f32 %v4472, %v4540
    %v4569 = vadd.f32 %v4473, %v4542
    %v4570 = vadd.f32 %v4474, %v4544
    %v4571 = vadd.f32 %v4475, %v4546
    %v4572 = vadd.f32 %v4476, %v4548
    %4573 = vrot.lane.b32.xlu0 %v4165, 126
    %v4574 = vpop.permute.xlu0 %4573
    %4575 = vrot.lane.b32.xlu0 %v4166, 126
    %v4576 = vpop.permute.xlu0 %4575
    %4577 = vrot.lane.b32.xlu0 %v4167, 126
    %v4578 = vpop.permute.xlu0 %4577
    %4579 = vrot.lane.b32.xlu0 %v4168, 126
    %v4580 = vpop.permute.xlu0 %4579
    %4581 = vrot.lane.b32.xlu0 %v4169, 126
    %v4582 = vpop.permute.xlu0 %4581
    %4583 = vrot.lane.b32.xlu0 %v4170, 126
    %v4584 = vpop.permute.xlu0 %4583
    %4585 = vrot.lane.b32.xlu0 %v4171, 126
    %v4586 = vpop.permute.xlu0 %4585
    %4587 = vrot.lane.b32.xlu0 %v4172, 126
    %v4588 = vpop.permute.xlu0 %4587
    %4589 = vrot.lane.b32.xlu0 %v4173, 126
    %v4590 = vpop.permute.xlu0 %4589
    %4591 = vrot.lane.b32.xlu0 %v4174, 126
    %v4592 = vpop.permute.xlu0 %4591
    %4593 = vrot.lane.b32.xlu0 %v4175, 126
    %v4594 = vpop.permute.xlu0 %4593
    %4595 = vrot.lane.b32.xlu0 %v4176, 126
    %v4596 = vpop.permute.xlu0 %4595
    %v4609 = vadd.f32 %v4513, %v4574
    %v4610 = vadd.f32 %v4514, %v4576
    %v4611 = vadd.f32 %v4515, %v4578
    %v4612 = vadd.f32 %v4516, %v4580
    %v4613 = vadd.f32 %v4517, %v4582
    %v4614 = vadd.f32 %v4518, %v4584
    %v4615 = vadd.f32 %v4519, %v4586
    %v4616 = vadd.f32 %v4520, %v4588
    %v4617 = vadd.f32 %v4521, %v4590
    %v4618 = vadd.f32 %v4522, %v4592
    %v4619 = vadd.f32 %v4523, %v4594
    %v4620 = vadd.f32 %v4524, %v4596
    %v4621 = vld [vmem:[%s1 + $0x6] sm:$0xff]
    %v4622 = vld [vmem:[%s1 + $0xe] sm:$0xff]
    %v4623 = vld [vmem:[%s1 + $0x1e] sm:$0xff]
    %v4624 = vld [vmem:[%s1 + $0x26] sm:$0xff]
    %v4625 = vld [vmem:[%s1 + $0x36] sm:$0xff]
    %v4626 = vld [vmem:[%s1 + $0x3e] sm:$0xff]
    %v4627 = vld [vmem:[%s1 + $0x4e] sm:$0xff]
    %v4628 = vld [vmem:[%s1 + $0x56] sm:$0xff]
    %v4629 = vld [vmem:[%s1 + $0x66] sm:$0xff]
    %v4630 = vld [vmem:[%s1 + $0x6e] sm:$0xff]
    %v4631 = vld [vmem:[%s1 + $0x7e] sm:$0xff]
    %v4632 = vld [vmem:[%s1 + $0x86] sm:$0xff]
    %v4633 = vmul.f32 %v1564, %v4621
    %v4634 = vmul.f32 %v1564, %v4622
    %v4635 = vmul.f32 %v1564, %v4623
    %v4636 = vmul.f32 %v1564, %v4624
    %v4637 = vmul.f32 %v1564, %v4625
    %v4638 = vmul.f32 %v1564, %v4626
    %v4639 = vmul.f32 %v1564, %v4627
    %v4640 = vmul.f32 %v1564, %v4628
    %v4641 = vmul.f32 %v1564, %v4629
    %v4642 = vmul.f32 %v1564, %v4630
    %v4643 = vmul.f32 %v1564, %v4631
    %v4644 = vmul.f32 %v1564, %v4632
    %v4645 = vadd.f32 %v4561, %v4633
    %v4646 = vadd.f32 %v4562, %v4634
    %v4647 = vadd.f32 %v4563, %v4635
    %v4648 = vadd.f32 %v4564, %v4636
    %v4649 = vadd.f32 %v4565, %v4637
    %v4650 = vadd.f32 %v4566, %v4638
    %v4651 = vadd.f32 %v4567, %v4639
    %v4652 = vadd.f32 %v4568, %v4640
    %v4653 = vadd.f32 %v4569, %v4641
    %v4654 = vadd.f32 %v4570, %v4642
    %v4655 = vadd.f32 %v4571, %v4643
    %v4656 = vadd.f32 %v4572, %v4644
    %v4657 = vmul.f32 %v1583, %v4621
    %v4658 = vmul.f32 %v1583, %v4622
    %v4659 = vmul.f32 %v1583, %v4623
    %v4660 = vmul.f32 %v1583, %v4624
    %v4661 = vmul.f32 %v1583, %v4625
    %v4662 = vmul.f32 %v1583, %v4626
    %v4663 = vmul.f32 %v1583, %v4627
    %v4664 = vmul.f32 %v1583, %v4628
    %v4665 = vmul.f32 %v1583, %v4629
    %v4666 = vmul.f32 %v1583, %v4630
    %v4667 = vmul.f32 %v1583, %v4631
    %v4668 = vmul.f32 %v1583, %v4632
    %v4669 = vadd.f32 %v4609, %v4657
    %v4670 = vadd.f32 %v4610, %v4658
    %v4671 = vadd.f32 %v4611, %v4659
    %v4672 = vadd.f32 %v4612, %v4660
    %v4673 = vadd.f32 %v4613, %v4661
    %v4674 = vadd.f32 %v4614, %v4662
    %v4675 = vadd.f32 %v4615, %v4663
    %v4676 = vadd.f32 %v4616, %v4664
    %v4677 = vadd.f32 %v4617, %v4665
    %v4678 = vadd.f32 %v4618, %v4666
    %v4679 = vadd.f32 %v4619, %v4667
    %v4680 = vadd.f32 %v4620, %v4668
    %4693 = vrot.lane.b32.xlu0 %v4645, 125
    %v4694 = vpop.permute.xlu0 %4693
    %4695 = vrot.lane.b32.xlu0 %v4646, 125
    %v4696 = vpop.permute.xlu0 %4695
    %4697 = vrot.lane.b32.xlu0 %v4647, 125
    %v4698 = vpop.permute.xlu0 %4697
    %4699 = vrot.lane.b32.xlu0 %v4648, 125
    %v4700 = vpop.permute.xlu0 %4699
    %4701 = vrot.lane.b32.xlu0 %v4649, 125
    %v4702 = vpop.permute.xlu0 %4701
    %4703 = vrot.lane.b32.xlu0 %v4650, 125
    %v4704 = vpop.permute.xlu0 %4703
    %4705 = vrot.lane.b32.xlu0 %v4651, 125
    %v4706 = vpop.permute.xlu0 %4705
    %4707 = vrot.lane.b32.xlu0 %v4652, 125
    %v4708 = vpop.permute.xlu0 %4707
    %4709 = vrot.lane.b32.xlu0 %v4653, 125
    %v4710 = vpop.permute.xlu0 %4709
    %4711 = vrot.lane.b32.xlu0 %v4654, 125
    %v4712 = vpop.permute.xlu0 %4711
    %4713 = vrot.lane.b32.xlu0 %v4655, 125
    %v4714 = vpop.permute.xlu0 %4713
    %4715 = vrot.lane.b32.xlu0 %v4656, 125
    %v4716 = vpop.permute.xlu0 %4715
    %4729 = vst.msk [vmem:[#allocation2] sm:$0xff] %vm19, %v4694
    %4730 = vst.msk [vmem:[#allocation2 + $0x8] sm:$0xff] %vm19, %v4696
    %4731 = vst.msk [vmem:[#allocation2 + $0x10] sm:$0xff] %vm19, %v4698
    %4732 = vst.msk [vmem:[#allocation2 + $0x18] sm:$0xff] %vm19, %v4700
    %4733 = vst.msk [vmem:[#allocation2 + $0x20] sm:$0xff] %vm19, %v4702
    %4734 = vst.msk [vmem:[#allocation2 + $0x28] sm:$0xff] %vm19, %v4704
    %4735 = vst.msk [vmem:[#allocation2 + $0x30] sm:$0xff] %vm19, %v4706
    %4736 = vst.msk [vmem:[#allocation2 + $0x38] sm:$0xff] %vm19, %v4708
    %4737 = vst.msk [vmem:[#allocation2 + $0x40] sm:$0xff] %vm19, %v4710
    %4738 = vst.msk [vmem:[#allocation2 + $0x48] sm:$0xff] %vm19, %v4712
    %4739 = vst.msk [vmem:[#allocation2 + $0x50] sm:$0xff] %vm19, %v4714
    %4740 = vst.msk [vmem:[#allocation2 + $0x58] sm:$0xff] %vm19, %v4716
    %4753 = vrot.lane.b32.xlu0 %v4669, 125
    %v4754 = vpop.permute.xlu0 %4753
    %4755 = vrot.lane.b32.xlu0 %v4670, 125
    %v4756 = vpop.permute.xlu0 %4755
    %4757 = vrot.lane.b32.xlu0 %v4671, 125
    %v4758 = vpop.permute.xlu0 %4757
    %4759 = vrot.lane.b32.xlu0 %v4672, 125
    %v4760 = vpop.permute.xlu0 %4759
    %4761 = vrot.lane.b32.xlu0 %v4673, 125
    %v4762 = vpop.permute.xlu0 %4761
    %4763 = vrot.lane.b32.xlu0 %v4674, 125
    %v4764 = vpop.permute.xlu0 %4763
    %4765 = vrot.lane.b32.xlu0 %v4675, 125
    %v4766 = vpop.permute.xlu0 %4765
    %4767 = vrot.lane.b32.xlu0 %v4676, 125
    %v4768 = vpop.permute.xlu0 %4767
    %4769 = vrot.lane.b32.xlu0 %v4677, 125
    %v4770 = vpop.permute.xlu0 %4769
    %4771 = vrot.lane.b32.xlu0 %v4678, 125
    %v4772 = vpop.permute.xlu0 %4771
    %4773 = vrot.lane.b32.xlu0 %v4679, 125
    %v4774 = vpop.permute.xlu0 %4773
    %4775 = vrot.lane.b32.xlu0 %v4680, 125
    %v4776 = vpop.permute.xlu0 %4775
    %s4789 = scalar_lea.vmem [#allocation2], 96
    %4790 = vst.msk [vmem:[%s4789] sm:$0xff] %vm19, %v4754
    %4791 = vst.msk [vmem:[%s4789 + $0x8] sm:$0xff] %vm19, %v4756
    %4792 = vst.msk [vmem:[%s4789 + $0x10] sm:$0xff] %vm19, %v4758
    %4793 = vst.msk [vmem:[%s4789 + $0x18] sm:$0xff] %vm19, %v4760
    %4794 = vst.msk [vmem:[%s4789 + $0x20] sm:$0xff] %vm19, %v4762
    %4795 = vst.msk [vmem:[%s4789 + $0x28] sm:$0xff] %vm19, %v4764
    %4796 = vst.msk [vmem:[%s4789 + $0x30] sm:$0xff] %vm19, %v4766
    %4797 = vst.msk [vmem:[%s4789 + $0x38] sm:$0xff] %vm19, %v4768
    %4798 = vst.msk [vmem:[%s4789 + $0x40] sm:$0xff] %vm19, %v4770
    %4799 = vst.msk [vmem:[%s4789 + $0x48] sm:$0xff] %vm19, %v4772
    %4800 = vst.msk [vmem:[%s4789 + $0x50] sm:$0xff] %vm19, %v4774
    %4801 = vst.msk [vmem:[%s4789 + $0x58] sm:$0xff] %vm19, %v4776
    // Predicated region
    $region10: #{main_model_forward.1} parent=1 // pred_check
      _
    $region11: #{main_model_forward.1} parent=1 // pred_check_branch
      %4803 = sbr.rel (0) target = $region13
    $region12: #{main_model_forward.1} parent=1 // pred_region
      %s4805 = ssub.s32 3072, 3072
      %4806 = vsyncadd [#allocation3], %s4805
      %s4807 = sshll.u32 [#allocation2], 4
      %s4808 = int_to_ptr.vmem [resolvable:$true] %s4807
      %4813 = dma.vmem_to_hbm [thread:$0]  %s4808, 3072, %s2, [#allocation3], 128, 128, 8
    $region13: #{main_model_forward.1} parent=1 // pred_fallthru
      _
    // Predicated region
    $region14: #{main_model_forward.1} parent=1 // pred_check
      _
    $region15: #{main_model_forward.1} parent=1 // pred_check_branch
      %4815 = sbr.rel (0) target = $region17
    $region16: #{main_model_forward.1} parent=1 // pred_region
      %4816 = dma.done [#allocation3], 3072
    $region17: #{main_model_forward.1} parent=1 // pred_fallthru
      _
    %4817 = vsyncpa [#allocation3], 1

</llo_original>
